<compile_context>
chip_gen: v7x
topology: tpu7x:2x2x1
jax: 0.10.0
libtpu: 0.0.40
codegen_flags: <defaults>
</compile_context>

<pallas_src>
import math
import numpy as np
import jax
import jax.numpy as jnp
from jax import lax
from jax.experimental import pallas as pl
from jax.experimental.pallas import tpu as pltpu

LANE = 128      # TPU vreg lane width
SUBLANE = 8     # TPU vreg sublane count


def _round_up(x, m):
    return -(-x // m) * m


# ---------------------------------------------------------------------------
# Pallas kernel: fused bidirectional LSTM recurrence (packed-seq semantics).
# Inputs are the pre-projected gates G_in = x @ W_ih + b (time-major, padded),
# one ref per direction, plus the recurrent weights and the per-row lengths.
# ---------------------------------------------------------------------------
def bilstm_kernel(lens_ref, gf_ref, gb_ref, whf_ref, whb_ref,
                  of_ref, ob_ref, hnf_ref, hnb_ref):
    T, N, _ = gf_ref.shape
    Hd = whf_ref.shape[0]               # padded hidden width (multiple of 128)

    lens = lens_ref[...]                # (N, 1) int32, loaded once (loop invariant)

    def cell(g_in, h, c, whh_ref):
        gates = g_in + jnp.dot(h, whh_ref[...], preferred_element_type=jnp.float32)
        i = jax.nn.sigmoid(gates[:, 0 * Hd:1 * Hd])
        f = jax.nn.sigmoid(gates[:, 1 * Hd:2 * Hd])
        g = jnp.tanh(gates[:, 2 * Hd:3 * Hd])
        o = jax.nn.sigmoid(gates[:, 3 * Hd:4 * Hd])
        c_new = f * c + i * g
        h_new = o * jnp.tanh(c_new)
        return h_new, c_new

    def body(s, carry):
        hf, cf, hb, cb = carry
        tb = T - 1 - s
        mf = s < lens                   # (N, 1) bool: step s is inside the sequence
        mb = tb < lens
        # forward step s and backward step T-1-s are independent -> interleave
        hf_new, cf_new = cell(gf_ref[s], hf, cf, whf_ref)
        hb_new, cb_new = cell(gb_ref[tb], hb, cb, whb_ref)
        of_ref[s] = jnp.where(mf, hf_new, 0.0)       # padded steps -> 0
        ob_ref[tb] = jnp.where(mb, hb_new, 0.0)
        hf = jnp.where(mf, hf_new, hf)               # freeze state past length
        cf = jnp.where(mf, cf_new, cf)
        hb = jnp.where(mb, hb_new, hb)
        cb = jnp.where(mb, cb_new, cb)
        return hf, cf, hb, cb

    z = jnp.zeros((N, Hd), jnp.float32)
    hf, cf, hb, cb = lax.fori_loop(0, T, body, (z, z, z, z), unroll=True)
    hnf_ref[...] = hf                   # h at t = len-1 (forward)
    hnb_ref[...] = hb                   # h at t = 0     (backward)


# ---------------------------------------------------------------------------
# Weight packing: pre-transposed, gate-blocks zero-padded to 128-lane multiples
# ---------------------------------------------------------------------------
def _pad_gate_cols(w, Hd, Hd_pad):
    """Zero-pad each of the 4 gate blocks on the last (4*Hd) axis to Hd_pad."""
    lead = w.shape[:-1]
    w4 = w.reshape(lead + (4, Hd))
    pad = [(0, 0)] * (len(lead) + 1) + [(0, Hd_pad - Hd)]
    return jnp.pad(w4, pad).reshape(lead + (4 * Hd_pad,))


def pack_lstm_params(p):
    """Lane-aligned kernel layout (cheap; could be cached per-params in real use)."""
    Hd = p["whh_f"].shape[0]
    Hd_pad = _round_up(Hd, LANE)
    wih_f = _pad_gate_cols(p["wih_f"], Hd, Hd_pad)            # (E, 4*Hd_pad)
    wih_b = _pad_gate_cols(p["wih_b"], Hd, Hd_pad)
    b_f = _pad_gate_cols(p["b_f"], Hd, Hd_pad)[0]             # (4*Hd_pad,)
    b_b = _pad_gate_cols(p["b_b"], Hd, Hd_pad)[0]
    whh_f = _pad_gate_cols(jnp.pad(p["whh_f"], ((0, Hd_pad - Hd), (0, 0))), Hd, Hd_pad)
    whh_b = _pad_gate_cols(jnp.pad(p["whh_b"], ((0, Hd_pad - Hd), (0, 0))), Hd, Hd_pad)
    return dict(
        w_in=jnp.concatenate([wih_f, wih_b], axis=1),         # (E, 8*Hd_pad)
        b_in=jnp.concatenate([b_f, b_b], axis=0),             # (8*Hd_pad,)
        whh_f=whh_f, whh_b=whh_b, Hd=Hd, Hd_pad=Hd_pad)


def bilstm_pallas(x, lens, params):
    """x: (N, T, E) batch-first (PyTorch batch_first=True).  Returns
    outputs (N, T, 2*Hd) with [fwd || bwd] on the last dim, and
    h_n (N, 2*Hd) = [fwd_final || bwd_final] (== head+tail aggregation)."""
    N, T, E = x.shape
    kp = pack_lstm_params(params)
    Hd, Hd_pad = kp["Hd"], kp["Hd_pad"]
    G4 = 4 * Hd_pad
    Npad = _round_up(N, SUBLANE)

    xp = jnp.pad(x.astype(jnp.float32), ((0, Npad - N), (0, 0), (0, 0)))
    lens_p = jnp.pad(jnp.asarray(lens, jnp.int32), (0, Npad - N)).reshape(Npad, 1)

    # Hoisted input projection: one big MXU matmul for BOTH directions + bias,
    # removed from the serial recurrence entirely.
    x_tm = jnp.transpose(xp, (1, 0, 2))                                  # (T, Npad, E)
    g = x_tm.reshape(T * Npad, E) @ kp["w_in"] + kp["b_in"]              # (T*Npad, 8*Hd_pad)
    g = g.reshape(T, Npad, 2 * G4)
    gf, gb = g[..., :G4], g[..., G4:]                                    # (T, Npad, 4*Hd_pad)

    out_shape = (
        jax.ShapeDtypeStruct((T, Npad, Hd_pad), jnp.float32),   # fwd outputs (time-major)
        jax.ShapeDtypeStruct((T, Npad, Hd_pad), jnp.float32),   # bwd outputs
        jax.ShapeDtypeStruct((Npad, Hd_pad), jnp.float32),      # fwd final hidden
        jax.ShapeDtypeStruct((Npad, Hd_pad), jnp.float32),      # bwd final hidden
    )
    vmem = pl.BlockSpec(memory_space=pltpu.MemorySpace.VMEM)
    of, ob, hnf, hnb = pl.pallas_call(
        bilstm_kernel,
        out_shape=out_shape,
        in_specs=[vmem] * 5,
        out_specs=(vmem,) * 4,
    )(lens_p, gf, gb, kp["whh_f"], kp["whh_b"])

    # un-pad (drop zero lanes / zero rows) and restore batch-first layout
    out = jnp.concatenate([of[:, :N, :Hd], ob[:, :N, :Hd]], axis=-1)     # (T, N, 2*Hd)
    out = jnp.transpose(out, (1, 0, 2))                                  # (N, T, 2*Hd)
    h_n = jnp.concatenate([hnf[:N, :Hd], hnb[:N, :Hd]], axis=-1)         # (N, 2*Hd)
    return out, h_n


# ---------------------------------------------------------------------------
# Pure-JAX reference (same packed-seq semantics) for a correctness check
# ---------------------------------------------------------------------------
def bilstm_ref(x, lens, p):
    N, T, E = x.shape
    Hd = p["whh_f"].shape[0]
    mask = (jnp.arange(T)[None, :] < lens[:, None]).astype(jnp.float32)  # (N, T)

    def cell(x_t, m_t, h, c, wih, whh, b):
        g = x_t @ wih + h @ whh + b
        i = jax.nn.sigmoid(g[:, :Hd]); f = jax.nn.sigmoid(g[:, Hd:2 * Hd])
        gg = jnp.tanh(g[:, 2 * Hd:3 * Hd]); o = jax.nn.sigmoid(g[:, 3 * Hd:])
        c_new = f * c + i * gg
        h_new = o * jnp.tanh(c_new)
        m = m_t[:, None]
        return h_new, m * h_new + (1 - m) * h, m * c_new + (1 - m) * c

    h = jnp.zeros((N, Hd)); c = jnp.zeros((N, Hd)); outs_f = []
    for t in range(T):
        h_new, h, c = cell(x[:, t], mask[:, t], h, c, p["wih_f"], p["whh_f"], p["b_f"])
        outs_f.append(mask[:, t][:, None] * h_new)
    hn_f = h
    h = jnp.zeros((N, Hd)); c = jnp.zeros((N, Hd)); outs_b = [None] * T
    for t in range(T - 1, -1, -1):
        h_new, h, c = cell(x[:, t], mask[:, t], h, c, p["wih_b"], p["whh_b"], p["b_b"])
        outs_b[t] = mask[:, t][:, None] * h_new
    hn_b = h
    out = jnp.concatenate([jnp.stack(outs_f, 1), jnp.stack(outs_b, 1)], axis=-1)
    return out, jnp.concatenate([hn_f, hn_b], axis=-1)


# ---------------------------------------------------------------------------
# Parameter init (deterministic, PyTorch-like shapes)
# ---------------------------------------------------------------------------
def init_lstm_params(key, input_size, Hd):
    ks = jax.random.split(key, 8)
    s = 1.0 / math.sqrt(Hd)
    u = lambda k, shape: jax.random.uniform(k, shape, jnp.float32, -s, s)
    return dict(
        wih_f=u(ks[0], (input_size, 4 * Hd)),
        whh_f=u(ks[1], (Hd, 4 * Hd)),
        b_f=u(ks[2], (1, 4 * Hd)) + u(ks[3], (1, 4 * Hd)),    # b_ih + b_hh
        wih_b=u(ks[4], (input_size, 4 * Hd)),
        whh_b=u(ks[5], (Hd, 4 * Hd)),
        b_b=u(ks[6], (1, 4 * Hd)) + u(ks[7], (1, 4 * Hd)),
    )


def init_graph_input_params(key, word_vocab, embed_size, hidden_size):
    k_emb, k_q, k_s = jax.random.split(key, 3)
    Hd = hidden_size // 2
    embed = jax.random.normal(k_emb, (word_vocab, embed_size), jnp.float32) * 0.1
    embed = embed.at[0].set(0.0)   # padding_idx=0
    return dict(
        embed=embed,
        q_lstm=init_lstm_params(k_q, embed_size, Hd),      # question_lstm
        s_lstm=init_lstm_params(k_s, embed_size, Hd),      # schema_lstm (share_lstm=False)
    )


# ---------------------------------------------------------------------------
# GraphInputLayer.forward (schema_aggregation='head+tail', inference mode)
# ---------------------------------------------------------------------------
def graph_input_forward(params, batch):
    emb = params["embed"]
    question = emb[batch["questions"]]   # (B,  Tq, E)
    table = emb[batch["tables"]]         # (Nt, Tt, E)
    column = emb[batch["columns"]]       # (Nc, Tc, E)
    # unk masks are None -> masked_scatter_ skipped; dropout is identity (eval).

    # question LSTM
    q_out, _ = bilstm_pallas(question, batch["question_lens"], params["q_lstm"])

    # table + column phrases share schema_lstm weights -> one merged pallas_call
    Nt, Tt, _ = table.shape
    Nc, Tc, _ = column.shape
    Ts = max(Tt, Tc)
    table_p = jnp.pad(table, ((0, 0), (0, Ts - Tt), (0, 0)))
    column_p = jnp.pad(column, ((0, 0), (0, Ts - Tc), (0, 0)))
    schema = jnp.concatenate([table_p, column_p], axis=0)                # (Nt+Nc, Ts, E)
    schema_lens = jnp.concatenate([batch["table_word_lens"], batch["column_word_lens"]])
    _, s_hn = bilstm_pallas(schema, schema_lens, params["s_lstm"])       # (Nt+Nc, H)

    # interleave q_b, t_b, c_b per example with ONE gather (lengths are static)
    B, Tq, H = q_out.shape
    combined = jnp.concatenate([q_out.reshape(B * Tq, H), s_hn], axis=0)
    q_lens = batch["question_lens_py"]
    t_lens = batch["table_lens_py"]
    c_lens = batch["column_lens_py"]
    t_base, c_base = B * Tq, B * Tq + Nt
    idx, t_off, c_off = [], 0, 0
    for b in range(B):
        idx.extend(b * Tq + t for t in range(q_lens[b]))
        idx.extend(t_base + t_off + k for k in range(t_lens[b])); t_off += t_lens[b]
        idx.extend(c_base + c_off + k for k in range(c_lens[b])); c_off += c_lens[b]
    idx = jnp.asarray(idx, jnp.int32)
    return jnp.take(combined, idx, axis=0)


if __name__ == "__main__":
    key = jax.random.PRNGKey(0)
    B = 2
    embed_size = 32
    hidden_size = 32
    word_vocab = 100

    # per-example token counts
    question_lens_py = [8, 6]
    table_lens_py = [2, 3]      # number of tables per example  -> Nt = 5
    column_lens_py = [3, 2]     # number of columns per example -> Nc = 5
    table_word_lens_py = [2, 3, 1, 2, 2]    # words per table name
    column_word_lens_py = [1, 2, 3, 2, 1]   # words per column name

    Tq, Tt, Tc = max(question_lens_py), max(table_word_lens_py), max(column_word_lens_py)
    Nt, Nc = sum(table_lens_py), sum(column_lens_py)

    k_q, k_t, k_c, k_p = jax.random.split(key, 4)

    def make_ids(k, n, T, lens):
        ids = jax.random.randint(k, (n, T), 1, word_vocab, dtype=jnp.int32)
        m = jnp.arange(T)[None, :] < jnp.asarray(lens)[:, None]
        return jnp.where(m, ids, 0)   # pad with padding_idx=0

    batch = dict(
        questions=make_ids(k_q, B, Tq, question_lens_py),
        tables=make_ids(k_t, Nt, Tt, table_word_lens_py),
        columns=make_ids(k_c, Nc, Tc, column_word_lens_py),
        question_lens=jnp.asarray(question_lens_py, jnp.int32),
        table_word_lens=jnp.asarray(table_word_lens_py, jnp.int32),
        column_word_lens=jnp.asarray(column_word_lens_py, jnp.int32),
        question_lens_py=question_lens_py,
        table_lens_py=table_lens_py,
        column_lens_py=column_lens_py,
    )

    params = init_graph_input_params(k_p, word_vocab, embed_size, hidden_size)

    # run the Pallas-backed forward
    out = graph_input_forward(params, batch)
    out = jax.block_until_ready(out)

    expected_rows = sum(question_lens_py) + Nt + Nc
    assert out.shape == (expected_rows, hidden_size), out.shape

    # correctness check of the Pallas BiLSTM against a pure-JAX reference
    q_emb = params["embed"][batch["questions"]]
    o_pal, h_pal = bilstm_pallas(q_emb, batch["question_lens"], params["q_lstm"])
    o_ref, h_ref = bilstm_ref(q_emb.astype(jnp.float32), batch["question_lens"], params["q_lstm"])
    np.testing.assert_allclose(np.asarray(o_pal), np.asarray(o_ref), rtol=2e-5, atol=2e-5)
    np.testing.assert_allclose(np.asarray(h_pal), np.asarray(h_ref), rtol=2e-5, atol=2e-5)

    t_emb = params["embed"][batch["tables"]]
    _, ht_pal = bilstm_pallas(t_emb, batch["table_word_lens"], params["s_lstm"])
    _, ht_ref = bilstm_ref(t_emb.astype(jnp.float32), batch["table_word_lens"], params["s_lstm"])
    np.testing.assert_allclose(np.asarray(ht_pal), np.asarray(ht_ref), rtol=2e-5, atol=2e-5)

    # end-to-end check (merged schema call + single-gather interleave)
    c_emb = params["embed"][batch["columns"]]
    q_out_r, _ = bilstm_ref(q_emb.astype(jnp.float32), batch["question_lens"], params["q_lstm"])
    _, t_hn_r = bilstm_ref(t_emb.astype(jnp.float32), batch["table_word_lens"], params["s_lstm"])
    _, c_hn_r = bilstm_ref(c_emb.astype(jnp.float32), batch["column_word_lens"], params["s_lstm"])
    pieces, t_off, c_off = [], 0, 0
    for b in range(B):
        pieces.append(q_out_r[b, :question_lens_py[b]])
        pieces.append(t_hn_r[t_off:t_off + table_lens_py[b]]); t_off += table_lens_py[b]
        pieces.append(c_hn_r[c_off:c_off + column_lens_py[b]]); c_off += column_lens_py[b]
    ref_out = jnp.concatenate(pieces, axis=0)
    np.testing.assert_allclose(np.asarray(out), np.asarray(ref_out), rtol=2e-5, atol=2e-5)

    print("KERNEL_OK")
</pallas_src>

<mosaic_0001>
module attributes {stable_mosaic.version = 11 : i64} {
  func.func @bilstm_kernel(%arg0: memref<8x1xi32, #tpu.memory_space<vmem>>, %arg1: memref<8x8x512xf32, #tpu.memory_space<vmem>>, %arg2: memref<8x8x512xf32, #tpu.memory_space<vmem>>, %arg3: memref<128x512xf32, #tpu.memory_space<vmem>>, %arg4: memref<128x512xf32, #tpu.memory_space<vmem>>, %arg5: memref<8x8x128xf32, #tpu.memory_space<vmem>>, %arg6: memref<8x8x128xf32, #tpu.memory_space<vmem>>, %arg7: memref<8x128xf32, #tpu.memory_space<vmem>>, %arg8: memref<8x128xf32, #tpu.memory_space<vmem>>) attributes {dimension_semantics = [], scalar_prefetch = 0 : i64, scratch_operands = 0 : i64, tpu.core_type = #tpu.core_type<tc>} {
    %c0 = arith.constant 0 : index
    %c0_0 = arith.constant 0 : index
    %0 = vector.load %arg0[%c0, %c0_0] : memref<8x1xi32, #tpu.memory_space<vmem>>, vector<8x1xi32>
    %cst = arith.constant 0.000000e+00 : f32
    %1 = vector.broadcast %cst : f32 to vector<8x128xf32>
    %c0_i32 = arith.constant 0 : i32
    %c7_i32 = arith.constant 7 : i32
    %2 = arith.subi %c7_i32, %c0_i32 : i32
    %3 = vector.broadcast %c0_i32 : i32 to vector<8x1xi32>
    %4 = arith.cmpi slt, %3, %0 : vector<8x1xi32>
    %5 = vector.broadcast %2 : i32 to vector<8x1xi32>
    %6 = arith.cmpi slt, %5, %0 : vector<8x1xi32>
    %7 = arith.index_cast %c0_i32 : i32 to index
    %c0_1 = arith.constant 0 : index
    %c0_2 = arith.constant 0 : index
    %8 = vector.load %arg1[%7, %c0_1, %c0_2] : memref<8x8x512xf32, #tpu.memory_space<vmem>>, vector<1x8x512xf32>
    %9 = vector.shape_cast %8 : vector<1x8x512xf32> to vector<8x512xf32>
    %c0_3 = arith.constant 0 : index
    %c0_4 = arith.constant 0 : index
    %10 = vector.load %arg3[%c0_3, %c0_4] : memref<128x512xf32, #tpu.memory_space<vmem>>, vector<128x512xf32>
    %cst_5 = arith.constant dense<0.000000e+00> : vector<8x512xf32>
    %11 = tpu.matmul %1, %10, %cst_5 {dimension_numbers = #tpu.dot_dimension_numbers<[1], [0], [0], [1], [0, 0, 1, 1], [], []>} : vector<8x128xf32>, vector<128x512xf32>, vector<8x512xf32> -> vector<8x512xf32>
    %12 = arith.addf %9, %11 : vector<8x512xf32>
    %13 = vector.extract_strided_slice %12 {offsets = [0, 0], sizes = [8, 128], strides = [1, 1]} : vector<8x512xf32> to vector<8x128xf32>
    %14 = arith.negf %13 : vector<8x128xf32>
    %15 = math.exp %14 : vector<8x128xf32>
    %cst_6 = arith.constant 1.000000e+00 : f32
    %16 = vector.broadcast %cst_6 : f32 to vector<8x128xf32>
    %17 = arith.addf %16, %15 : vector<8x128xf32>
    %18 = arith.divf %16, %17 : vector<8x128xf32>
    %19 = vector.extract_strided_slice %12 {offsets = [0, 128], sizes = [8, 128], strides = [1, 1]} : vector<8x512xf32> to vector<8x128xf32>
    %20 = arith.negf %19 : vector<8x128xf32>
    %21 = math.exp %20 : vector<8x128xf32>
    %cst_7 = arith.constant 1.000000e+00 : f32
    %22 = vector.broadcast %cst_7 : f32 to vector<8x128xf32>
    %23 = arith.addf %22, %21 : vector<8x128xf32>
    %24 = arith.divf %22, %23 : vector<8x128xf32>
    %25 = vector.extract_strided_slice %12 {offsets = [0, 256], sizes = [8, 128], strides = [1, 1]} : vector<8x512xf32> to vector<8x128xf32>
    %26 = math.tanh %25 : vector<8x128xf32>
    %27 = vector.extract_strided_slice %12 {offsets = [0, 384], sizes = [8, 128], strides = [1, 1]} : vector<8x512xf32> to vector<8x128xf32>
    %28 = arith.negf %27 : vector<8x128xf32>
    %29 = math.exp %28 : vector<8x128xf32>
    %cst_8 = arith.constant 1.000000e+00 : f32
    %30 = vector.broadcast %cst_8 : f32 to vector<8x128xf32>
    %31 = arith.addf %30, %29 : vector<8x128xf32>
    %32 = arith.divf %30, %31 : vector<8x128xf32>
    %33 = arith.mulf %24, %1 : vector<8x128xf32>
    %34 = arith.mulf %18, %26 : vector<8x128xf32>
    %35 = arith.addf %33, %34 : vector<8x128xf32>
    %36 = math.tanh %35 : vector<8x128xf32>
    %37 = arith.mulf %32, %36 : vector<8x128xf32>
    %38 = arith.index_cast %2 : i32 to index
    %c0_9 = arith.constant 0 : index
    %c0_10 = arith.constant 0 : index
    %39 = vector.load %arg2[%38, %c0_9, %c0_10] : memref<8x8x512xf32, #tpu.memory_space<vmem>>, vector<1x8x512xf32>
    %40 = vector.shape_cast %39 : vector<1x8x512xf32> to vector<8x512xf32>
    %c0_11 = arith.constant 0 : index
    %c0_12 = arith.constant 0 : index
    %41 = vector.load %arg4[%c0_11, %c0_12] : memref<128x512xf32, #tpu.memory_space<vmem>>, vector<128x512xf32>
    %cst_13 = arith.constant dense<0.000000e+00> : vector<8x512xf32>
    %42 = tpu.matmul %1, %41, %cst_13 {dimension_numbers = #tpu.dot_dimension_numbers<[1], [0], [0], [1], [0, 0, 1, 1], [], []>} : vector<8x128xf32>, vector<128x512xf32>, vector<8x512xf32> -> vector<8x512xf32>
    %43 = arith.addf %40, %42 : vector<8x512xf32>
    %44 = vector.extract_strided_slice %43 {offsets = [0, 0], sizes = [8, 128], strides = [1, 1]} : vector<8x512xf32> to vector<8x128xf32>
    %45 = arith.negf %44 : vector<8x128xf32>
    %46 = math.exp %45 : vector<8x128xf32>
    %cst_14 = arith.constant 1.000000e+00 : f32
    %47 = vector.broadcast %cst_14 : f32 to vector<8x128xf32>
    %48 = arith.addf %47, %46 : vector<8x128xf32>
    %49 = arith.divf %47, %48 : vector<8x128xf32>
    %50 = vector.extract_strided_slice %43 {offsets = [0, 128], sizes = [8, 128], strides = [1, 1]} : vector<8x512xf32> to vector<8x128xf32>
    %51 = arith.negf %50 : vector<8x128xf32>
    %52 = math.exp %51 : vector<8x128xf32>
    %cst_15 = arith.constant 1.000000e+00 : f32
    %53 = vector.broadcast %cst_15 : f32 to vector<8x128xf32>
    %54 = arith.addf %53, %52 : vector<8x128xf32>
    %55 = arith.divf %53, %54 : vector<8x128xf32>
    %56 = vector.extract_strided_slice %43 {offsets = [0, 256], sizes = [8, 128], strides = [1, 1]} : vector<8x512xf32> to vector<8x128xf32>
    %57 = math.tanh %56 : vector<8x128xf32>
    %58 = vector.extract_strided_slice %43 {offsets = [0, 384], sizes = [8, 128], strides = [1, 1]} : vector<8x512xf32> to vector<8x128xf32>
    %59 = arith.negf %58 : vector<8x128xf32>
    %60 = math.exp %59 : vector<8x128xf32>
    %cst_16 = arith.constant 1.000000e+00 : f32
    %61 = vector.broadcast %cst_16 : f32 to vector<8x128xf32>
    %62 = arith.addf %61, %60 : vector<8x128xf32>
    %63 = arith.divf %61, %62 : vector<8x128xf32>
    %64 = arith.mulf %55, %1 : vector<8x128xf32>
    %65 = arith.mulf %49, %57 : vector<8x128xf32>
    %66 = arith.addf %64, %65 : vector<8x128xf32>
    %67 = math.tanh %66 : vector<8x128xf32>
    %68 = arith.mulf %63, %67 : vector<8x128xf32>
    %cst_17 = arith.constant 0.000000e+00 : f32
    %69 = vector.shape_cast %4 : vector<8x1xi1> to vector<8x1xi1>
    %70 = vector.broadcast %69 : vector<8x1xi1> to vector<8x128xi1>
    %71 = vector.broadcast %cst_17 : f32 to vector<8x128xf32>
    %72 = arith.select %70, %37, %71 : vector<8x128xi1>, vector<8x128xf32>
    %73 = arith.index_cast %c0_i32 : i32 to index
    %c0_18 = arith.constant 0 : index
    %c0_19 = arith.constant 0 : index
    %74 = vector.load %arg5[%73, %c0_18, %c0_19] : memref<8x8x128xf32, #tpu.memory_space<vmem>>, vector<1x8x128xf32>
    %75 = vector.shape_cast %74 : vector<1x8x128xf32> to vector<8x128xf32>
    %76 = vector.shape_cast %72 : vector<8x128xf32> to vector<1x8x128xf32>
    tpu.vector_store %arg5[%73, %c0_18, %c0_19], %76 {strides = array<i32>} : memref<8x8x128xf32, #tpu.memory_space<vmem>>, vector<1x8x128xf32>,
    %cst_20 = arith.constant 0.000000e+00 : f32
    %77 = vector.shape_cast %6 : vector<8x1xi1> to vector<8x1xi1>
    %78 = vector.broadcast %77 : vector<8x1xi1> to vector<8x128xi1>
    %79 = vector.broadcast %cst_20 : f32 to vector<8x128xf32>
    %80 = arith.select %78, %68, %79 : vector<8x128xi1>, vector<8x128xf32>
    %81 = arith.index_cast %2 : i32 to index
    %c0_21 = arith.constant 0 : index
    %c0_22 = arith.constant 0 : index
    %82 = vector.load %arg6[%81, %c0_21, %c0_22] : memref<8x8x128xf32, #tpu.memory_space<vmem>>, vector<1x8x128xf32>
    %83 = vector.shape_cast %82 : vector<1x8x128xf32> to vector<8x128xf32>
    %84 = vector.shape_cast %80 : vector<8x128xf32> to vector<1x8x128xf32>
    tpu.vector_store %arg6[%81, %c0_21, %c0_22], %84 {strides = array<i32>} : memref<8x8x128xf32, #tpu.memory_space<vmem>>, vector<1x8x128xf32>,
    %85 = vector.shape_cast %4 : vector<8x1xi1> to vector<8x1xi1>
    %86 = vector.broadcast %85 : vector<8x1xi1> to vector<8x128xi1>
    %87 = arith.select %86, %37, %1 : vector<8x128xi1>, vector<8x128xf32>
    %88 = vector.shape_cast %4 : vector<8x1xi1> to vector<8x1xi1>
    %89 = vector.broadcast %88 : vector<8x1xi1> to vector<8x128xi1>
    %90 = arith.select %89, %35, %1 : vector<8x128xi1>, vector<8x128xf32>
    %91 = vector.shape_cast %6 : vector<8x1xi1> to vector<8x1xi1>
    %92 = vector.broadcast %91 : vector<8x1xi1> to vector<8x128xi1>
    %93 = arith.select %92, %68, %1 : vector<8x128xi1>, vector<8x128xf32>
    %94 = vector.shape_cast %6 : vector<8x1xi1> to vector<8x1xi1>
    %95 = vector.broadcast %94 : vector<8x1xi1> to vector<8x128xi1>
    %96 = arith.select %95, %66, %1 : vector<8x128xi1>, vector<8x128xf32>
    %c1_i32 = arith.constant 1 : i32
    %c7_i32_23 = arith.constant 7 : i32
    %97 = arith.subi %c7_i32_23, %c1_i32 : i32
    %98 = vector.broadcast %c1_i32 : i32 to vector<8x1xi32>
    %99 = arith.cmpi slt, %98, %0 : vector<8x1xi32>
    %100 = vector.broadcast %97 : i32 to vector<8x1xi32>
    %101 = arith.cmpi slt, %100, %0 : vector<8x1xi32>
    %102 = arith.index_cast %c1_i32 : i32 to index
    %c0_24 = arith.constant 0 : index
    %c0_25 = arith.constant 0 : index
    %103 = vector.load %arg1[%102, %c0_24, %c0_25] : memref<8x8x512xf32, #tpu.memory_space<vmem>>, vector<1x8x512xf32>
    %104 = vector.shape_cast %103 : vector<1x8x512xf32> to vector<8x512xf32>
    %c0_26 = arith.constant 0 : index
    %c0_27 = arith.constant 0 : index
    %105 = vector.load %arg3[%c0_26, %c0_27] : memref<128x512xf32, #tpu.memory_space<vmem>>, vector<128x512xf32>
    %cst_28 = arith.constant dense<0.000000e+00> : vector<8x512xf32>
    %106 = tpu.matmul %87, %105, %cst_28 {dimension_numbers = #tpu.dot_dimension_numbers<[1], [0], [0], [1], [0, 0, 1, 1], [], []>} : vector<8x128xf32>, vector<128x512xf32>, vector<8x512xf32> -> vector<8x512xf32>
    %107 = arith.addf %104, %106 : vector<8x512xf32>
    %108 = vector.extract_strided_slice %107 {offsets = [0, 0], sizes = [8, 128], strides = [1, 1]} : vector<8x512xf32> to vector<8x128xf32>
    %109 = arith.negf %108 : vector<8x128xf32>
    %110 = math.exp %109 : vector<8x128xf32>
    %cst_29 = arith.constant 1.000000e+00 : f32
    %111 = vector.broadcast %cst_29 : f32 to vector<8x128xf32>
    %112 = arith.addf %111, %110 : vector<8x128xf32>
    %113 = arith.divf %111, %112 : vector<8x128xf32>
    %114 = vector.extract_strided_slice %107 {offsets = [0, 128], sizes = [8, 128], strides = [1, 1]} : vector<8x512xf32> to vector<8x128xf32>
    %115 = arith.negf %114 : vector<8x128xf32>
    %116 = math.exp %115 : vector<8x128xf32>
    %cst_30 = arith.constant 1.000000e+00 : f32
    %117 = vector.broadcast %cst_30 : f32 to vector<8x128xf32>
    %118 = arith.addf %117, %116 : vector<8x128xf32>
    %119 = arith.divf %117, %118 : vector<8x128xf32>
    %120 = vector.extract_strided_slice %107 {offsets = [0, 256], sizes = [8, 128], strides = [1, 1]} : vector<8x512xf32> to vector<8x128xf32>
    %121 = math.tanh %120 : vector<8x128xf32>
    %122 = vector.extract_strided_slice %107 {offsets = [0, 384], sizes = [8, 128], strides = [1, 1]} : vector<8x512xf32> to vector<8x128xf32>
    %123 = arith.negf %122 : vector<8x128xf32>
    %124 = math.exp %123 : vector<8x128xf32>
    %cst_31 = arith.constant 1.000000e+00 : f32
    %125 = vector.broadcast %cst_31 : f32 to vector<8x128xf32>
    %126 = arith.addf %125, %124 : vector<8x128xf32>
    %127 = arith.divf %125, %126 : vector<8x128xf32>
    %128 = arith.mulf %119, %90 : vector<8x128xf32>
    %129 = arith.mulf %113, %121 : vector<8x128xf32>
    %130 = arith.addf %128, %129 : vector<8x128xf32>
    %131 = math.tanh %130 : vector<8x128xf32>
    %132 = arith.mulf %127, %131 : vector<8x128xf32>
    %133 = arith.index_cast %97 : i32 to index
    %c0_32 = arith.constant 0 : index
    %c0_33 = arith.constant 0 : index
    %134 = vector.load %arg2[%133, %c0_32, %c0_33] : memref<8x8x512xf32, #tpu.memory_space<vmem>>, vector<1x8x512xf32>
    %135 = vector.shape_cast %134 : vector<1x8x512xf32> to vector<8x512xf32>
    %c0_34 = arith.constant 0 : index
    %c0_35 = arith.constant 0 : index
    %136 = vector.load %arg4[%c0_34, %c0_35] : memref<128x512xf32, #tpu.memory_space<vmem>>, vector<128x512xf32>
    %cst_36 = arith.constant dense<0.000000e+00> : vector<8x512xf32>
    %137 = tpu.matmul %93, %136, %cst_36 {dimension_numbers = #tpu.dot_dimension_numbers<[1], [0], [0], [1], [0, 0, 1, 1], [], []>} : vector<8x128xf32>, vector<128x512xf32>, vector<8x512xf32> -> vector<8x512xf32>
    %138 = arith.addf %135, %137 : vector<8x512xf32>
    %139 = vector.extract_strided_slice %138 {offsets = [0, 0], sizes = [8, 128], strides = [1, 1]} : vector<8x512xf32> to vector<8x128xf32>
    %140 = arith.negf %139 : vector<8x128xf32>
    %141 = math.exp %140 : vector<8x128xf32>
    %cst_37 = arith.constant 1.000000e+00 : f32
    %142 = vector.broadcast %cst_37 : f32 to vector<8x128xf32>
    %143 = arith.addf %142, %141 : vector<8x128xf32>
    %144 = arith.divf %142, %143 : vector<8x128xf32>
    %145 = vector.extract_strided_slice %138 {offsets = [0, 128], sizes = [8, 128], strides = [1, 1]} : vector<8x512xf32> to vector<8x128xf32>
    %146 = arith.negf %145 : vector<8x128xf32>
    %147 = math.exp %146 : vector<8x128xf32>
    %cst_38 = arith.constant 1.000000e+00 : f32
    %148 = vector.broadcast %cst_38 : f32 to vector<8x128xf32>
    %149 = arith.addf %148, %147 : vector<8x128xf32>
    %150 = arith.divf %148, %149 : vector<8x128xf32>
    %151 = vector.extract_strided_slice %138 {offsets = [0, 256], sizes = [8, 128], strides = [1, 1]} : vector<8x512xf32> to vector<8x128xf32>
    %152 = math.tanh %151 : vector<8x128xf32>
    %153 = vector.extract_strided_slice %138 {offsets = [0, 384], sizes = [8, 128], strides = [1, 1]} : vector<8x512xf32> to vector<8x128xf32>
    %154 = arith.negf %153 : vector<8x128xf32>
    %155 = math.exp %154 : vector<8x128xf32>
    %cst_39 = arith.constant 1.000000e+00 : f32
    %156 = vector.broadcast %cst_39 : f32 to vector<8x128xf32>
    %157 = arith.addf %156, %155 : vector<8x128xf32>
    %158 = arith.divf %156, %157 : vector<8x128xf32>
    %159 = arith.mulf %150, %96 : vector<8x128xf32>
    %160 = arith.mulf %144, %152 : vector<8x128xf32>
    %161 = arith.addf %159, %160 : vector<8x128xf32>
    %162 = math.tanh %161 : vector<8x128xf32>
    %163 = arith.mulf %158, %162 : vector<8x128xf32>
    %cst_40 = arith.constant 0.000000e+00 : f32
    %164 = vector.shape_cast %99 : vector<8x1xi1> to vector<8x1xi1>
    %165 = vector.broadcast %164 : vector<8x1xi1> to vector<8x128xi1>
    %166 = vector.broadcast %cst_40 : f32 to vector<8x128xf32>
    %167 = arith.select %165, %132, %166 : vector<8x128xi1>, vector<8x128xf32>
    %168 = arith.index_cast %c1_i32 : i32 to index
    %c0_41 = arith.constant 0 : index
    %c0_42 = arith.constant 0 : index
    %169 = vector.load %arg5[%168, %c0_41, %c0_42] : memref<8x8x128xf32, #tpu.memory_space<vmem>>, vector<1x8x128xf32>
    %170 = vector.shape_cast %169 : vector<1x8x128xf32> to vector<8x128xf32>
    %171 = vector.shape_cast %167 : vector<8x128xf32> to vector<1x8x128xf32>
    tpu.vector_store %arg5[%168, %c0_41, %c0_42], %171 {strides = array<i32>} : memref<8x8x128xf32, #tpu.memory_space<vmem>>, vector<1x8x128xf32>,
    %cst_43 = arith.constant 0.000000e+00 : f32
    %172 = vector.shape_cast %101 : vector<8x1xi1> to vector<8x1xi1>
    %173 = vector.broadcast %172 : vector<8x1xi1> to vector<8x128xi1>
    %174 = vector.broadcast %cst_43 : f32 to vector<8x128xf32>
    %175 = arith.select %173, %163, %174 : vector<8x128xi1>, vector<8x128xf32>
    %176 = arith.index_cast %97 : i32 to index
    %c0_44 = arith.constant 0 : index
    %c0_45 = arith.constant 0 : index
    %177 = vector.load %arg6[%176, %c0_44, %c0_45] : memref<8x8x128xf32, #tpu.memory_space<vmem>>, vector<1x8x128xf32>
    %178 = vector.shape_cast %177 : vector<1x8x128xf32> to vector<8x128xf32>
    %179 = vector.shape_cast %175 : vector<8x128xf32> to vector<1x8x128xf32>
    tpu.vector_store %arg6[%176, %c0_44, %c0_45], %179 {strides = array<i32>} : memref<8x8x128xf32, #tpu.memory_space<vmem>>, vector<1x8x128xf32>,
    %180 = vector.shape_cast %99 : vector<8x1xi1> to vector<8x1xi1>
    %181 = vector.broadcast %180 : vector<8x1xi1> to vector<8x128xi1>
    %182 = arith.select %181, %132, %87 : vector<8x128xi1>, vector<8x128xf32>
    %183 = vector.shape_cast %99 : vector<8x1xi1> to vector<8x1xi1>
    %184 = vector.broadcast %183 : vector<8x1xi1> to vector<8x128xi1>
    %185 = arith.select %184, %130, %90 : vector<8x128xi1>, vector<8x128xf32>
    %186 = vector.shape_cast %101 : vector<8x1xi1> to vector<8x1xi1>
    %187 = vector.broadcast %186 : vector<8x1xi1> to vector<8x128xi1>
    %188 = arith.select %187, %163, %93 : vector<8x128xi1>, vector<8x128xf32>
    %189 = vector.shape_cast %101 : vector<8x1xi1> to vector<8x1xi1>
    %190 = vector.broadcast %189 : vector<8x1xi1> to vector<8x128xi1>
    %191 = arith.select %190, %161, %96 : vector<8x128xi1>, vector<8x128xf32>
    %c2_i32 = arith.constant 2 : i32
    %c7_i32_46 = arith.constant 7 : i32
    %192 = arith.subi %c7_i32_46, %c2_i32 : i32
    %193 = vector.broadcast %c2_i32 : i32 to vector<8x1xi32>
    %194 = arith.cmpi slt, %193, %0 : vector<8x1xi32>
    %195 = vector.broadcast %192 : i32 to vector<8x1xi32>
    %196 = arith.cmpi slt, %195, %0 : vector<8x1xi32>
    %197 = arith.index_cast %c2_i32 : i32 to index
    %c0_47 = arith.constant 0 : index
    %c0_48 = arith.constant 0 : index
    %198 = vector.load %arg1[%197, %c0_47, %c0_48] : memref<8x8x512xf32, #tpu.memory_space<vmem>>, vector<1x8x512xf32>
    %199 = vector.shape_cast %198 : vector<1x8x512xf32> to vector<8x512xf32>
    %c0_49 = arith.constant 0 : index
    %c0_50 = arith.constant 0 : index
    %200 = vector.load %arg3[%c0_49, %c0_50] : memref<128x512xf32, #tpu.memory_space<vmem>>, vector<128x512xf32>
    %cst_51 = arith.constant dense<0.000000e+00> : vector<8x512xf32>
    %201 = tpu.matmul %182, %200, %cst_51 {dimension_numbers = #tpu.dot_dimension_numbers<[1], [0], [0], [1], [0, 0, 1, 1], [], []>} : vector<8x128xf32>, vector<128x512xf32>, vector<8x512xf32> -> vector<8x512xf32>
    %202 = arith.addf %199, %201 : vector<8x512xf32>
    %203 = vector.extract_strided_slice %202 {offsets = [0, 0], sizes = [8, 128], strides = [1, 1]} : vector<8x512xf32> to vector<8x128xf32>
    %204 = arith.negf %203 : vector<8x128xf32>
    %205 = math.exp %204 : vector<8x128xf32>
    %cst_52 = arith.constant 1.000000e+00 : f32
    %206 = vector.broadcast %cst_52 : f32 to vector<8x128xf32>
    %207 = arith.addf %206, %205 : vector<8x128xf32>
    %208 = arith.divf %206, %207 : vector<8x128xf32>
    %209 = vector.extract_strided_slice %202 {offsets = [0, 128], sizes = [8, 128], strides = [1, 1]} : vector<8x512xf32> to vector<8x128xf32>
    %210 = arith.negf %209 : vector<8x128xf32>
    %211 = math.exp %210 : vector<8x128xf32>
    %cst_53 = arith.constant 1.000000e+00 : f32
    %212 = vector.broadcast %cst_53 : f32 to vector<8x128xf32>
    %213 = arith.addf %212, %211 : vector<8x128xf32>
    %214 = arith.divf %212, %213 : vector<8x128xf32>
    %215 = vector.extract_strided_slice %202 {offsets = [0, 256], sizes = [8, 128], strides = [1, 1]} : vector<8x512xf32> to vector<8x128xf32>
    %216 = math.tanh %215 : vector<8x128xf32>
    %217 = vector.extract_strided_slice %202 {offsets = [0, 384], sizes = [8, 128], strides = [1, 1]} : vector<8x512xf32> to vector<8x128xf32>
    %218 = arith.negf %217 : vector<8x128xf32>
    %219 = math.exp %218 : vector<8x128xf32>
    %cst_54 = arith.constant 1.000000e+00 : f32
    %220 = vector.broadcast %cst_54 : f32 to vector<8x128xf32>
    %221 = arith.addf %220, %219 : vector<8x128xf32>
    %222 = arith.divf %220, %221 : vector<8x128xf32>
    %223 = arith.mulf %214, %185 : vector<8x128xf32>
    %224 = arith.mulf %208, %216 : vector<8x128xf32>
    %225 = arith.addf %223, %224 : vector<8x128xf32>
    %226 = math.tanh %225 : vector<8x128xf32>
    %227 = arith.mulf %222, %226 : vector<8x128xf32>
    %228 = arith.index_cast %192 : i32 to index
    %c0_55 = arith.constant 0 : index
    %c0_56 = arith.constant 0 : index
    %229 = vector.load %arg2[%228, %c0_55, %c0_56] : memref<8x8x512xf32, #tpu.memory_space<vmem>>, vector<1x8x512xf32>
    %230 = vector.shape_cast %229 : vector<1x8x512xf32> to vector<8x512xf32>
    %c0_57 = arith.constant 0 : index
    %c0_58 = arith.constant 0 : index
    %231 = vector.load %arg4[%c0_57, %c0_58] : memref<128x512xf32, #tpu.memory_space<vmem>>, vector<128x512xf32>
    %cst_59 = arith.constant dense<0.000000e+00> : vector<8x512xf32>
    %232 = tpu.matmul %188, %231, %cst_59 {dimension_numbers = #tpu.dot_dimension_numbers<[1], [0], [0], [1], [0, 0, 1, 1], [], []>} : vector<8x128xf32>, vector<128x512xf32>, vector<8x512xf32> -> vector<8x512xf32>
    %233 = arith.addf %230, %232 : vector<8x512xf32>
    %234 = vector.extract_strided_slice %233 {offsets = [0, 0], sizes = [8, 128], strides = [1, 1]} : vector<8x512xf32> to vector<8x128xf32>
    %235 = arith.negf %234 : vector<8x128xf32>
    %236 = math.exp %235 : vector<8x128xf32>
    %cst_60 = arith.constant 1.000000e+00 : f32
    %237 = vector.broadcast %cst_60 : f32 to vector<8x128xf32>
    %238 = arith.addf %237, %236 : vector<8x128xf32>
    %239 = arith.divf %237, %238 : vector<8x128xf32>
    %240 = vector.extract_strided_slice %233 {offsets = [0, 128], sizes = [8, 128], strides = [1, 1]} : vector<8x512xf32> to vector<8x128xf32>
    %241 = arith.negf %240 : vector<8x128xf32>
    %242 = math.exp %241 : vector<8x128xf32>
    %cst_61 = arith.constant 1.000000e+00 : f32
    %243 = vector.broadcast %cst_61 : f32 to vector<8x128xf32>
    %244 = arith.addf %243, %242 : vector<8x128xf32>
    %245 = arith.divf %243, %244 : vector<8x128xf32>
    %246 = vector.extract_strided_slice %233 {offsets = [0, 256], sizes = [8, 128], strides = [1, 1]} : vector<8x512xf32> to vector<8x128xf32>
    %247 = math.tanh %246 : vector<8x128xf32>
    %248 = vector.extract_strided_slice %233 {offsets = [0, 384], sizes = [8, 128], strides = [1, 1]} : vector<8x512xf32> to vector<8x128xf32>
    %249 = arith.negf %248 : vector<8x128xf32>
    %250 = math.exp %249 : vector<8x128xf32>
    %cst_62 = arith.constant 1.000000e+00 : f32
    %251 = vector.broadcast %cst_62 : f32 to vector<8x128xf32>
    %252 = arith.addf %251, %250 : vector<8x128xf32>
    %253 = arith.divf %251, %252 : vector<8x128xf32>
    %254 = arith.mulf %245, %191 : vector<8x128xf32>
    %255 = arith.mulf %239, %247 : vector<8x128xf32>
    %256 = arith.addf %254, %255 : vector<8x128xf32>
    %257 = math.tanh %256 : vector<8x128xf32>
    %258 = arith.mulf %253, %257 : vector<8x128xf32>
    %cst_63 = arith.constant 0.000000e+00 : f32
    %259 = vector.shape_cast %194 : vector<8x1xi1> to vector<8x1xi1>
    %260 = vector.broadcast %259 : vector<8x1xi1> to vector<8x128xi1>
    %261 = vector.broadcast %cst_63 : f32 to vector<8x128xf32>
    %262 = arith.select %260, %227, %261 : vector<8x128xi1>, vector<8x128xf32>
    %263 = arith.index_cast %c2_i32 : i32 to index
    %c0_64 = arith.constant 0 : index
    %c0_65 = arith.constant 0 : index
    %264 = vector.load %arg5[%263, %c0_64, %c0_65] : memref<8x8x128xf32, #tpu.memory_space<vmem>>, vector<1x8x128xf32>
    %265 = vector.shape_cast %264 : vector<1x8x128xf32> to vector<8x128xf32>
    %266 = vector.shape_cast %262 : vector<8x128xf32> to vector<1x8x128xf32>
    tpu.vector_store %arg5[%263, %c0_64, %c0_65], %266 {strides = array<i32>} : memref<8x8x128xf32, #tpu.memory_space<vmem>>, vector<1x8x128xf32>,
    %cst_66 = arith.constant 0.000000e+00 : f32
    %267 = vector.shape_cast %196 : vector<8x1xi1> to vector<8x1xi1>
    %268 = vector.broadcast %267 : vector<8x1xi1> to vector<8x128xi1>
    %269 = vector.broadcast %cst_66 : f32 to vector<8x128xf32>
    %270 = arith.select %268, %258, %269 : vector<8x128xi1>, vector<8x128xf32>
    %271 = arith.index_cast %192 : i32 to index
    %c0_67 = arith.constant 0 : index
    %c0_68 = arith.constant 0 : index
    %272 = vector.load %arg6[%271, %c0_67, %c0_68] : memref<8x8x128xf32, #tpu.memory_space<vmem>>, vector<1x8x128xf32>
    %273 = vector.shape_cast %272 : vector<1x8x128xf32> to vector<8x128xf32>
    %274 = vector.shape_cast %270 : vector<8x128xf32> to vector<1x8x128xf32>
    tpu.vector_store %arg6[%271, %c0_67, %c0_68], %274 {strides = array<i32>} : memref<8x8x128xf32, #tpu.memory_space<vmem>>, vector<1x8x128xf32>,
    %275 = vector.shape_cast %194 : vector<8x1xi1> to vector<8x1xi1>
    %276 = vector.broadcast %275 : vector<8x1xi1> to vector<8x128xi1>
    %277 = arith.select %276, %227, %182 : vector<8x128xi1>, vector<8x128xf32>
    %278 = vector.shape_cast %194 : vector<8x1xi1> to vector<8x1xi1>
    %279 = vector.broadcast %278 : vector<8x1xi1> to vector<8x128xi1>
    %280 = arith.select %279, %225, %185 : vector<8x128xi1>, vector<8x128xf32>
    %281 = vector.shape_cast %196 : vector<8x1xi1> to vector<8x1xi1>
    %282 = vector.broadcast %281 : vector<8x1xi1> to vector<8x128xi1>
    %283 = arith.select %282, %258, %188 : vector<8x128xi1>, vector<8x128xf32>
    %284 = vector.shape_cast %196 : vector<8x1xi1> to vector<8x1xi1>
    %285 = vector.broadcast %284 : vector<8x1xi1> to vector<8x128xi1>
    %286 = arith.select %285, %256, %191 : vector<8x128xi1>, vector<8x128xf32>
    %c3_i32 = arith.constant 3 : i32
    %c7_i32_69 = arith.constant 7 : i32
    %287 = arith.subi %c7_i32_69, %c3_i32 : i32
    %288 = vector.broadcast %c3_i32 : i32 to vector<8x1xi32>
    %289 = arith.cmpi slt, %288, %0 : vector<8x1xi32>
    %290 = vector.broadcast %287 : i32 to vector<8x1xi32>
    %291 = arith.cmpi slt, %290, %0 : vector<8x1xi32>
    %292 = arith.index_cast %c3_i32 : i32 to index
    %c0_70 = arith.constant 0 : index
    %c0_71 = arith.constant 0 : index
    %293 = vector.load %arg1[%292, %c0_70, %c0_71] : memref<8x8x512xf32, #tpu.memory_space<vmem>>, vector<1x8x512xf32>
    %294 = vector.shape_cast %293 : vector<1x8x512xf32> to vector<8x512xf32>
    %c0_72 = arith.constant 0 : index
    %c0_73 = arith.constant 0 : index
    %295 = vector.load %arg3[%c0_72, %c0_73] : memref<128x512xf32, #tpu.memory_space<vmem>>, vector<128x512xf32>
    %cst_74 = arith.constant dense<0.000000e+00> : vector<8x512xf32>
    %296 = tpu.matmul %277, %295, %cst_74 {dimension_numbers = #tpu.dot_dimension_numbers<[1], [0], [0], [1], [0, 0, 1, 1], [], []>} : vector<8x128xf32>, vector<128x512xf32>, vector<8x512xf32> -> vector<8x512xf32>
    %297 = arith.addf %294, %296 : vector<8x512xf32>
    %298 = vector.extract_strided_slice %297 {offsets = [0, 0], sizes = [8, 128], strides = [1, 1]} : vector<8x512xf32> to vector<8x128xf32>
    %299 = arith.negf %298 : vector<8x128xf32>
    %300 = math.exp %299 : vector<8x128xf32>
    %cst_75 = arith.constant 1.000000e+00 : f32
    %301 = vector.broadcast %cst_75 : f32 to vector<8x128xf32>
    %302 = arith.addf %301, %300 : vector<8x128xf32>
    %303 = arith.divf %301, %302 : vector<8x128xf32>
    %304 = vector.extract_strided_slice %297 {offsets = [0, 128], sizes = [8, 128], strides = [1, 1]} : vector<8x512xf32> to vector<8x128xf32>
    %305 = arith.negf %304 : vector<8x128xf32>
    %306 = math.exp %305 : vector<8x128xf32>
    %cst_76 = arith.constant 1.000000e+00 : f32
    %307 = vector.broadcast %cst_76 : f32 to vector<8x128xf32>
    %308 = arith.addf %307, %306 : vector<8x128xf32>
    %309 = arith.divf %307, %308 : vector<8x128xf32>
    %310 = vector.extract_strided_slice %297 {offsets = [0, 256], sizes = [8, 128], strides = [1, 1]} : vector<8x512xf32> to vector<8x128xf32>
    %311 = math.tanh %310 : vector<8x128xf32>
    %312 = vector.extract_strided_slice %297 {offsets = [0, 384], sizes = [8, 128], strides = [1, 1]} : vector<8x512xf32> to vector<8x128xf32>
    %313 = arith.negf %312 : vector<8x128xf32>
    %314 = math.exp %313 : vector<8x128xf32>
    %cst_77 = arith.constant 1.000000e+00 : f32
    %315 = vector.broadcast %cst_77 : f32 to vector<8x128xf32>
    %316 = arith.addf %315, %314 : vector<8x128xf32>
    %317 = arith.divf %315, %316 : vector<8x128xf32>
    %318 = arith.mulf %309, %280 : vector<8x128xf32>
    %319 = arith.mulf %303, %311 : vector<8x128xf32>
    %320 = arith.addf %318, %319 : vector<8x128xf32>
    %321 = math.tanh %320 : vector<8x128xf32>
    %322 = arith.mulf %317, %321 : vector<8x128xf32>
    %323 = arith.index_cast %287 : i32 to index
    %c0_78 = arith.constant 0 : index
    %c0_79 = arith.constant 0 : index
    %324 = vector.load %arg2[%323, %c0_78, %c0_79] : memref<8x8x512xf32, #tpu.memory_space<vmem>>, vector<1x8x512xf32>
    %325 = vector.shape_cast %324 : vector<1x8x512xf32> to vector<8x512xf32>
    %c0_80 = arith.constant 0 : index
    %c0_81 = arith.constant 0 : index
    %326 = vector.load %arg4[%c0_80, %c0_81] : memref<128x512xf32, #tpu.memory_space<vmem>>, vector<128x512xf32>
    %cst_82 = arith.constant dense<0.000000e+00> : vector<8x512xf32>
    %327 = tpu.matmul %283, %326, %cst_82 {dimension_numbers = #tpu.dot_dimension_numbers<[1], [0], [0], [1], [0, 0, 1, 1], [], []>} : vector<8x128xf32>, vector<128x512xf32>, vector<8x512xf32> -> vector<8x512xf32>
    %328 = arith.addf %325, %327 : vector<8x512xf32>
    %329 = vector.extract_strided_slice %328 {offsets = [0, 0], sizes = [8, 128], strides = [1, 1]} : vector<8x512xf32> to vector<8x128xf32>
    %330 = arith.negf %329 : vector<8x128xf32>
    %331 = math.exp %330 : vector<8x128xf32>
    %cst_83 = arith.constant 1.000000e+00 : f32
    %332 = vector.broadcast %cst_83 : f32 to vector<8x128xf32>
    %333 = arith.addf %332, %331 : vector<8x128xf32>
    %334 = arith.divf %332, %333 : vector<8x128xf32>
    %335 = vector.extract_strided_slice %328 {offsets = [0, 128], sizes = [8, 128], strides = [1, 1]} : vector<8x512xf32> to vector<8x128xf32>
    %336 = arith.negf %335 : vector<8x128xf32>
    %337 = math.exp %336 : vector<8x128xf32>
    %cst_84 = arith.constant 1.000000e+00 : f32
    %338 = vector.broadcast %cst_84 : f32 to vector<8x128xf32>
    %339 = arith.addf %338, %337 : vector<8x128xf32>
    %340 = arith.divf %338, %339 : vector<8x128xf32>
    %341 = vector.extract_strided_slice %328 {offsets = [0, 256], sizes = [8, 128], strides = [1, 1]} : vector<8x512xf32> to vector<8x128xf32>
    %342 = math.tanh %341 : vector<8x128xf32>
    %343 = vector.extract_strided_slice %328 {offsets = [0, 384], sizes = [8, 128], strides = [1, 1]} : vector<8x512xf32> to vector<8x128xf32>
    %344 = arith.negf %343 : vector<8x128xf32>
    %345 = math.exp %344 : vector<8x128xf32>
    %cst_85 = arith.constant 1.000000e+00 : f32
    %346 = vector.broadcast %cst_85 : f32 to vector<8x128xf32>
    %347 = arith.addf %346, %345 : vector<8x128xf32>
    %348 = arith.divf %346, %347 : vector<8x128xf32>
    %349 = arith.mulf %340, %286 : vector<8x128xf32>
    %350 = arith.mulf %334, %342 : vector<8x128xf32>
    %351 = arith.addf %349, %350 : vector<8x128xf32>
    %352 = math.tanh %351 : vector<8x128xf32>
    %353 = arith.mulf %348, %352 : vector<8x128xf32>
    %cst_86 = arith.constant 0.000000e+00 : f32
    %354 = vector.shape_cast %289 : vector<8x1xi1> to vector<8x1xi1>
    %355 = vector.broadcast %354 : vector<8x1xi1> to vector<8x128xi1>
    %356 = vector.broadcast %cst_86 : f32 to vector<8x128xf32>
    %357 = arith.select %355, %322, %356 : vector<8x128xi1>, vector<8x128xf32>
    %358 = arith.index_cast %c3_i32 : i32 to index
    %c0_87 = arith.constant 0 : index
    %c0_88 = arith.constant 0 : index
    %359 = vector.load %arg5[%358, %c0_87, %c0_88] : memref<8x8x128xf32, #tpu.memory_space<vmem>>, vector<1x8x128xf32>
    %360 = vector.shape_cast %359 : vector<1x8x128xf32> to vector<8x128xf32>
    %361 = vector.shape_cast %357 : vector<8x128xf32> to vector<1x8x128xf32>
    tpu.vector_store %arg5[%358, %c0_87, %c0_88], %361 {strides = array<i32>} : memref<8x8x128xf32, #tpu.memory_space<vmem>>, vector<1x8x128xf32>,
    %cst_89 = arith.constant 0.000000e+00 : f32
    %362 = vector.shape_cast %291 : vector<8x1xi1> to vector<8x1xi1>
    %363 = vector.broadcast %362 : vector<8x1xi1> to vector<8x128xi1>
    %364 = vector.broadcast %cst_89 : f32 to vector<8x128xf32>
    %365 = arith.select %363, %353, %364 : vector<8x128xi1>, vector<8x128xf32>
    %366 = arith.index_cast %287 : i32 to index
    %c0_90 = arith.constant 0 : index
    %c0_91 = arith.constant 0 : index
    %367 = vector.load %arg6[%366, %c0_90, %c0_91] : memref<8x8x128xf32, #tpu.memory_space<vmem>>, vector<1x8x128xf32>
    %368 = vector.shape_cast %367 : vector<1x8x128xf32> to vector<8x128xf32>
    %369 = vector.shape_cast %365 : vector<8x128xf32> to vector<1x8x128xf32>
    tpu.vector_store %arg6[%366, %c0_90, %c0_91], %369 {strides = array<i32>} : memref<8x8x128xf32, #tpu.memory_space<vmem>>, vector<1x8x128xf32>,
    %370 = vector.shape_cast %289 : vector<8x1xi1> to vector<8x1xi1>
    %371 = vector.broadcast %370 : vector<8x1xi1> to vector<8x128xi1>
    %372 = arith.select %371, %322, %277 : vector<8x128xi1>, vector<8x128xf32>
    %373 = vector.shape_cast %289 : vector<8x1xi1> to vector<8x1xi1>
    %374 = vector.broadcast %373 : vector<8x1xi1> to vector<8x128xi1>
    %375 = arith.select %374, %320, %280 : vector<8x128xi1>, vector<8x128xf32>
    %376 = vector.shape_cast %291 : vector<8x1xi1> to vector<8x1xi1>
    %377 = vector.broadcast %376 : vector<8x1xi1> to vector<8x128xi1>
    %378 = arith.select %377, %353, %283 : vector<8x128xi1>, vector<8x128xf32>
    %379 = vector.shape_cast %291 : vector<8x1xi1> to vector<8x1xi1>
    %380 = vector.broadcast %379 : vector<8x1xi1> to vector<8x128xi1>
    %381 = arith.select %380, %351, %286 : vector<8x128xi1>, vector<8x128xf32>
    %c4_i32 = arith.constant 4 : i32
    %c7_i32_92 = arith.constant 7 : i32
    %382 = arith.subi %c7_i32_92, %c4_i32 : i32
    %383 = vector.broadcast %c4_i32 : i32 to vector<8x1xi32>
    %384 = arith.cmpi slt, %383, %0 : vector<8x1xi32>
    %385 = vector.broadcast %382 : i32 to vector<8x1xi32>
    %386 = arith.cmpi slt, %385, %0 : vector<8x1xi32>
    %387 = arith.index_cast %c4_i32 : i32 to index
    %c0_93 = arith.constant 0 : index
    %c0_94 = arith.constant 0 : index
    %388 = vector.load %arg1[%387, %c0_93, %c0_94] : memref<8x8x512xf32, #tpu.memory_space<vmem>>, vector<1x8x512xf32>
    %389 = vector.shape_cast %388 : vector<1x8x512xf32> to vector<8x512xf32>
    %c0_95 = arith.constant 0 : index
    %c0_96 = arith.constant 0 : index
    %390 = vector.load %arg3[%c0_95, %c0_96] : memref<128x512xf32, #tpu.memory_space<vmem>>, vector<128x512xf32>
    %cst_97 = arith.constant dense<0.000000e+00> : vector<8x512xf32>
    %391 = tpu.matmul %372, %390, %cst_97 {dimension_numbers = #tpu.dot_dimension_numbers<[1], [0], [0], [1], [0, 0, 1, 1], [], []>} : vector<8x128xf32>, vector<128x512xf32>, vector<8x512xf32> -> vector<8x512xf32>
    %392 = arith.addf %389, %391 : vector<8x512xf32>
    %393 = vector.extract_strided_slice %392 {offsets = [0, 0], sizes = [8, 128], strides = [1, 1]} : vector<8x512xf32> to vector<8x128xf32>
    %394 = arith.negf %393 : vector<8x128xf32>
    %395 = math.exp %394 : vector<8x128xf32>
    %cst_98 = arith.constant 1.000000e+00 : f32
    %396 = vector.broadcast %cst_98 : f32 to vector<8x128xf32>
    %397 = arith.addf %396, %395 : vector<8x128xf32>
    %398 = arith.divf %396, %397 : vector<8x128xf32>
    %399 = vector.extract_strided_slice %392 {offsets = [0, 128], sizes = [8, 128], strides = [1, 1]} : vector<8x512xf32> to vector<8x128xf32>
    %400 = arith.negf %399 : vector<8x128xf32>
    %401 = math.exp %400 : vector<8x128xf32>
    %cst_99 = arith.constant 1.000000e+00 : f32
    %402 = vector.broadcast %cst_99 : f32 to vector<8x128xf32>
    %403 = arith.addf %402, %401 : vector<8x128xf32>
    %404 = arith.divf %402, %403 : vector<8x128xf32>
    %405 = vector.extract_strided_slice %392 {offsets = [0, 256], sizes = [8, 128], strides = [1, 1]} : vector<8x512xf32> to vector<8x128xf32>
    %406 = math.tanh %405 : vector<8x128xf32>
    %407 = vector.extract_strided_slice %392 {offsets = [0, 384], sizes = [8, 128], strides = [1, 1]} : vector<8x512xf32> to vector<8x128xf32>
    %408 = arith.negf %407 : vector<8x128xf32>
    %409 = math.exp %408 : vector<8x128xf32>
    %cst_100 = arith.constant 1.000000e+00 : f32
    %410 = vector.broadcast %cst_100 : f32 to vector<8x128xf32>
    %411 = arith.addf %410, %409 : vector<8x128xf32>
    %412 = arith.divf %410, %411 : vector<8x128xf32>
    %413 = arith.mulf %404, %375 : vector<8x128xf32>
    %414 = arith.mulf %398, %406 : vector<8x128xf32>
    %415 = arith.addf %413, %414 : vector<8x128xf32>
    %416 = math.tanh %415 : vector<8x128xf32>
    %417 = arith.mulf %412, %416 : vector<8x128xf32>
    %418 = arith.index_cast %382 : i32 to index
    %c0_101 = arith.constant 0 : index
    %c0_102 = arith.constant 0 : index
    %419 = vector.load %arg2[%418, %c0_101, %c0_102] : memref<8x8x512xf32, #tpu.memory_space<vmem>>, vector<1x8x512xf32>
    %420 = vector.shape_cast %419 : vector<1x8x512xf32> to vector<8x512xf32>
    %c0_103 = arith.constant 0 : index
    %c0_104 = arith.constant 0 : index
    %421 = vector.load %arg4[%c0_103, %c0_104] : memref<128x512xf32, #tpu.memory_space<vmem>>, vector<128x512xf32>
    %cst_105 = arith.constant dense<0.000000e+00> : vector<8x512xf32>
    %422 = tpu.matmul %378, %421, %cst_105 {dimension_numbers = #tpu.dot_dimension_numbers<[1], [0], [0], [1], [0, 0, 1, 1], [], []>} : vector<8x128xf32>, vector<128x512xf32>, vector<8x512xf32> -> vector<8x512xf32>
    %423 = arith.addf %420, %422 : vector<8x512xf32>
    %424 = vector.extract_strided_slice %423 {offsets = [0, 0], sizes = [8, 128], strides = [1, 1]} : vector<8x512xf32> to vector<8x128xf32>
    %425 = arith.negf %424 : vector<8x128xf32>
    %426 = math.exp %425 : vector<8x128xf32>
    %cst_106 = arith.constant 1.000000e+00 : f32
    %427 = vector.broadcast %cst_106 : f32 to vector<8x128xf32>
    %428 = arith.addf %427, %426 : vector<8x128xf32>
    %429 = arith.divf %427, %428 : vector<8x128xf32>
    %430 = vector.extract_strided_slice %423 {offsets = [0, 128], sizes = [8, 128], strides = [1, 1]} : vector<8x512xf32> to vector<8x128xf32>
    %431 = arith.negf %430 : vector<8x128xf32>
    %432 = math.exp %431 : vector<8x128xf32>
    %cst_107 = arith.constant 1.000000e+00 : f32
    %433 = vector.broadcast %cst_107 : f32 to vector<8x128xf32>
    %434 = arith.addf %433, %432 : vector<8x128xf32>
    %435 = arith.divf %433, %434 : vector<8x128xf32>
    %436 = vector.extract_strided_slice %423 {offsets = [0, 256], sizes = [8, 128], strides = [1, 1]} : vector<8x512xf32> to vector<8x128xf32>
    %437 = math.tanh %436 : vector<8x128xf32>
    %438 = vector.extract_strided_slice %423 {offsets = [0, 384], sizes = [8, 128], strides = [1, 1]} : vector<8x512xf32> to vector<8x128xf32>
    %439 = arith.negf %438 : vector<8x128xf32>
    %440 = math.exp %439 : vector<8x128xf32>
    %cst_108 = arith.constant 1.000000e+00 : f32
    %441 = vector.broadcast %cst_108 : f32 to vector<8x128xf32>
    %442 = arith.addf %441, %440 : vector<8x128xf32>
    %443 = arith.divf %441, %442 : vector<8x128xf32>
    %444 = arith.mulf %435, %381 : vector<8x128xf32>
    %445 = arith.mulf %429, %437 : vector<8x128xf32>
    %446 = arith.addf %444, %445 : vector<8x128xf32>
    %447 = math.tanh %446 : vector<8x128xf32>
    %448 = arith.mulf %443, %447 : vector<8x128xf32>
    %cst_109 = arith.constant 0.000000e+00 : f32
    %449 = vector.shape_cast %384 : vector<8x1xi1> to vector<8x1xi1>
    %450 = vector.broadcast %449 : vector<8x1xi1> to vector<8x128xi1>
    %451 = vector.broadcast %cst_109 : f32 to vector<8x128xf32>
    %452 = arith.select %450, %417, %451 : vector<8x128xi1>, vector<8x128xf32>
    %453 = arith.index_cast %c4_i32 : i32 to index
    %c0_110 = arith.constant 0 : index
    %c0_111 = arith.constant 0 : index
    %454 = vector.load %arg5[%453, %c0_110, %c0_111] : memref<8x8x128xf32, #tpu.memory_space<vmem>>, vector<1x8x128xf32>
    %455 = vector.shape_cast %454 : vector<1x8x128xf32> to vector<8x128xf32>
    %456 = vector.shape_cast %452 : vector<8x128xf32> to vector<1x8x128xf32>
    tpu.vector_store %arg5[%453, %c0_110, %c0_111], %456 {strides = array<i32>} : memref<8x8x128xf32, #tpu.memory_space<vmem>>, vector<1x8x128xf32>,
    %cst_112 = arith.constant 0.000000e+00 : f32
    %457 = vector.shape_cast %386 : vector<8x1xi1> to vector<8x1xi1>
    %458 = vector.broadcast %457 : vector<8x1xi1> to vector<8x128xi1>
    %459 = vector.broadcast %cst_112 : f32 to vector<8x128xf32>
    %460 = arith.select %458, %448, %459 : vector<8x128xi1>, vector<8x128xf32>
    %461 = arith.index_cast %382 : i32 to index
    %c0_113 = arith.constant 0 : index
    %c0_114 = arith.constant 0 : index
    %462 = vector.load %arg6[%461, %c0_113, %c0_114] : memref<8x8x128xf32, #tpu.memory_space<vmem>>, vector<1x8x128xf32>
    %463 = vector.shape_cast %462 : vector<1x8x128xf32> to vector<8x128xf32>
    %464 = vector.shape_cast %460 : vector<8x128xf32> to vector<1x8x128xf32>
    tpu.vector_store %arg6[%461, %c0_113, %c0_114], %464 {strides = array<i32>} : memref<8x8x128xf32, #tpu.memory_space<vmem>>, vector<1x8x128xf32>,
    %465 = vector.shape_cast %384 : vector<8x1xi1> to vector<8x1xi1>
    %466 = vector.broadcast %465 : vector<8x1xi1> to vector<8x128xi1>
    %467 = arith.select %466, %417, %372 : vector<8x128xi1>, vector<8x128xf32>
    %468 = vector.shape_cast %384 : vector<8x1xi1> to vector<8x1xi1>
    %469 = vector.broadcast %468 : vector<8x1xi1> to vector<8x128xi1>
    %470 = arith.select %469, %415, %375 : vector<8x128xi1>, vector<8x128xf32>
    %471 = vector.shape_cast %386 : vector<8x1xi1> to vector<8x1xi1>
    %472 = vector.broadcast %471 : vector<8x1xi1> to vector<8x128xi1>
    %473 = arith.select %472, %448, %378 : vector<8x128xi1>, vector<8x128xf32>
    %474 = vector.shape_cast %386 : vector<8x1xi1> to vector<8x1xi1>
    %475 = vector.broadcast %474 : vector<8x1xi1> to vector<8x128xi1>
    %476 = arith.select %475, %446, %381 : vector<8x128xi1>, vector<8x128xf32>
    %c5_i32 = arith.constant 5 : i32
    %c7_i32_115 = arith.constant 7 : i32
    %477 = arith.subi %c7_i32_115, %c5_i32 : i32
    %478 = vector.broadcast %c5_i32 : i32 to vector<8x1xi32>
    %479 = arith.cmpi slt, %478, %0 : vector<8x1xi32>
    %480 = vector.broadcast %477 : i32 to vector<8x1xi32>
    %481 = arith.cmpi slt, %480, %0 : vector<8x1xi32>
    %482 = arith.index_cast %c5_i32 : i32 to index
    %c0_116 = arith.constant 0 : index
    %c0_117 = arith.constant 0 : index
    %483 = vector.load %arg1[%482, %c0_116, %c0_117] : memref<8x8x512xf32, #tpu.memory_space<vmem>>, vector<1x8x512xf32>
    %484 = vector.shape_cast %483 : vector<1x8x512xf32> to vector<8x512xf32>
    %c0_118 = arith.constant 0 : index
    %c0_119 = arith.constant 0 : index
    %485 = vector.load %arg3[%c0_118, %c0_119] : memref<128x512xf32, #tpu.memory_space<vmem>>, vector<128x512xf32>
    %cst_120 = arith.constant dense<0.000000e+00> : vector<8x512xf32>
    %486 = tpu.matmul %467, %485, %cst_120 {dimension_numbers = #tpu.dot_dimension_numbers<[1], [0], [0], [1], [0, 0, 1, 1], [], []>} : vector<8x128xf32>, vector<128x512xf32>, vector<8x512xf32> -> vector<8x512xf32>
    %487 = arith.addf %484, %486 : vector<8x512xf32>
    %488 = vector.extract_strided_slice %487 {offsets = [0, 0], sizes = [8, 128], strides = [1, 1]} : vector<8x512xf32> to vector<8x128xf32>
    %489 = arith.negf %488 : vector<8x128xf32>
    %490 = math.exp %489 : vector<8x128xf32>
    %cst_121 = arith.constant 1.000000e+00 : f32
    %491 = vector.broadcast %cst_121 : f32 to vector<8x128xf32>
    %492 = arith.addf %491, %490 : vector<8x128xf32>
    %493 = arith.divf %491, %492 : vector<8x128xf32>
    %494 = vector.extract_strided_slice %487 {offsets = [0, 128], sizes = [8, 128], strides = [1, 1]} : vector<8x512xf32> to vector<8x128xf32>
    %495 = arith.negf %494 : vector<8x128xf32>
    %496 = math.exp %495 : vector<8x128xf32>
    %cst_122 = arith.constant 1.000000e+00 : f32
    %497 = vector.broadcast %cst_122 : f32 to vector<8x128xf32>
    %498 = arith.addf %497, %496 : vector<8x128xf32>
    %499 = arith.divf %497, %498 : vector<8x128xf32>
    %500 = vector.extract_strided_slice %487 {offsets = [0, 256], sizes = [8, 128], strides = [1, 1]} : vector<8x512xf32> to vector<8x128xf32>
    %501 = math.tanh %500 : vector<8x128xf32>
    %502 = vector.extract_strided_slice %487 {offsets = [0, 384], sizes = [8, 128], strides = [1, 1]} : vector<8x512xf32> to vector<8x128xf32>
    %503 = arith.negf %502 : vector<8x128xf32>
    %504 = math.exp %503 : vector<8x128xf32>
    %cst_123 = arith.constant 1.000000e+00 : f32
    %505 = vector.broadcast %cst_123 : f32 to vector<8x128xf32>
    %506 = arith.addf %505, %504 : vector<8x128xf32>
    %507 = arith.divf %505, %506 : vector<8x128xf32>
    %508 = arith.mulf %499, %470 : vector<8x128xf32>
    %509 = arith.mulf %493, %501 : vector<8x128xf32>
    %510 = arith.addf %508, %509 : vector<8x128xf32>
    %511 = math.tanh %510 : vector<8x128xf32>
    %512 = arith.mulf %507, %511 : vector<8x128xf32>
    %513 = arith.index_cast %477 : i32 to index
    %c0_124 = arith.constant 0 : index
    %c0_125 = arith.constant 0 : index
    %514 = vector.load %arg2[%513, %c0_124, %c0_125] : memref<8x8x512xf32, #tpu.memory_space<vmem>>, vector<1x8x512xf32>
    %515 = vector.shape_cast %514 : vector<1x8x512xf32> to vector<8x512xf32>
    %c0_126 = arith.constant 0 : index
    %c0_127 = arith.constant 0 : index
    %516 = vector.load %arg4[%c0_126, %c0_127] : memref<128x512xf32, #tpu.memory_space<vmem>>, vector<128x512xf32>
    %cst_128 = arith.constant dense<0.000000e+00> : vector<8x512xf32>
    %517 = tpu.matmul %473, %516, %cst_128 {dimension_numbers = #tpu.dot_dimension_numbers<[1], [0], [0], [1], [0, 0, 1, 1], [], []>} : vector<8x128xf32>, vector<128x512xf32>, vector<8x512xf32> -> vector<8x512xf32>
    %518 = arith.addf %515, %517 : vector<8x512xf32>
    %519 = vector.extract_strided_slice %518 {offsets = [0, 0], sizes = [8, 128], strides = [1, 1]} : vector<8x512xf32> to vector<8x128xf32>
    %520 = arith.negf %519 : vector<8x128xf32>
    %521 = math.exp %520 : vector<8x128xf32>
    %cst_129 = arith.constant 1.000000e+00 : f32
    %522 = vector.broadcast %cst_129 : f32 to vector<8x128xf32>
    %523 = arith.addf %522, %521 : vector<8x128xf32>
    %524 = arith.divf %522, %523 : vector<8x128xf32>
    %525 = vector.extract_strided_slice %518 {offsets = [0, 128], sizes = [8, 128], strides = [1, 1]} : vector<8x512xf32> to vector<8x128xf32>
    %526 = arith.negf %525 : vector<8x128xf32>
    %527 = math.exp %526 : vector<8x128xf32>
    %cst_130 = arith.constant 1.000000e+00 : f32
    %528 = vector.broadcast %cst_130 : f32 to vector<8x128xf32>
    %529 = arith.addf %528, %527 : vector<8x128xf32>
    %530 = arith.divf %528, %529 : vector<8x128xf32>
    %531 = vector.extract_strided_slice %518 {offsets = [0, 256], sizes = [8, 128], strides = [1, 1]} : vector<8x512xf32> to vector<8x128xf32>
    %532 = math.tanh %531 : vector<8x128xf32>
    %533 = vector.extract_strided_slice %518 {offsets = [0, 384], sizes = [8, 128], strides = [1, 1]} : vector<8x512xf32> to vector<8x128xf32>
    %534 = arith.negf %533 : vector<8x128xf32>
    %535 = math.exp %534 : vector<8x128xf32>
    %cst_131 = arith.constant 1.000000e+00 : f32
    %536 = vector.broadcast %cst_131 : f32 to vector<8x128xf32>
    %537 = arith.addf %536, %535 : vector<8x128xf32>
    %538 = arith.divf %536, %537 : vector<8x128xf32>
    %539 = arith.mulf %530, %476 : vector<8x128xf32>
    %540 = arith.mulf %524, %532 : vector<8x128xf32>
    %541 = arith.addf %539, %540 : vector<8x128xf32>
    %542 = math.tanh %541 : vector<8x128xf32>
    %543 = arith.mulf %538, %542 : vector<8x128xf32>
    %cst_132 = arith.constant 0.000000e+00 : f32
    %544 = vector.shape_cast %479 : vector<8x1xi1> to vector<8x1xi1>
    %545 = vector.broadcast %544 : vector<8x1xi1> to vector<8x128xi1>
    %546 = vector.broadcast %cst_132 : f32 to vector<8x128xf32>
    %547 = arith.select %545, %512, %546 : vector<8x128xi1>, vector<8x128xf32>
    %548 = arith.index_cast %c5_i32 : i32 to index
    %c0_133 = arith.constant 0 : index
    %c0_134 = arith.constant 0 : index
    %549 = vector.load %arg5[%548, %c0_133, %c0_134] : memref<8x8x128xf32, #tpu.memory_space<vmem>>, vector<1x8x128xf32>
    %550 = vector.shape_cast %549 : vector<1x8x128xf32> to vector<8x128xf32>
    %551 = vector.shape_cast %547 : vector<8x128xf32> to vector<1x8x128xf32>
    tpu.vector_store %arg5[%548, %c0_133, %c0_134], %551 {strides = array<i32>} : memref<8x8x128xf32, #tpu.memory_space<vmem>>, vector<1x8x128xf32>,
    %cst_135 = arith.constant 0.000000e+00 : f32
    %552 = vector.shape_cast %481 : vector<8x1xi1> to vector<8x1xi1>
    %553 = vector.broadcast %552 : vector<8x1xi1> to vector<8x128xi1>
    %554 = vector.broadcast %cst_135 : f32 to vector<8x128xf32>
    %555 = arith.select %553, %543, %554 : vector<8x128xi1>, vector<8x128xf32>
    %556 = arith.index_cast %477 : i32 to index
    %c0_136 = arith.constant 0 : index
    %c0_137 = arith.constant 0 : index
    %557 = vector.load %arg6[%556, %c0_136, %c0_137] : memref<8x8x128xf32, #tpu.memory_space<vmem>>, vector<1x8x128xf32>
    %558 = vector.shape_cast %557 : vector<1x8x128xf32> to vector<8x128xf32>
    %559 = vector.shape_cast %555 : vector<8x128xf32> to vector<1x8x128xf32>
    tpu.vector_store %arg6[%556, %c0_136, %c0_137], %559 {strides = array<i32>} : memref<8x8x128xf32, #tpu.memory_space<vmem>>, vector<1x8x128xf32>,
    %560 = vector.shape_cast %479 : vector<8x1xi1> to vector<8x1xi1>
    %561 = vector.broadcast %560 : vector<8x1xi1> to vector<8x128xi1>
    %562 = arith.select %561, %512, %467 : vector<8x128xi1>, vector<8x128xf32>
    %563 = vector.shape_cast %479 : vector<8x1xi1> to vector<8x1xi1>
    %564 = vector.broadcast %563 : vector<8x1xi1> to vector<8x128xi1>
    %565 = arith.select %564, %510, %470 : vector<8x128xi1>, vector<8x128xf32>
    %566 = vector.shape_cast %481 : vector<8x1xi1> to vector<8x1xi1>
    %567 = vector.broadcast %566 : vector<8x1xi1> to vector<8x128xi1>
    %568 = arith.select %567, %543, %473 : vector<8x128xi1>, vector<8x128xf32>
    %569 = vector.shape_cast %481 : vector<8x1xi1> to vector<8x1xi1>
    %570 = vector.broadcast %569 : vector<8x1xi1> to vector<8x128xi1>
    %571 = arith.select %570, %541, %476 : vector<8x128xi1>, vector<8x128xf32>
    %c6_i32 = arith.constant 6 : i32
    %c7_i32_138 = arith.constant 7 : i32
    %572 = arith.subi %c7_i32_138, %c6_i32 : i32
    %573 = vector.broadcast %c6_i32 : i32 to vector<8x1xi32>
    %574 = arith.cmpi slt, %573, %0 : vector<8x1xi32>
    %575 = vector.broadcast %572 : i32 to vector<8x1xi32>
    %576 = arith.cmpi slt, %575, %0 : vector<8x1xi32>
    %577 = arith.index_cast %c6_i32 : i32 to index
    %c0_139 = arith.constant 0 : index
    %c0_140 = arith.constant 0 : index
    %578 = vector.load %arg1[%577, %c0_139, %c0_140] : memref<8x8x512xf32, #tpu.memory_space<vmem>>, vector<1x8x512xf32>
    %579 = vector.shape_cast %578 : vector<1x8x512xf32> to vector<8x512xf32>
    %c0_141 = arith.constant 0 : index
    %c0_142 = arith.constant 0 : index
    %580 = vector.load %arg3[%c0_141, %c0_142] : memref<128x512xf32, #tpu.memory_space<vmem>>, vector<128x512xf32>
    %cst_143 = arith.constant dense<0.000000e+00> : vector<8x512xf32>
    %581 = tpu.matmul %562, %580, %cst_143 {dimension_numbers = #tpu.dot_dimension_numbers<[1], [0], [0], [1], [0, 0, 1, 1], [], []>} : vector<8x128xf32>, vector<128x512xf32>, vector<8x512xf32> -> vector<8x512xf32>
    %582 = arith.addf %579, %581 : vector<8x512xf32>
    %583 = vector.extract_strided_slice %582 {offsets = [0, 0], sizes = [8, 128], strides = [1, 1]} : vector<8x512xf32> to vector<8x128xf32>
    %584 = arith.negf %583 : vector<8x128xf32>
    %585 = math.exp %584 : vector<8x128xf32>
    %cst_144 = arith.constant 1.000000e+00 : f32
    %586 = vector.broadcast %cst_144 : f32 to vector<8x128xf32>
    %587 = arith.addf %586, %585 : vector<8x128xf32>
    %588 = arith.divf %586, %587 : vector<8x128xf32>
    %589 = vector.extract_strided_slice %582 {offsets = [0, 128], sizes = [8, 128], strides = [1, 1]} : vector<8x512xf32> to vector<8x128xf32>
    %590 = arith.negf %589 : vector<8x128xf32>
    %591 = math.exp %590 : vector<8x128xf32>
    %cst_145 = arith.constant 1.000000e+00 : f32
    %592 = vector.broadcast %cst_145 : f32 to vector<8x128xf32>
    %593 = arith.addf %592, %591 : vector<8x128xf32>
    %594 = arith.divf %592, %593 : vector<8x128xf32>
    %595 = vector.extract_strided_slice %582 {offsets = [0, 256], sizes = [8, 128], strides = [1, 1]} : vector<8x512xf32> to vector<8x128xf32>
    %596 = math.tanh %595 : vector<8x128xf32>
    %597 = vector.extract_strided_slice %582 {offsets = [0, 384], sizes = [8, 128], strides = [1, 1]} : vector<8x512xf32> to vector<8x128xf32>
    %598 = arith.negf %597 : vector<8x128xf32>
    %599 = math.exp %598 : vector<8x128xf32>
    %cst_146 = arith.constant 1.000000e+00 : f32
    %600 = vector.broadcast %cst_146 : f32 to vector<8x128xf32>
    %601 = arith.addf %600, %599 : vector<8x128xf32>
    %602 = arith.divf %600, %601 : vector<8x128xf32>
    %603 = arith.mulf %594, %565 : vector<8x128xf32>
    %604 = arith.mulf %588, %596 : vector<8x128xf32>
    %605 = arith.addf %603, %604 : vector<8x128xf32>
    %606 = math.tanh %605 : vector<8x128xf32>
    %607 = arith.mulf %602, %606 : vector<8x128xf32>
    %608 = arith.index_cast %572 : i32 to index
    %c0_147 = arith.constant 0 : index
    %c0_148 = arith.constant 0 : index
    %609 = vector.load %arg2[%608, %c0_147, %c0_148] : memref<8x8x512xf32, #tpu.memory_space<vmem>>, vector<1x8x512xf32>
    %610 = vector.shape_cast %609 : vector<1x8x512xf32> to vector<8x512xf32>
    %c0_149 = arith.constant 0 : index
    %c0_150 = arith.constant 0 : index
    %611 = vector.load %arg4[%c0_149, %c0_150] : memref<128x512xf32, #tpu.memory_space<vmem>>, vector<128x512xf32>
    %cst_151 = arith.constant dense<0.000000e+00> : vector<8x512xf32>
    %612 = tpu.matmul %568, %611, %cst_151 {dimension_numbers = #tpu.dot_dimension_numbers<[1], [0], [0], [1], [0, 0, 1, 1], [], []>} : vector<8x128xf32>, vector<128x512xf32>, vector<8x512xf32> -> vector<8x512xf32>
    %613 = arith.addf %610, %612 : vector<8x512xf32>
    %614 = vector.extract_strided_slice %613 {offsets = [0, 0], sizes = [8, 128], strides = [1, 1]} : vector<8x512xf32> to vector<8x128xf32>
    %615 = arith.negf %614 : vector<8x128xf32>
    %616 = math.exp %615 : vector<8x128xf32>
    %cst_152 = arith.constant 1.000000e+00 : f32
    %617 = vector.broadcast %cst_152 : f32 to vector<8x128xf32>
    %618 = arith.addf %617, %616 : vector<8x128xf32>
    %619 = arith.divf %617, %618 : vector<8x128xf32>
    %620 = vector.extract_strided_slice %613 {offsets = [0, 128], sizes = [8, 128], strides = [1, 1]} : vector<8x512xf32> to vector<8x128xf32>
    %621 = arith.negf %620 : vector<8x128xf32>
    %622 = math.exp %621 : vector<8x128xf32>
    %cst_153 = arith.constant 1.000000e+00 : f32
    %623 = vector.broadcast %cst_153 : f32 to vector<8x128xf32>
    %624 = arith.addf %623, %622 : vector<8x128xf32>
    %625 = arith.divf %623, %624 : vector<8x128xf32>
    %626 = vector.extract_strided_slice %613 {offsets = [0, 256], sizes = [8, 128], strides = [1, 1]} : vector<8x512xf32> to vector<8x128xf32>
    %627 = math.tanh %626 : vector<8x128xf32>
    %628 = vector.extract_strided_slice %613 {offsets = [0, 384], sizes = [8, 128], strides = [1, 1]} : vector<8x512xf32> to vector<8x128xf32>
    %629 = arith.negf %628 : vector<8x128xf32>
    %630 = math.exp %629 : vector<8x128xf32>
    %cst_154 = arith.constant 1.000000e+00 : f32
    %631 = vector.broadcast %cst_154 : f32 to vector<8x128xf32>
    %632 = arith.addf %631, %630 : vector<8x128xf32>
    %633 = arith.divf %631, %632 : vector<8x128xf32>
    %634 = arith.mulf %625, %571 : vector<8x128xf32>
    %635 = arith.mulf %619, %627 : vector<8x128xf32>
    %636 = arith.addf %634, %635 : vector<8x128xf32>
    %637 = math.tanh %636 : vector<8x128xf32>
    %638 = arith.mulf %633, %637 : vector<8x128xf32>
    %cst_155 = arith.constant 0.000000e+00 : f32
    %639 = vector.shape_cast %574 : vector<8x1xi1> to vector<8x1xi1>
    %640 = vector.broadcast %639 : vector<8x1xi1> to vector<8x128xi1>
    %641 = vector.broadcast %cst_155 : f32 to vector<8x128xf32>
    %642 = arith.select %640, %607, %641 : vector<8x128xi1>, vector<8x128xf32>
    %643 = arith.index_cast %c6_i32 : i32 to index
    %c0_156 = arith.constant 0 : index
    %c0_157 = arith.constant 0 : index
    %644 = vector.load %arg5[%643, %c0_156, %c0_157] : memref<8x8x128xf32, #tpu.memory_space<vmem>>, vector<1x8x128xf32>
    %645 = vector.shape_cast %644 : vector<1x8x128xf32> to vector<8x128xf32>
    %646 = vector.shape_cast %642 : vector<8x128xf32> to vector<1x8x128xf32>
    tpu.vector_store %arg5[%643, %c0_156, %c0_157], %646 {strides = array<i32>} : memref<8x8x128xf32, #tpu.memory_space<vmem>>, vector<1x8x128xf32>,
    %cst_158 = arith.constant 0.000000e+00 : f32
    %647 = vector.shape_cast %576 : vector<8x1xi1> to vector<8x1xi1>
    %648 = vector.broadcast %647 : vector<8x1xi1> to vector<8x128xi1>
    %649 = vector.broadcast %cst_158 : f32 to vector<8x128xf32>
    %650 = arith.select %648, %638, %649 : vector<8x128xi1>, vector<8x128xf32>
    %651 = arith.index_cast %572 : i32 to index
    %c0_159 = arith.constant 0 : index
    %c0_160 = arith.constant 0 : index
    %652 = vector.load %arg6[%651, %c0_159, %c0_160] : memref<8x8x128xf32, #tpu.memory_space<vmem>>, vector<1x8x128xf32>
    %653 = vector.shape_cast %652 : vector<1x8x128xf32> to vector<8x128xf32>
    %654 = vector.shape_cast %650 : vector<8x128xf32> to vector<1x8x128xf32>
    tpu.vector_store %arg6[%651, %c0_159, %c0_160], %654 {strides = array<i32>} : memref<8x8x128xf32, #tpu.memory_space<vmem>>, vector<1x8x128xf32>,
    %655 = vector.shape_cast %574 : vector<8x1xi1> to vector<8x1xi1>
    %656 = vector.broadcast %655 : vector<8x1xi1> to vector<8x128xi1>
    %657 = arith.select %656, %607, %562 : vector<8x128xi1>, vector<8x128xf32>
    %658 = vector.shape_cast %574 : vector<8x1xi1> to vector<8x1xi1>
    %659 = vector.broadcast %658 : vector<8x1xi1> to vector<8x128xi1>
    %660 = arith.select %659, %605, %565 : vector<8x128xi1>, vector<8x128xf32>
    %661 = vector.shape_cast %576 : vector<8x1xi1> to vector<8x1xi1>
    %662 = vector.broadcast %661 : vector<8x1xi1> to vector<8x128xi1>
    %663 = arith.select %662, %638, %568 : vector<8x128xi1>, vector<8x128xf32>
    %664 = vector.shape_cast %576 : vector<8x1xi1> to vector<8x1xi1>
    %665 = vector.broadcast %664 : vector<8x1xi1> to vector<8x128xi1>
    %666 = arith.select %665, %636, %571 : vector<8x128xi1>, vector<8x128xf32>
    %c7_i32_161 = arith.constant 7 : i32
    %c7_i32_162 = arith.constant 7 : i32
    %667 = arith.subi %c7_i32_162, %c7_i32_161 : i32
    %668 = vector.broadcast %c7_i32_161 : i32 to vector<8x1xi32>
    %669 = arith.cmpi slt, %668, %0 : vector<8x1xi32>
    %670 = vector.broadcast %667 : i32 to vector<8x1xi32>
    %671 = arith.cmpi slt, %670, %0 : vector<8x1xi32>
    %672 = arith.index_cast %c7_i32_161 : i32 to index
    %c0_163 = arith.constant 0 : index
    %c0_164 = arith.constant 0 : index
    %673 = vector.load %arg1[%672, %c0_163, %c0_164] : memref<8x8x512xf32, #tpu.memory_space<vmem>>, vector<1x8x512xf32>
    %674 = vector.shape_cast %673 : vector<1x8x512xf32> to vector<8x512xf32>
    %c0_165 = arith.constant 0 : index
    %c0_166 = arith.constant 0 : index
    %675 = vector.load %arg3[%c0_165, %c0_166] : memref<128x512xf32, #tpu.memory_space<vmem>>, vector<128x512xf32>
    %cst_167 = arith.constant dense<0.000000e+00> : vector<8x512xf32>
    %676 = tpu.matmul %657, %675, %cst_167 {dimension_numbers = #tpu.dot_dimension_numbers<[1], [0], [0], [1], [0, 0, 1, 1], [], []>} : vector<8x128xf32>, vector<128x512xf32>, vector<8x512xf32> -> vector<8x512xf32>
    %677 = arith.addf %674, %676 : vector<8x512xf32>
    %678 = vector.extract_strided_slice %677 {offsets = [0, 0], sizes = [8, 128], strides = [1, 1]} : vector<8x512xf32> to vector<8x128xf32>
    %679 = arith.negf %678 : vector<8x128xf32>
    %680 = math.exp %679 : vector<8x128xf32>
    %cst_168 = arith.constant 1.000000e+00 : f32
    %681 = vector.broadcast %cst_168 : f32 to vector<8x128xf32>
    %682 = arith.addf %681, %680 : vector<8x128xf32>
    %683 = arith.divf %681, %682 : vector<8x128xf32>
    %684 = vector.extract_strided_slice %677 {offsets = [0, 128], sizes = [8, 128], strides = [1, 1]} : vector<8x512xf32> to vector<8x128xf32>
    %685 = arith.negf %684 : vector<8x128xf32>
    %686 = math.exp %685 : vector<8x128xf32>
    %cst_169 = arith.constant 1.000000e+00 : f32
    %687 = vector.broadcast %cst_169 : f32 to vector<8x128xf32>
    %688 = arith.addf %687, %686 : vector<8x128xf32>
    %689 = arith.divf %687, %688 : vector<8x128xf32>
    %690 = vector.extract_strided_slice %677 {offsets = [0, 256], sizes = [8, 128], strides = [1, 1]} : vector<8x512xf32> to vector<8x128xf32>
    %691 = math.tanh %690 : vector<8x128xf32>
    %692 = vector.extract_strided_slice %677 {offsets = [0, 384], sizes = [8, 128], strides = [1, 1]} : vector<8x512xf32> to vector<8x128xf32>
    %693 = arith.negf %692 : vector<8x128xf32>
    %694 = math.exp %693 : vector<8x128xf32>
    %cst_170 = arith.constant 1.000000e+00 : f32
    %695 = vector.broadcast %cst_170 : f32 to vector<8x128xf32>
    %696 = arith.addf %695, %694 : vector<8x128xf32>
    %697 = arith.divf %695, %696 : vector<8x128xf32>
    %698 = arith.mulf %689, %660 : vector<8x128xf32>
    %699 = arith.mulf %683, %691 : vector<8x128xf32>
    %700 = arith.addf %698, %699 : vector<8x128xf32>
    %701 = math.tanh %700 : vector<8x128xf32>
    %702 = arith.mulf %697, %701 : vector<8x128xf32>
    %703 = arith.index_cast %667 : i32 to index
    %c0_171 = arith.constant 0 : index
    %c0_172 = arith.constant 0 : index
    %704 = vector.load %arg2[%703, %c0_171, %c0_172] : memref<8x8x512xf32, #tpu.memory_space<vmem>>, vector<1x8x512xf32>
    %705 = vector.shape_cast %704 : vector<1x8x512xf32> to vector<8x512xf32>
    %c0_173 = arith.constant 0 : index
    %c0_174 = arith.constant 0 : index
    %706 = vector.load %arg4[%c0_173, %c0_174] : memref<128x512xf32, #tpu.memory_space<vmem>>, vector<128x512xf32>
    %cst_175 = arith.constant dense<0.000000e+00> : vector<8x512xf32>
    %707 = tpu.matmul %663, %706, %cst_175 {dimension_numbers = #tpu.dot_dimension_numbers<[1], [0], [0], [1], [0, 0, 1, 1], [], []>} : vector<8x128xf32>, vector<128x512xf32>, vector<8x512xf32> -> vector<8x512xf32>
    %708 = arith.addf %705, %707 : vector<8x512xf32>
    %709 = vector.extract_strided_slice %708 {offsets = [0, 0], sizes = [8, 128], strides = [1, 1]} : vector<8x512xf32> to vector<8x128xf32>
    %710 = arith.negf %709 : vector<8x128xf32>
    %711 = math.exp %710 : vector<8x128xf32>
    %cst_176 = arith.constant 1.000000e+00 : f32
    %712 = vector.broadcast %cst_176 : f32 to vector<8x128xf32>
    %713 = arith.addf %712, %711 : vector<8x128xf32>
    %714 = arith.divf %712, %713 : vector<8x128xf32>
    %715 = vector.extract_strided_slice %708 {offsets = [0, 128], sizes = [8, 128], strides = [1, 1]} : vector<8x512xf32> to vector<8x128xf32>
    %716 = arith.negf %715 : vector<8x128xf32>
    %717 = math.exp %716 : vector<8x128xf32>
    %cst_177 = arith.constant 1.000000e+00 : f32
    %718 = vector.broadcast %cst_177 : f32 to vector<8x128xf32>
    %719 = arith.addf %718, %717 : vector<8x128xf32>
    %720 = arith.divf %718, %719 : vector<8x128xf32>
    %721 = vector.extract_strided_slice %708 {offsets = [0, 256], sizes = [8, 128], strides = [1, 1]} : vector<8x512xf32> to vector<8x128xf32>
    %722 = math.tanh %721 : vector<8x128xf32>
    %723 = vector.extract_strided_slice %708 {offsets = [0, 384], sizes = [8, 128], strides = [1, 1]} : vector<8x512xf32> to vector<8x128xf32>
    %724 = arith.negf %723 : vector<8x128xf32>
    %725 = math.exp %724 : vector<8x128xf32>
    %cst_178 = arith.constant 1.000000e+00 : f32
    %726 = vector.broadcast %cst_178 : f32 to vector<8x128xf32>
    %727 = arith.addf %726, %725 : vector<8x128xf32>
    %728 = arith.divf %726, %727 : vector<8x128xf32>
    %729 = arith.mulf %720, %666 : vector<8x128xf32>
    %730 = arith.mulf %714, %722 : vector<8x128xf32>
    %731 = arith.addf %729, %730 : vector<8x128xf32>
    %732 = math.tanh %731 : vector<8x128xf32>
    %733 = arith.mulf %728, %732 : vector<8x128xf32>
    %cst_179 = arith.constant 0.000000e+00 : f32
    %734 = vector.shape_cast %669 : vector<8x1xi1> to vector<8x1xi1>
    %735 = vector.broadcast %734 : vector<8x1xi1> to vector<8x128xi1>
    %736 = vector.broadcast %cst_179 : f32 to vector<8x128xf32>
    %737 = arith.select %735, %702, %736 : vector<8x128xi1>, vector<8x128xf32>
    %738 = arith.index_cast %c7_i32_161 : i32 to index
    %c0_180 = arith.constant 0 : index
    %c0_181 = arith.constant 0 : index
    %739 = vector.load %arg5[%738, %c0_180, %c0_181] : memref<8x8x128xf32, #tpu.memory_space<vmem>>, vector<1x8x128xf32>
    %740 = vector.shape_cast %739 : vector<1x8x128xf32> to vector<8x128xf32>
    %741 = vector.shape_cast %737 : vector<8x128xf32> to vector<1x8x128xf32>
    tpu.vector_store %arg5[%738, %c0_180, %c0_181], %741 {strides = array<i32>} : memref<8x8x128xf32, #tpu.memory_space<vmem>>, vector<1x8x128xf32>,
    %cst_182 = arith.constant 0.000000e+00 : f32
    %742 = vector.shape_cast %671 : vector<8x1xi1> to vector<8x1xi1>
    %743 = vector.broadcast %742 : vector<8x1xi1> to vector<8x128xi1>
    %744 = vector.broadcast %cst_182 : f32 to vector<8x128xf32>
    %745 = arith.select %743, %733, %744 : vector<8x128xi1>, vector<8x128xf32>
    %746 = arith.index_cast %667 : i32 to index
    %c0_183 = arith.constant 0 : index
    %c0_184 = arith.constant 0 : index
    %747 = vector.load %arg6[%746, %c0_183, %c0_184] : memref<8x8x128xf32, #tpu.memory_space<vmem>>, vector<1x8x128xf32>
    %748 = vector.shape_cast %747 : vector<1x8x128xf32> to vector<8x128xf32>
    %749 = vector.shape_cast %745 : vector<8x128xf32> to vector<1x8x128xf32>
    tpu.vector_store %arg6[%746, %c0_183, %c0_184], %749 {strides = array<i32>} : memref<8x8x128xf32, #tpu.memory_space<vmem>>, vector<1x8x128xf32>,
    %750 = vector.shape_cast %669 : vector<8x1xi1> to vector<8x1xi1>
    %751 = vector.broadcast %750 : vector<8x1xi1> to vector<8x128xi1>
    %752 = arith.select %751, %702, %657 : vector<8x128xi1>, vector<8x128xf32>
    %753 = vector.shape_cast %669 : vector<8x1xi1> to vector<8x1xi1>
    %754 = vector.broadcast %753 : vector<8x1xi1> to vector<8x128xi1>
    %755 = arith.select %754, %700, %660 : vector<8x128xi1>, vector<8x128xf32>
    %756 = vector.shape_cast %671 : vector<8x1xi1> to vector<8x1xi1>
    %757 = vector.broadcast %756 : vector<8x1xi1> to vector<8x128xi1>
    %758 = arith.select %757, %733, %663 : vector<8x128xi1>, vector<8x128xf32>
    %759 = vector.shape_cast %671 : vector<8x1xi1> to vector<8x1xi1>
    %760 = vector.broadcast %759 : vector<8x1xi1> to vector<8x128xi1>
    %761 = arith.select %760, %731, %666 : vector<8x128xi1>, vector<8x128xf32>
    %c8_i32 = arith.constant 8 : i32
    %c0_185 = arith.constant 0 : index
    %c0_186 = arith.constant 0 : index
    %762 = vector.load %arg7[%c0_185, %c0_186] : memref<8x128xf32, #tpu.memory_space<vmem>>, vector<8x128xf32>
    tpu.vector_store %arg7[%c0_185, %c0_186], %752 {strides = array<i32>} : memref<8x128xf32, #tpu.memory_space<vmem>>, vector<8x128xf32>,
    %c0_187 = arith.constant 0 : index
    %c0_188 = arith.constant 0 : index
    %763 = vector.load %arg8[%c0_187, %c0_188] : memref<8x128xf32, #tpu.memory_space<vmem>>, vector<8x128xf32>
    tpu.vector_store %arg8[%c0_187, %c0_188], %758 {strides = array<i32>} : memref<8x128xf32, #tpu.memory_space<vmem>>, vector<8x128xf32>,
    return
  }
}

</mosaic_0001>

<llo_original>
// kernel: tpu_custom_call.1
$region0: #{tpu_custom_call.1}
  #allocation0 [shape = 'u32[]', space=smem, size = 0x4, offset = 0x4, fixed_abs, tag = 'smem constant byte address 0x4 - core index']
  #allocation1 [shape = 'u32[144,128]{1,0:T(1,128)}', space=vmem, size = 0x12000, scoped, tag = 'internal scratch']
  %s0 = inlined_call_operand.vmem [shape: s32[8,1], index: 0, kind: input, shape index: {}]
  %s1 = inlined_call_operand.hbm [shape: f32[8,8,512], index: 1, kind: input, shape index: {}]
  %s2 = inlined_call_operand.hbm [shape: f32[8,8,512], index: 2, kind: input, shape index: {}]
  %s3 = inlined_call_operand.hbm [shape: f32[128,512], index: 3, kind: input, shape index: {}]
  %s4 = inlined_call_operand.hbm [shape: f32[128,512], index: 4, kind: input, shape index: {}]
  %s5 = inlined_call_operand.hbm [shape: f32[8,8,128], index: 5, kind: output, shape index: {0}]
  %s6 = inlined_call_operand.hbm [shape: f32[8,8,128], index: 6, kind: output, shape index: {1}]
  %s7 = inlined_call_operand.hbm [shape: f32[8,128], index: 7, kind: output, shape index: {2}]
  %s8 = inlined_call_operand.hbm [shape: f32[8,128], index: 8, kind: output, shape index: {3}]
  %9 = xla_tuple %s5, %s6, %s7, %s8
  %s10 = sld [smem:[#allocation0]]
  $region70: #{tpu_custom_call.1} parent=0
    _
  %s12 = ssub.s32 1, %s10
  %s13 = scalar_select 0, %s12, %s10
  $region1: #{tpu_custom_call.1} parent=0
    #allocation2 [shape = 'u8[131072]{0}', space=vmem, size = 0x20000, scoped, tag = 'input window, operand 1, single buffered']
    #allocation3 [shape = 's32[1]{0}', space=sflag, size = 0x4, scoped, tag = 'scoped memory for tpu_custom_call.1']
    #allocation4 [shape = 's32[1]{0}', space=sflag, size = 0x4, scoped, tag = 'scoped memory for tpu_custom_call.1']
    #allocation5 [shape = 'u8[131072]{0}', space=vmem, size = 0x20000, scoped, tag = 'input window, operand 2, single buffered']
    #allocation6 [shape = 's32[1]{0}', space=sflag, size = 0x4, scoped, tag = 'scoped memory for tpu_custom_call.1']
    #allocation7 [shape = 'u8[262144]{0}', space=vmem, size = 0x40000, scoped, tag = 'input window, operand 3, single buffered']
    #allocation8 [shape = 'u8[262144]{0}', space=vmem, size = 0x40000, scoped, tag = 'input window, operand 4, single buffered']
    #allocation9 [shape = 's32[1]{0}', space=sflag, size = 0x4, scoped, tag = 'scoped memory for tpu_custom_call.1']
    #allocation10 [shape = 'u8[32768]{0}', space=vmem, size = 0x8000, scoped, tag = 'output window, operand 0, single buffered']
    #allocation11 [shape = 'u8[32768]{0}', space=vmem, size = 0x8000, scoped, tag = 'output window, operand 1, single buffered']
    #allocation12 [shape = 's32[1]{0}', space=sflag, size = 0x4, scoped, tag = 'scoped memory for tpu_custom_call.1']
    #allocation13 [shape = 'u8[4096]{0}', space=vmem, size = 0x1000, scoped, tag = 'output window, operand 2, single buffered']
    #allocation14 [shape = 'u8[4096]{0}', space=vmem, size = 0x1000, scoped, tag = 'output window, operand 3, single buffered']
    #allocation15 [shape = 's32[1]{0}', space=sflag, size = 0x4, scoped, tag = 'scoped memory for tpu_custom_call.1']
    %14 = vsyncpa [#allocation3], 0
    %15 = vsyncpa [#allocation6], 0
    %16 = vsyncpa [#allocation9], 0
    %17 = vsyncpa [#allocation4], 0
    %18 = vsyncpa [#allocation12], 0
    %19 = vsyncpa [#allocation15], 0
    // Predicated region
    $region2: #{tpu_custom_call.1} parent=1 // pred_check
      _
    $region3: #{tpu_custom_call.1} parent=1 // pred_check_branch
      %21 = sbr.rel (0) target = $region5
    $region4: #{tpu_custom_call.1} parent=1 // pred_region
      _
    $region5: #{tpu_custom_call.1} parent=1 // pred_fallthru
      _
    // Predicated region
    $region6: #{tpu_custom_call.1} parent=1 // pred_check
      _
    $region7: #{tpu_custom_call.1} parent=1 // pred_check_branch
      %23 = sbr.rel (0) target = $region9
    $region8: #{tpu_custom_call.1} parent=1 // pred_region
      %s25 = ssub.s32 4096, 4096
      %26 = vsyncadd [#allocation3], %s25
      %s27 = sshll.u32 [#allocation2], 4
      %s28 = int_to_ptr.vmem [resolvable:$true] %s27
      %33 = dma.hbm_to_vmem [thread:$0]  %s1, 4096, %s28, [#allocation3], 512, 512, 32
    $region9: #{tpu_custom_call.1} parent=1 // pred_fallthru
      _
    // Predicated region
    $region10: #{tpu_custom_call.1} parent=1 // pred_check
      _
    $region11: #{tpu_custom_call.1} parent=1 // pred_check_branch
      %35 = sbr.rel (0) target = $region13
    $region12: #{tpu_custom_call.1} parent=1 // pred_region
      %s37 = ssub.s32 4096, 4096
      %38 = vsyncadd [#allocation6], %s37
      %s39 = sshll.u32 [#allocation5], 4
      %s40 = int_to_ptr.vmem [resolvable:$true] %s39
      %45 = dma.hbm_to_vmem [thread:$0]  %s2, 4096, %s40, [#allocation6], 512, 512, 32
    $region13: #{tpu_custom_call.1} parent=1 // pred_fallthru
      _
    // Predicated region
    $region14: #{tpu_custom_call.1} parent=1 // pred_check
      _
    $region15: #{tpu_custom_call.1} parent=1 // pred_check_branch
      %47 = sbr.rel (0) target = $region17
    $region16: #{tpu_custom_call.1} parent=1 // pred_region
      %s49 = ssub.s32 8192, 8192
      %50 = vsyncadd [#allocation6], %s49
      %s51 = sshll.u32 [#allocation7], 4
      %s52 = int_to_ptr.vmem [resolvable:$true] %s51
      %57 = dma.hbm_to_vmem [thread:$0]  %s3, 8192, %s52, [#allocation6], 512, 512, 32
    $region17: #{tpu_custom_call.1} parent=1 // pred_fallthru
      _
    // Predicated region
    $region18: #{tpu_custom_call.1} parent=1 // pred_check
      _
    $region19: #{tpu_custom_call.1} parent=1 // pred_check_branch
      %59 = sbr.rel (0) target = $region21
    $region20: #{tpu_custom_call.1} parent=1 // pred_region
      %s61 = ssub.s32 8192, 8192
      %62 = vsyncadd [#allocation9], %s61
      %s63 = sshll.u32 [#allocation8], 4
      %s64 = int_to_ptr.vmem [resolvable:$true] %s63
      %69 = dma.hbm_to_vmem [thread:$0]  %s4, 8192, %s64, [#allocation9], 512, 512, 32
    $region21: #{tpu_custom_call.1} parent=1 // pred_fallthru
      _
    // Predicated region
    $region22: #{tpu_custom_call.1} parent=1 // pred_check
      _
    $region23: #{tpu_custom_call.1} parent=1 // pred_check_branch
      %71 = sbr.rel (0) target = $region25
    $region24: #{tpu_custom_call.1} parent=1 // pred_region
      %72 = dma.done [#allocation3], 4096
    $region25: #{tpu_custom_call.1} parent=1 // pred_fallthru
      _
    // Predicated region
    $region26: #{tpu_custom_call.1} parent=1 // pred_check
      _
    $region27: #{tpu_custom_call.1} parent=1 // pred_check_branch
      %74 = sbr.rel (0) target = $region29
    $region28: #{tpu_custom_call.1} parent=1 // pred_region
      %75 = dma.done [#allocation6], 4096
    $region29: #{tpu_custom_call.1} parent=1 // pred_fallthru
      _
    // Predicated region
    $region30: #{tpu_custom_call.1} parent=1 // pred_check
      _
    $region31: #{tpu_custom_call.1} parent=1 // pred_check_branch
      %77 = sbr.rel (0) target = $region33
    $region32: #{tpu_custom_call.1} parent=1 // pred_region
      %78 = dma.done [#allocation6], 8192
    $region33: #{tpu_custom_call.1} parent=1 // pred_fallthru
      _
    // Predicated region
    $region34: #{tpu_custom_call.1} parent=1 // pred_check
      _
    $region35: #{tpu_custom_call.1} parent=1 // pred_check_branch
      %80 = sbr.rel (0) target = $region37
    $region36: #{tpu_custom_call.1} parent=1 // pred_region
      %81 = dma.done [#allocation9], 8192
    $region37: #{tpu_custom_call.1} parent=1 // pred_fallthru
      _
    %v82 = vld [vmem:[%s0] sm:$0xff]
    %vm83 = vcmp.gt.s32.totalorder %v82, 0
    %vm84 = vcmp.gt.s32.totalorder %v82, 7
    %v85 = vld [vmem:[#allocation2] sm:$0xff]
    %v86 = vld [vmem:[#allocation2 + $0x8] sm:$0xff]
    %v87 = vld [vmem:[#allocation2 + $0x10] sm:$0xff]
    %v88 = vld [vmem:[#allocation2 + $0x18] sm:$0xff]
    %v89 = vld [vmem:[#allocation7] sm:$0xff]
    %v90 = vld [vmem:[#allocation7 + $0x8] sm:$0xff]
    %v91 = vld [vmem:[#allocation7 + $0x10] sm:$0xff]
    %v92 = vld [vmem:[#allocation7 + $0x18] sm:$0xff]
    %v93 = vld [vmem:[#allocation7 + $0x20] sm:$0xff]
    %v94 = vld [vmem:[#allocation7 + $0x28] sm:$0xff]
    %v95 = vld [vmem:[#allocation7 + $0x30] sm:$0xff]
    %v96 = vld [vmem:[#allocation7 + $0x38] sm:$0xff]
    %v97 = vld [vmem:[#allocation7 + $0x40] sm:$0xff]
    %v98 = vld [vmem:[#allocation7 + $0x48] sm:$0xff]
    %v99 = vld [vmem:[#allocation7 + $0x50] sm:$0xff]
    %v100 = vld [vmem:[#allocation7 + $0x58] sm:$0xff]
    %v101 = vld [vmem:[#allocation7 + $0x60] sm:$0xff]
    %v102 = vld [vmem:[#allocation7 + $0x68] sm:$0xff]
    %v103 = vld [vmem:[#allocation7 + $0x70] sm:$0xff]
    %v104 = vld [vmem:[#allocation7 + $0x78] sm:$0xff]
    %v105 = vld [vmem:[#allocation7 + $0x80] sm:$0xff]
    %v106 = vld [vmem:[#allocation7 + $0x88] sm:$0xff]
    %v107 = vld [vmem:[#allocation7 + $0x90] sm:$0xff]
    %v108 = vld [vmem:[#allocation7 + $0x98] sm:$0xff]
    %v109 = vld [vmem:[#allocation7 + $0xa0] sm:$0xff]
    %v110 = vld [vmem:[#allocation7 + $0xa8] sm:$0xff]
    %v111 = vld [vmem:[#allocation7 + $0xb0] sm:$0xff]
    %v112 = vld [vmem:[#allocation7 + $0xb8] sm:$0xff]
    %v113 = vld [vmem:[#allocation7 + $0xc0] sm:$0xff]
    %v114 = vld [vmem:[#allocation7 + $0xc8] sm:$0xff]
    %v115 = vld [vmem:[#allocation7 + $0xd0] sm:$0xff]
    %v116 = vld [vmem:[#allocation7 + $0xd8] sm:$0xff]
    %v117 = vld [vmem:[#allocation7 + $0xe0] sm:$0xff]
    %v118 = vld [vmem:[#allocation7 + $0xe8] sm:$0xff]
    %v119 = vld [vmem:[#allocation7 + $0xf0] sm:$0xff]
    %v120 = vld [vmem:[#allocation7 + $0xf8] sm:$0xff]
    %v121 = vld [vmem:[#allocation7 + $0x100] sm:$0xff]
    %v122 = vld [vmem:[#allocation7 + $0x108] sm:$0xff]
    %v123 = vld [vmem:[#allocation7 + $0x110] sm:$0xff]
    %v124 = vld [vmem:[#allocation7 + $0x118] sm:$0xff]
    %v125 = vld [vmem:[#allocation7 + $0x120] sm:$0xff]
    %v126 = vld [vmem:[#allocation7 + $0x128] sm:$0xff]
    %v127 = vld [vmem:[#allocation7 + $0x130] sm:$0xff]
    %v128 = vld [vmem:[#allocation7 + $0x138] sm:$0xff]
    %v129 = vld [vmem:[#allocation7 + $0x140] sm:$0xff]
    %v130 = vld [vmem:[#allocation7 + $0x148] sm:$0xff]
    %v131 = vld [vmem:[#allocation7 + $0x150] sm:$0xff]
    %v132 = vld [vmem:[#allocation7 + $0x158] sm:$0xff]
    %v133 = vld [vmem:[#allocation7 + $0x160] sm:$0xff]
    %v134 = vld [vmem:[#allocation7 + $0x168] sm:$0xff]
    %v135 = vld [vmem:[#allocation7 + $0x170] sm:$0xff]
    %v136 = vld [vmem:[#allocation7 + $0x178] sm:$0xff]
    %v137 = vld [vmem:[#allocation7 + $0x180] sm:$0xff]
    %v138 = vld [vmem:[#allocation7 + $0x188] sm:$0xff]
    %v139 = vld [vmem:[#allocation7 + $0x190] sm:$0xff]
    %v140 = vld [vmem:[#allocation7 + $0x198] sm:$0xff]
    %v141 = vld [vmem:[#allocation7 + $0x1a0] sm:$0xff]
    %v142 = vld [vmem:[#allocation7 + $0x1a8] sm:$0xff]
    %v143 = vld [vmem:[#allocation7 + $0x1b0] sm:$0xff]
    %v144 = vld [vmem:[#allocation7 + $0x1b8] sm:$0xff]
    %v145 = vld [vmem:[#allocation7 + $0x1c0] sm:$0xff]
    %v146 = vld [vmem:[#allocation7 + $0x1c8] sm:$0xff]
    %v147 = vld [vmem:[#allocation7 + $0x1d0] sm:$0xff]
    %v148 = vld [vmem:[#allocation7 + $0x1d8] sm:$0xff]
    %v149 = vld [vmem:[#allocation7 + $0x1e0] sm:$0xff]
    %v150 = vld [vmem:[#allocation7 + $0x1e8] sm:$0xff]
    %v151 = vld [vmem:[#allocation7 + $0x1f0] sm:$0xff]
    %v152 = vld [vmem:[#allocation7 + $0x1f8] sm:$0xff]
    %153 = vmatprep.subr.mxu0 %v90
    %154 = vmatpush1.msra.mxu0 %v89
    %155 = vmatprep.subr.mxu0 %v94
    %156 = vmatpush1.msra.mxu0 %v93
    %157 = vmatprep.subr.mxu0 %v98
    %158 = vmatpush1.msra.mxu0 %v97
    %159 = vmatprep.subr.mxu0 %v102
    %160 = vmatpush1.msra.mxu0 %v101
    %161 = vmatprep.subr.mxu0 %v106
    %162 = vmatpush1.msra.mxu0 %v105
    %163 = vmatprep.subr.mxu0 %v110
    %164 = vmatpush1.msra.mxu0 %v109
    %165 = vmatprep.subr.mxu0 %v114
    %166 = vmatpush1.msra.mxu0 %v113
    %167 = vmatprep.subr.mxu0 %v118
    %168 = vmatpush1.msra.mxu0 %v117
    %169 = vmatprep.subr.mxu0 %v122
    %170 = vmatpush1.msra.mxu0 %v121
    %171 = vmatprep.subr.mxu0 %v126
    %172 = vmatpush1.msra.mxu0 %v125
    %173 = vmatprep.subr.mxu0 %v130
    %174 = vmatpush1.msra.mxu0 %v129
    %175 = vmatprep.subr.mxu0 %v134
    %176 = vmatpush1.msra.mxu0 %v133
    %177 = vmatprep.subr.mxu0 %v138
    %178 = vmatpush1.msra.mxu0 %v137
    %179 = vmatprep.subr.mxu0 %v142
    %180 = vmatpush1.msra.mxu0 %v141
    %181 = vmatprep.subr.mxu0 %v146
    %182 = vmatpush1.msra.mxu0 %v145
    %183 = vmatprep.subr.mxu0 %v150
    %184 = vmatpush1.msra.mxu0 %v149
    %185 = vmatprep.subr.mxu0 0.0
    %186 = vmatpush1.msra.mxu0 0.0
    %187 = vmatprep.subr.mxu0 0.0
    %188 = vmatpush1.msra.mxu0 0.0
    %189 = vmatprep.subr.mxu0 0.0
    %190 = vmatpush1.msra.mxu0 0.0
    %191 = vmatprep.subr.mxu0 0.0
    %192 = vmatpush1.msra.mxu0 0.0
    %193 = vmatprep.subr.mxu0 0.0
    %194 = vmatpush1.msra.mxu0 0.0
    %195 = vmatprep.subr.mxu0 0.0
    %196 = vmatpush1.msra.mxu0 0.0
    %197 = vmatprep.subr.mxu0 0.0
    %198 = vmatpush1.msra.mxu0 0.0
    %199 = vmatprep.subr.mxu0 0.0
    %200 = vmatpush1.msra.mxu0 0.0
    %201 = vmatprep.subr.mxu0 0.0
    %202 = vmatpush1.msra.mxu0 0.0
    %203 = vmatprep.subr.mxu0 0.0
    %204 = vmatpush1.msra.mxu0 0.0
    %205 = vmatprep.subr.mxu0 0.0
    %206 = vmatpush1.msra.mxu0 0.0
    %207 = vmatprep.subr.mxu0 0.0
    %208 = vmatpush1.msra.mxu0 0.0
    %209 = vmatprep.subr.mxu0 0.0
    %210 = vmatpush1.msra.mxu0 0.0
    %211 = vmatprep.subr.mxu0 0.0
    %212 = vmatpush1.msra.mxu0 0.0
    %213 = vmatprep.subr.mxu0 0.0
    %214 = vmatpush1.msra.mxu0 0.0
    %215 = vmatprep.subr.mxu0 0.0
    %216 = vmatpush1.msra.mxu0 0.0
    %217 = vmatprep.mubr.f32.mxu0 0.0
    %218 = vmatmul.mubr.f32.gmra.mrb[0].mxu0 0.0
    %v219 = vpop.f32.mrb[0].mxu0
    %v220 = vadd.f32 0.0, %v219
    %v221 = vpop.f32.mrb[0].mxu0
    %v222 = vadd.f32 0.0, %v221
    %223 = vdwg.mxu0
    %224 = vmatprep.subr.mxu0 %v92
    %225 = vmatpush1.msra.mxu0 %v91
    %226 = vmatprep.subr.mxu0 %v96
    %227 = vmatpush1.msra.mxu0 %v95
    %228 = vmatprep.subr.mxu0 %v100
    %229 = vmatpush1.msra.mxu0 %v99
    %230 = vmatprep.subr.mxu0 %v104
    %231 = vmatpush1.msra.mxu0 %v103
    %232 = vmatprep.subr.mxu0 %v108
    %233 = vmatpush1.msra.mxu0 %v107
    %234 = vmatprep.subr.mxu0 %v112
    %235 = vmatpush1.msra.mxu0 %v111
    %236 = vmatprep.subr.mxu0 %v116
    %237 = vmatpush1.msra.mxu0 %v115
    %238 = vmatprep.subr.mxu0 %v120
    %239 = vmatpush1.msra.mxu0 %v119
    %240 = vmatprep.subr.mxu0 %v124
    %241 = vmatpush1.msra.mxu0 %v123
    %242 = vmatprep.subr.mxu0 %v128
    %243 = vmatpush1.msra.mxu0 %v127
    %244 = vmatprep.subr.mxu0 %v132
    %245 = vmatpush1.msra.mxu0 %v131
    %246 = vmatprep.subr.mxu0 %v136
    %247 = vmatpush1.msra.mxu0 %v135
    %248 = vmatprep.subr.mxu0 %v140
    %249 = vmatpush1.msra.mxu0 %v139
    %250 = vmatprep.subr.mxu0 %v144
    %251 = vmatpush1.msra.mxu0 %v143
    %252 = vmatprep.subr.mxu0 %v148
    %253 = vmatpush1.msra.mxu0 %v147
    %254 = vmatprep.subr.mxu0 %v152
    %255 = vmatpush1.msra.mxu0 %v151
    %256 = vmatprep.subr.mxu0 0.0
    %257 = vmatpush1.msra.mxu0 0.0
    %258 = vmatprep.subr.mxu0 0.0
    %259 = vmatpush1.msra.mxu0 0.0
    %260 = vmatprep.subr.mxu0 0.0
    %261 = vmatpush1.msra.mxu0 0.0
    %262 = vmatprep.subr.mxu0 0.0
    %263 = vmatpush1.msra.mxu0 0.0
    %264 = vmatprep.subr.mxu0 0.0
    %265 = vmatpush1.msra.mxu0 0.0
    %266 = vmatprep.subr.mxu0 0.0
    %267 = vmatpush1.msra.mxu0 0.0
    %268 = vmatprep.subr.mxu0 0.0
    %269 = vmatpush1.msra.mxu0 0.0
    %270 = vmatprep.subr.mxu0 0.0
    %271 = vmatpush1.msra.mxu0 0.0
    %272 = vmatprep.subr.mxu0 0.0
    %273 = vmatpush1.msra.mxu0 0.0
    %274 = vmatprep.subr.mxu0 0.0
    %275 = vmatpush1.msra.mxu0 0.0
    %276 = vmatprep.subr.mxu0 0.0
    %277 = vmatpush1.msra.mxu0 0.0
    %278 = vmatprep.subr.mxu0 0.0
    %279 = vmatpush1.msra.mxu0 0.0
    %280 = vmatprep.subr.mxu0 0.0
    %281 = vmatpush1.msra.mxu0 0.0
    %282 = vmatprep.subr.mxu0 0.0
    %283 = vmatpush1.msra.mxu0 0.0
    %284 = vmatprep.subr.mxu0 0.0
    %285 = vmatpush1.msra.mxu0 0.0
    %286 = vmatprep.subr.mxu0 0.0
    %287 = vmatpush1.msra.mxu0 0.0
    %288 = vmatprep.mubr.f32.mxu0 0.0
    %289 = vmatmul.mubr.f32.gmra.mrb[0].mxu0 0.0
    %v290 = vpop.f32.mrb[0].mxu0
    %v291 = vadd.f32 0.0, %v290
    %v292 = vpop.f32.mrb[0].mxu0
    %v293 = vadd.f32 0.0, %v292
    %294 = vdwg.mxu0
    %v295 = vadd.f32 %v85, %v220
    %v296 = vadd.f32 %v86, %v222
    %v297 = vadd.f32 %v87, %v291
    %v298 = vadd.f32 %v88, %v293
    %v299 = vxor.u32 %v295, 2147483648
    %v300 = vmul.f32 %v299, 1.442695
    %v301 = vpow.pop %v300
    %v302 = vadd.f32 %v301, 1.0
    %v303 = vrcp.pop %v302
    %v304 = vmul.f32 1.0, %v303
    %v305 = vxor.u32 %v296, 2147483648
    %v306 = vmul.f32 %v305, 1.442695
    %v307 = vpow.pop %v306
    %v308 = vadd.f32 %v307, 1.0
    %v309 = vrcp.pop %v308
    %v310 = vmul.f32 1.0, %v309
    %v311 = vtanh.pop %v297
    %v312 = vxor.u32 %v298, 2147483648
    %v313 = vmul.f32 %v312, 1.442695
    %v314 = vpow.pop %v313
    %v315 = vadd.f32 %v314, 1.0
    %v316 = vrcp.pop %v315
    %v317 = vmul.f32 1.0, %v316
    %v318 = vmul.f32 %v310, 0.0
    %v319 = vmul.f32 %v304, %v311
    %v320 = vadd.f32 %v318, %v319
    %v321 = vtanh.pop %v320
    %v322 = vmul.f32 %v317, %v321
    %s323 = scalar_lea.vmem [#allocation5], 224
    %v324 = vld [vmem:[%s323] sm:$0xff]
    %v325 = vld [vmem:[%s323 + $0x8] sm:$0xff]
    %v326 = vld [vmem:[%s323 + $0x10] sm:$0xff]
    %v327 = vld [vmem:[%s323 + $0x18] sm:$0xff]
    %v328 = vld [vmem:[#allocation8] sm:$0xff]
    %v329 = vld [vmem:[#allocation8 + $0x8] sm:$0xff]
    %v330 = vld [vmem:[#allocation8 + $0x10] sm:$0xff]
    %v331 = vld [vmem:[#allocation8 + $0x18] sm:$0xff]
    %v332 = vld [vmem:[#allocation8 + $0x20] sm:$0xff]
    %v333 = vld [vmem:[#allocation8 + $0x28] sm:$0xff]
    %v334 = vld [vmem:[#allocation8 + $0x30] sm:$0xff]
    %v335 = vld [vmem:[#allocation8 + $0x38] sm:$0xff]
    %v336 = vld [vmem:[#allocation8 + $0x40] sm:$0xff]
    %v337 = vld [vmem:[#allocation8 + $0x48] sm:$0xff]
    %v338 = vld [vmem:[#allocation8 + $0x50] sm:$0xff]
    %v339 = vld [vmem:[#allocation8 + $0x58] sm:$0xff]
    %v340 = vld [vmem:[#allocation8 + $0x60] sm:$0xff]
    %v341 = vld [vmem:[#allocation8 + $0x68] sm:$0xff]
    %v342 = vld [vmem:[#allocation8 + $0x70] sm:$0xff]
    %v343 = vld [vmem:[#allocation8 + $0x78] sm:$0xff]
    %v344 = vld [vmem:[#allocation8 + $0x80] sm:$0xff]
    %v345 = vld [vmem:[#allocation8 + $0x88] sm:$0xff]
    %v346 = vld [vmem:[#allocation8 + $0x90] sm:$0xff]
    %v347 = vld [vmem:[#allocation8 + $0x98] sm:$0xff]
    %v348 = vld [vmem:[#allocation8 + $0xa0] sm:$0xff]
    %v349 = vld [vmem:[#allocation8 + $0xa8] sm:$0xff]
    %v350 = vld [vmem:[#allocation8 + $0xb0] sm:$0xff]
    %v351 = vld [vmem:[#allocation8 + $0xb8] sm:$0xff]
    %v352 = vld [vmem:[#allocation8 + $0xc0] sm:$0xff]
    %v353 = vld [vmem:[#allocation8 + $0xc8] sm:$0xff]
    %v354 = vld [vmem:[#allocation8 + $0xd0] sm:$0xff]
    %v355 = vld [vmem:[#allocation8 + $0xd8] sm:$0xff]
    %v356 = vld [vmem:[#allocation8 + $0xe0] sm:$0xff]
    %v357 = vld [vmem:[#allocation8 + $0xe8] sm:$0xff]
    %v358 = vld [vmem:[#allocation8 + $0xf0] sm:$0xff]
    %v359 = vld [vmem:[#allocation8 + $0xf8] sm:$0xff]
    %v360 = vld [vmem:[#allocation8 + $0x100] sm:$0xff]
    %v361 = vld [vmem:[#allocation8 + $0x108] sm:$0xff]
    %v362 = vld [vmem:[#allocation8 + $0x110] sm:$0xff]
    %v363 = vld [vmem:[#allocation8 + $0x118] sm:$0xff]
    %v364 = vld [vmem:[#allocation8 + $0x120] sm:$0xff]
    %v365 = vld [vmem:[#allocation8 + $0x128] sm:$0xff]
    %v366 = vld [vmem:[#allocation8 + $0x130] sm:$0xff]
    %v367 = vld [vmem:[#allocation8 + $0x138] sm:$0xff]
    %v368 = vld [vmem:[#allocation8 + $0x140] sm:$0xff]
    %v369 = vld [vmem:[#allocation8 + $0x148] sm:$0xff]
    %v370 = vld [vmem:[#allocation8 + $0x150] sm:$0xff]
    %v371 = vld [vmem:[#allocation8 + $0x158] sm:$0xff]
    %v372 = vld [vmem:[#allocation8 + $0x160] sm:$0xff]
    %v373 = vld [vmem:[#allocation8 + $0x168] sm:$0xff]
    %v374 = vld [vmem:[#allocation8 + $0x170] sm:$0xff]
    %v375 = vld [vmem:[#allocation8 + $0x178] sm:$0xff]
    %v376 = vld [vmem:[#allocation8 + $0x180] sm:$0xff]
    %v377 = vld [vmem:[#allocation8 + $0x188] sm:$0xff]
    %v378 = vld [vmem:[#allocation8 + $0x190] sm:$0xff]
    %v379 = vld [vmem:[#allocation8 + $0x198] sm:$0xff]
    %v380 = vld [vmem:[#allocation8 + $0x1a0] sm:$0xff]
    %v381 = vld [vmem:[#allocation8 + $0x1a8] sm:$0xff]
    %v382 = vld [vmem:[#allocation8 + $0x1b0] sm:$0xff]
    %v383 = vld [vmem:[#allocation8 + $0x1b8] sm:$0xff]
    %v384 = vld [vmem:[#allocation8 + $0x1c0] sm:$0xff]
    %v385 = vld [vmem:[#allocation8 + $0x1c8] sm:$0xff]
    %v386 = vld [vmem:[#allocation8 + $0x1d0] sm:$0xff]
    %v387 = vld [vmem:[#allocation8 + $0x1d8] sm:$0xff]
    %v388 = vld [vmem:[#allocation8 + $0x1e0] sm:$0xff]
    %v389 = vld [vmem:[#allocation8 + $0x1e8] sm:$0xff]
    %v390 = vld [vmem:[#allocation8 + $0x1f0] sm:$0xff]
    %v391 = vld [vmem:[#allocation8 + $0x1f8] sm:$0xff]
    %392 = vmatprep.subr.mxu0 %v329
    %393 = vmatpush1.msra.mxu0 %v328
    %394 = vmatprep.subr.mxu0 %v333
    %395 = vmatpush1.msra.mxu0 %v332
    %396 = vmatprep.subr.mxu0 %v337
    %397 = vmatpush1.msra.mxu0 %v336
    %398 = vmatprep.subr.mxu0 %v341
    %399 = vmatpush1.msra.mxu0 %v340
    %400 = vmatprep.subr.mxu0 %v345
    %401 = vmatpush1.msra.mxu0 %v344
    %402 = vmatprep.subr.mxu0 %v349
    %403 = vmatpush1.msra.mxu0 %v348
    %404 = vmatprep.subr.mxu0 %v353
    %405 = vmatpush1.msra.mxu0 %v352
    %406 = vmatprep.subr.mxu0 %v357
    %407 = vmatpush1.msra.mxu0 %v356
    %408 = vmatprep.subr.mxu0 %v361
    %409 = vmatpush1.msra.mxu0 %v360
    %410 = vmatprep.subr.mxu0 %v365
    %411 = vmatpush1.msra.mxu0 %v364
    %412 = vmatprep.subr.mxu0 %v369
    %413 = vmatpush1.msra.mxu0 %v368
    %414 = vmatprep.subr.mxu0 %v373
    %415 = vmatpush1.msra.mxu0 %v372
    %416 = vmatprep.subr.mxu0 %v377
    %417 = vmatpush1.msra.mxu0 %v376
    %418 = vmatprep.subr.mxu0 %v381
    %419 = vmatpush1.msra.mxu0 %v380
    %420 = vmatprep.subr.mxu0 %v385
    %421 = vmatpush1.msra.mxu0 %v384
    %422 = vmatprep.subr.mxu0 %v389
    %423 = vmatpush1.msra.mxu0 %v388
    %424 = vmatprep.subr.mxu0 0.0
    %425 = vmatpush1.msra.mxu0 0.0
    %426 = vmatprep.subr.mxu0 0.0
    %427 = vmatpush1.msra.mxu0 0.0
    %428 = vmatprep.subr.mxu0 0.0
    %429 = vmatpush1.msra.mxu0 0.0
    %430 = vmatprep.subr.mxu0 0.0
    %431 = vmatpush1.msra.mxu0 0.0
    %432 = vmatprep.subr.mxu0 0.0
    %433 = vmatpush1.msra.mxu0 0.0
    %434 = vmatprep.subr.mxu0 0.0
    %435 = vmatpush1.msra.mxu0 0.0
    %436 = vmatprep.subr.mxu0 0.0
    %437 = vmatpush1.msra.mxu0 0.0
    %438 = vmatprep.subr.mxu0 0.0
    %439 = vmatpush1.msra.mxu0 0.0
    %440 = vmatprep.subr.mxu0 0.0
    %441 = vmatpush1.msra.mxu0 0.0
    %442 = vmatprep.subr.mxu0 0.0
    %443 = vmatpush1.msra.mxu0 0.0
    %444 = vmatprep.subr.mxu0 0.0
    %445 = vmatpush1.msra.mxu0 0.0
    %446 = vmatprep.subr.mxu0 0.0
    %447 = vmatpush1.msra.mxu0 0.0
    %448 = vmatprep.subr.mxu0 0.0
    %449 = vmatpush1.msra.mxu0 0.0
    %450 = vmatprep.subr.mxu0 0.0
    %451 = vmatpush1.msra.mxu0 0.0
    %452 = vmatprep.subr.mxu0 0.0
    %453 = vmatpush1.msra.mxu0 0.0
    %454 = vmatprep.subr.mxu0 0.0
    %455 = vmatpush1.msra.mxu0 0.0
    %456 = vmatprep.mubr.f32.mxu0 0.0
    %457 = vmatmul.mubr.f32.gmra.mrb[0].mxu0 0.0
    %v458 = vpop.f32.mrb[0].mxu0
    %v459 = vadd.f32 0.0, %v458
    %v460 = vpop.f32.mrb[0].mxu0
    %v461 = vadd.f32 0.0, %v460
    %462 = vdwg.mxu0
    %463 = vmatprep.subr.mxu0 %v331
    %464 = vmatpush1.msra.mxu0 %v330
    %465 = vmatprep.subr.mxu0 %v335
    %466 = vmatpush1.msra.mxu0 %v334
    %467 = vmatprep.subr.mxu0 %v339
    %468 = vmatpush1.msra.mxu0 %v338
    %469 = vmatprep.subr.mxu0 %v343
    %470 = vmatpush1.msra.mxu0 %v342
    %471 = vmatprep.subr.mxu0 %v347
    %472 = vmatpush1.msra.mxu0 %v346
    %473 = vmatprep.subr.mxu0 %v351
    %474 = vmatpush1.msra.mxu0 %v350
    %475 = vmatprep.subr.mxu0 %v355
    %476 = vmatpush1.msra.mxu0 %v354
    %477 = vmatprep.subr.mxu0 %v359
    %478 = vmatpush1.msra.mxu0 %v358
    %479 = vmatprep.subr.mxu0 %v363
    %480 = vmatpush1.msra.mxu0 %v362
    %481 = vmatprep.subr.mxu0 %v367
    %482 = vmatpush1.msra.mxu0 %v366
    %483 = vmatprep.subr.mxu0 %v371
    %484 = vmatpush1.msra.mxu0 %v370
    %485 = vmatprep.subr.mxu0 %v375
    %486 = vmatpush1.msra.mxu0 %v374
    %487 = vmatprep.subr.mxu0 %v379
    %488 = vmatpush1.msra.mxu0 %v378
    %489 = vmatprep.subr.mxu0 %v383
    %490 = vmatpush1.msra.mxu0 %v382
    %491 = vmatprep.subr.mxu0 %v387
    %492 = vmatpush1.msra.mxu0 %v386
    %493 = vmatprep.subr.mxu0 %v391
    %494 = vmatpush1.msra.mxu0 %v390
    %495 = vmatprep.subr.mxu0 0.0
    %496 = vmatpush1.msra.mxu0 0.0
    %497 = vmatprep.subr.mxu0 0.0
    %498 = vmatpush1.msra.mxu0 0.0
    %499 = vmatprep.subr.mxu0 0.0
    %500 = vmatpush1.msra.mxu0 0.0
    %501 = vmatprep.subr.mxu0 0.0
    %502 = vmatpush1.msra.mxu0 0.0
    %503 = vmatprep.subr.mxu0 0.0
    %504 = vmatpush1.msra.mxu0 0.0
    %505 = vmatprep.subr.mxu0 0.0
    %506 = vmatpush1.msra.mxu0 0.0
    %507 = vmatprep.subr.mxu0 0.0
    %508 = vmatpush1.msra.mxu0 0.0
    %509 = vmatprep.subr.mxu0 0.0
    %510 = vmatpush1.msra.mxu0 0.0
    %511 = vmatprep.subr.mxu0 0.0
    %512 = vmatpush1.msra.mxu0 0.0
    %513 = vmatprep.subr.mxu0 0.0
    %514 = vmatpush1.msra.mxu0 0.0
    %515 = vmatprep.subr.mxu0 0.0
    %516 = vmatpush1.msra.mxu0 0.0
    %517 = vmatprep.subr.mxu0 0.0
    %518 = vmatpush1.msra.mxu0 0.0
    %519 = vmatprep.subr.mxu0 0.0
    %520 = vmatpush1.msra.mxu0 0.0
    %521 = vmatprep.subr.mxu0 0.0
    %522 = vmatpush1.msra.mxu0 0.0
    %523 = vmatprep.subr.mxu0 0.0
    %524 = vmatpush1.msra.mxu0 0.0
    %525 = vmatprep.subr.mxu0 0.0
    %526 = vmatpush1.msra.mxu0 0.0
    %527 = vmatprep.mubr.f32.mxu0 0.0
    %528 = vmatmul.mubr.f32.gmra.mrb[0].mxu0 0.0
    %v529 = vpop.f32.mrb[0].mxu0
    %v530 = vadd.f32 0.0, %v529
    %v531 = vpop.f32.mrb[0].mxu0
    %v532 = vadd.f32 0.0, %v531
    %533 = vdwg.mxu0
    %v534 = vadd.f32 %v324, %v459
    %v535 = vadd.f32 %v325, %v461
    %v536 = vadd.f32 %v326, %v530
    %v537 = vadd.f32 %v327, %v532
    %v538 = vxor.u32 %v534, 2147483648
    %v539 = vmul.f32 %v538, 1.442695
    %v540 = vpow.pop %v539
    %v541 = vadd.f32 %v540, 1.0
    %v542 = vrcp.pop %v541
    %v543 = vmul.f32 1.0, %v542
    %v544 = vxor.u32 %v535, 2147483648
    %v545 = vmul.f32 %v544, 1.442695
    %v546 = vpow.pop %v545
    %v547 = vadd.f32 %v546, 1.0
    %v548 = vrcp.pop %v547
    %v549 = vmul.f32 1.0, %v548
    %v550 = vtanh.pop %v536
    %v551 = vxor.u32 %v537, 2147483648
    %v552 = vmul.f32 %v551, 1.442695
    %v553 = vpow.pop %v552
    %v554 = vadd.f32 %v553, 1.0
    %v555 = vrcp.pop %v554
    %v556 = vmul.f32 1.0, %v555
    %v557 = vmul.f32 %v549, 0.0
    %v558 = vmul.f32 %v543, %v550
    %v559 = vadd.f32 %v557, %v558
    %v560 = vtanh.pop %v559
    %v561 = vmul.f32 %v556, %v560
    %v562 = vsel %vm83, 1, 0
    %563 = vset.pattern.permute.xlu0 0
    %564 = vperm.xlu0 %563, %v562
    %v565 = vpop.permute.xlu0 %564
    %vm566 = vcmp.eq.s32.totalorder %v565, 1
    %v567 = vsel %vm566, %v322, 0.0
    %568 = vst [vmem:[#allocation10] sm:$0xff] %v567
    %v569 = vsel %vm84, 1, 0
    %570 = vset.pattern.permute.xlu0 0
    %571 = vperm.xlu0 %570, %v569
    %v572 = vpop.permute.xlu0 %571
    %vm573 = vcmp.eq.s32.totalorder %v572, 1
    %v574 = vsel %vm573, %v561, 0.0
    %s575 = scalar_lea.vmem [#allocation11], 56
    %576 = vst [vmem:[%s575] sm:$0xff] %v574
    %v577 = vsel %vm566, %v320, 0.0
    %v578 = vsel %vm573, %v559, 0.0
    %vm579 = vcmp.gt.s32.totalorder %v82, 1
    %vm580 = vcmp.gt.s32.totalorder %v82, 6
    %s581 = scalar_lea.vmem [#allocation2], 32
    %v582 = vld [vmem:[%s581] sm:$0xff]
    %v583 = vld [vmem:[%s581 + $0x8] sm:$0xff]
    %v584 = vld [vmem:[%s581 + $0x10] sm:$0xff]
    %v585 = vld [vmem:[%s581 + $0x18] sm:$0xff]
    %v586 = vld [vmem:[#allocation7] sm:$0xff]
    %v587 = vld [vmem:[#allocation7 + $0x8] sm:$0xff]
    %v588 = vld [vmem:[#allocation7 + $0x10] sm:$0xff]
    %v589 = vld [vmem:[#allocation7 + $0x18] sm:$0xff]
    %v590 = vld [vmem:[#allocation7 + $0x20] sm:$0xff]
    %v591 = vld [vmem:[#allocation7 + $0x28] sm:$0xff]
    %v592 = vld [vmem:[#allocation7 + $0x30] sm:$0xff]
    %v593 = vld [vmem:[#allocation7 + $0x38] sm:$0xff]
    %v594 = vld [vmem:[#allocation7 + $0x40] sm:$0xff]
    %v595 = vld [vmem:[#allocation7 + $0x48] sm:$0xff]
    %v596 = vld [vmem:[#allocation7 + $0x50] sm:$0xff]
    %v597 = vld [vmem:[#allocation7 + $0x58] sm:$0xff]
    %v598 = vld [vmem:[#allocation7 + $0x60] sm:$0xff]
    %v599 = vld [vmem:[#allocation7 + $0x68] sm:$0xff]
    %v600 = vld [vmem:[#allocation7 + $0x70] sm:$0xff]
    %v601 = vld [vmem:[#allocation7 + $0x78] sm:$0xff]
    %v602 = vld [vmem:[#allocation7 + $0x80] sm:$0xff]
    %v603 = vld [vmem:[#allocation7 + $0x88] sm:$0xff]
    %v604 = vld [vmem:[#allocation7 + $0x90] sm:$0xff]
    %v605 = vld [vmem:[#allocation7 + $0x98] sm:$0xff]
    %v606 = vld [vmem:[#allocation7 + $0xa0] sm:$0xff]
    %v607 = vld [vmem:[#allocation7 + $0xa8] sm:$0xff]
    %v608 = vld [vmem:[#allocation7 + $0xb0] sm:$0xff]
    %v609 = vld [vmem:[#allocation7 + $0xb8] sm:$0xff]
    %v610 = vld [vmem:[#allocation7 + $0xc0] sm:$0xff]
    %v611 = vld [vmem:[#allocation7 + $0xc8] sm:$0xff]
    %v612 = vld [vmem:[#allocation7 + $0xd0] sm:$0xff]
    %v613 = vld [vmem:[#allocation7 + $0xd8] sm:$0xff]
    %v614 = vld [vmem:[#allocation7 + $0xe0] sm:$0xff]
    %v615 = vld [vmem:[#allocation7 + $0xe8] sm:$0xff]
    %v616 = vld [vmem:[#allocation7 + $0xf0] sm:$0xff]
    %v617 = vld [vmem:[#allocation7 + $0xf8] sm:$0xff]
    %v618 = vld [vmem:[#allocation7 + $0x100] sm:$0xff]
    %v619 = vld [vmem:[#allocation7 + $0x108] sm:$0xff]
    %v620 = vld [vmem:[#allocation7 + $0x110] sm:$0xff]
    %v621 = vld [vmem:[#allocation7 + $0x118] sm:$0xff]
    %v622 = vld [vmem:[#allocation7 + $0x120] sm:$0xff]
    %v623 = vld [vmem:[#allocation7 + $0x128] sm:$0xff]
    %v624 = vld [vmem:[#allocation7 + $0x130] sm:$0xff]
    %v625 = vld [vmem:[#allocation7 + $0x138] sm:$0xff]
    %v626 = vld [vmem:[#allocation7 + $0x140] sm:$0xff]
    %v627 = vld [vmem:[#allocation7 + $0x148] sm:$0xff]
    %v628 = vld [vmem:[#allocation7 + $0x150] sm:$0xff]
    %v629 = vld [vmem:[#allocation7 + $0x158] sm:$0xff]
    %v630 = vld [vmem:[#allocation7 + $0x160] sm:$0xff]
    %v631 = vld [vmem:[#allocation7 + $0x168] sm:$0xff]
    %v632 = vld [vmem:[#allocation7 + $0x170] sm:$0xff]
    %v633 = vld [vmem:[#allocation7 + $0x178] sm:$0xff]
    %v634 = vld [vmem:[#allocation7 + $0x180] sm:$0xff]
    %v635 = vld [vmem:[#allocation7 + $0x188] sm:$0xff]
    %v636 = vld [vmem:[#allocation7 + $0x190] sm:$0xff]
    %v637 = vld [vmem:[#allocation7 + $0x198] sm:$0xff]
    %v638 = vld [vmem:[#allocation7 + $0x1a0] sm:$0xff]
    %v639 = vld [vmem:[#allocation7 + $0x1a8] sm:$0xff]
    %v640 = vld [vmem:[#allocation7 + $0x1b0] sm:$0xff]
    %v641 = vld [vmem:[#allocation7 + $0x1b8] sm:$0xff]
    %v642 = vld [vmem:[#allocation7 + $0x1c0] sm:$0xff]
    %v643 = vld [vmem:[#allocation7 + $0x1c8] sm:$0xff]
    %v644 = vld [vmem:[#allocation7 + $0x1d0] sm:$0xff]
    %v645 = vld [vmem:[#allocation7 + $0x1d8] sm:$0xff]
    %v646 = vld [vmem:[#allocation7 + $0x1e0] sm:$0xff]
    %v647 = vld [vmem:[#allocation7 + $0x1e8] sm:$0xff]
    %v648 = vld [vmem:[#allocation7 + $0x1f0] sm:$0xff]
    %v649 = vld [vmem:[#allocation7 + $0x1f8] sm:$0xff]
    %650 = vmatprep.subr.mxu0 %v587
    %651 = vmatpush1.msra.mxu0 %v586
    %652 = vmatprep.subr.mxu0 %v591
    %653 = vmatpush1.msra.mxu0 %v590
    %654 = vmatprep.subr.mxu0 %v595
    %655 = vmatpush1.msra.mxu0 %v594
    %656 = vmatprep.subr.mxu0 %v599
    %657 = vmatpush1.msra.mxu0 %v598
    %658 = vmatprep.subr.mxu0 %v603
    %659 = vmatpush1.msra.mxu0 %v602
    %660 = vmatprep.subr.mxu0 %v607
    %661 = vmatpush1.msra.mxu0 %v606
    %662 = vmatprep.subr.mxu0 %v611
    %663 = vmatpush1.msra.mxu0 %v610
    %664 = vmatprep.subr.mxu0 %v615
    %665 = vmatpush1.msra.mxu0 %v614
    %666 = vmatprep.subr.mxu0 %v619
    %667 = vmatpush1.msra.mxu0 %v618
    %668 = vmatprep.subr.mxu0 %v623
    %669 = vmatpush1.msra.mxu0 %v622
    %670 = vmatprep.subr.mxu0 %v627
    %671 = vmatpush1.msra.mxu0 %v626
    %672 = vmatprep.subr.mxu0 %v631
    %673 = vmatpush1.msra.mxu0 %v630
    %674 = vmatprep.subr.mxu0 %v635
    %675 = vmatpush1.msra.mxu0 %v634
    %676 = vmatprep.subr.mxu0 %v639
    %677 = vmatpush1.msra.mxu0 %v638
    %678 = vmatprep.subr.mxu0 %v643
    %679 = vmatpush1.msra.mxu0 %v642
    %680 = vmatprep.subr.mxu0 %v647
    %681 = vmatpush1.msra.mxu0 %v646
    %682 = vmatprep.subr.mxu0 0.0
    %683 = vmatpush1.msra.mxu0 0.0
    %684 = vmatprep.subr.mxu0 0.0
    %685 = vmatpush1.msra.mxu0 0.0
    %686 = vmatprep.subr.mxu0 0.0
    %687 = vmatpush1.msra.mxu0 0.0
    %688 = vmatprep.subr.mxu0 0.0
    %689 = vmatpush1.msra.mxu0 0.0
    %690 = vmatprep.subr.mxu0 0.0
    %691 = vmatpush1.msra.mxu0 0.0
    %692 = vmatprep.subr.mxu0 0.0
    %693 = vmatpush1.msra.mxu0 0.0
    %694 = vmatprep.subr.mxu0 0.0
    %695 = vmatpush1.msra.mxu0 0.0
    %696 = vmatprep.subr.mxu0 0.0
    %697 = vmatpush1.msra.mxu0 0.0
    %698 = vmatprep.subr.mxu0 0.0
    %699 = vmatpush1.msra.mxu0 0.0
    %700 = vmatprep.subr.mxu0 0.0
    %701 = vmatpush1.msra.mxu0 0.0
    %702 = vmatprep.subr.mxu0 0.0
    %703 = vmatpush1.msra.mxu0 0.0
    %704 = vmatprep.subr.mxu0 0.0
    %705 = vmatpush1.msra.mxu0 0.0
    %706 = vmatprep.subr.mxu0 0.0
    %707 = vmatpush1.msra.mxu0 0.0
    %708 = vmatprep.subr.mxu0 0.0
    %709 = vmatpush1.msra.mxu0 0.0
    %710 = vmatprep.subr.mxu0 0.0
    %711 = vmatpush1.msra.mxu0 0.0
    %712 = vmatprep.subr.mxu0 0.0
    %713 = vmatpush1.msra.mxu0 0.0
    %714 = vmatprep.mubr.f32.mxu0 0.0
    %715 = vmatmul.mubr.f32.gmra.mrb[0].mxu0 %v567
    %v716 = vpop.f32.mrb[0].mxu0
    %v717 = vadd.f32 0.0, %v716
    %v718 = vpop.f32.mrb[0].mxu0
    %v719 = vadd.f32 0.0, %v718
    %720 = vdwg.mxu0
    %721 = vmatprep.subr.mxu0 %v589
    %722 = vmatpush1.msra.mxu0 %v588
    %723 = vmatprep.subr.mxu0 %v593
    %724 = vmatpush1.msra.mxu0 %v592
    %725 = vmatprep.subr.mxu0 %v597
    %726 = vmatpush1.msra.mxu0 %v596
    %727 = vmatprep.subr.mxu0 %v601
    %728 = vmatpush1.msra.mxu0 %v600
    %729 = vmatprep.subr.mxu0 %v605
    %730 = vmatpush1.msra.mxu0 %v604
    %731 = vmatprep.subr.mxu0 %v609
    %732 = vmatpush1.msra.mxu0 %v608
    %733 = vmatprep.subr.mxu0 %v613
    %734 = vmatpush1.msra.mxu0 %v612
    %735 = vmatprep.subr.mxu0 %v617
    %736 = vmatpush1.msra.mxu0 %v616
    %737 = vmatprep.subr.mxu0 %v621
    %738 = vmatpush1.msra.mxu0 %v620
    %739 = vmatprep.subr.mxu0 %v625
    %740 = vmatpush1.msra.mxu0 %v624
    %741 = vmatprep.subr.mxu0 %v629
    %742 = vmatpush1.msra.mxu0 %v628
    %743 = vmatprep.subr.mxu0 %v633
    %744 = vmatpush1.msra.mxu0 %v632
    %745 = vmatprep.subr.mxu0 %v637
    %746 = vmatpush1.msra.mxu0 %v636
    %747 = vmatprep.subr.mxu0 %v641
    %748 = vmatpush1.msra.mxu0 %v640
    %749 = vmatprep.subr.mxu0 %v645
    %750 = vmatpush1.msra.mxu0 %v644
    %751 = vmatprep.subr.mxu0 %v649
    %752 = vmatpush1.msra.mxu0 %v648
    %753 = vmatprep.subr.mxu0 0.0
    %754 = vmatpush1.msra.mxu0 0.0
    %755 = vmatprep.subr.mxu0 0.0
    %756 = vmatpush1.msra.mxu0 0.0
    %757 = vmatprep.subr.mxu0 0.0
    %758 = vmatpush1.msra.mxu0 0.0
    %759 = vmatprep.subr.mxu0 0.0
    %760 = vmatpush1.msra.mxu0 0.0
    %761 = vmatprep.subr.mxu0 0.0
    %762 = vmatpush1.msra.mxu0 0.0
    %763 = vmatprep.subr.mxu0 0.0
    %764 = vmatpush1.msra.mxu0 0.0
    %765 = vmatprep.subr.mxu0 0.0
    %766 = vmatpush1.msra.mxu0 0.0
    %767 = vmatprep.subr.mxu0 0.0
    %768 = vmatpush1.msra.mxu0 0.0
    %769 = vmatprep.subr.mxu0 0.0
    %770 = vmatpush1.msra.mxu0 0.0
    %771 = vmatprep.subr.mxu0 0.0
    %772 = vmatpush1.msra.mxu0 0.0
    %773 = vmatprep.subr.mxu0 0.0
    %774 = vmatpush1.msra.mxu0 0.0
    %775 = vmatprep.subr.mxu0 0.0
    %776 = vmatpush1.msra.mxu0 0.0
    %777 = vmatprep.subr.mxu0 0.0
    %778 = vmatpush1.msra.mxu0 0.0
    %779 = vmatprep.subr.mxu0 0.0
    %780 = vmatpush1.msra.mxu0 0.0
    %781 = vmatprep.subr.mxu0 0.0
    %782 = vmatpush1.msra.mxu0 0.0
    %783 = vmatprep.subr.mxu0 0.0
    %784 = vmatpush1.msra.mxu0 0.0
    %785 = vmatprep.mubr.f32.mxu0 0.0
    %786 = vmatmul.mubr.f32.gmra.mrb[0].mxu0 %v567
    %v787 = vpop.f32.mrb[0].mxu0
    %v788 = vadd.f32 0.0, %v787
    %v789 = vpop.f32.mrb[0].mxu0
    %v790 = vadd.f32 0.0, %v789
    %791 = vdwg.mxu0
    %v792 = vadd.f32 %v582, %v717
    %v793 = vadd.f32 %v583, %v719
    %v794 = vadd.f32 %v584, %v788
    %v795 = vadd.f32 %v585, %v790
    %v796 = vxor.u32 %v792, 2147483648
    %v797 = vmul.f32 %v796, 1.442695
    %v798 = vpow.pop %v797
    %v799 = vadd.f32 %v798, 1.0
    %v800 = vrcp.pop %v799
    %v801 = vmul.f32 1.0, %v800
    %v802 = vxor.u32 %v793, 2147483648
    %v803 = vmul.f32 %v802, 1.442695
    %v804 = vpow.pop %v803
    %v805 = vadd.f32 %v804, 1.0
    %v806 = vrcp.pop %v805
    %v807 = vmul.f32 1.0, %v806
    %v808 = vtanh.pop %v794
    %v809 = vxor.u32 %v795, 2147483648
    %v810 = vmul.f32 %v809, 1.442695
    %v811 = vpow.pop %v810
    %v812 = vadd.f32 %v811, 1.0
    %v813 = vrcp.pop %v812
    %v814 = vmul.f32 1.0, %v813
    %v815 = vmul.f32 %v807, %v577
    %v816 = vmul.f32 %v801, %v808
    %v817 = vadd.f32 %v815, %v816
    %v818 = vtanh.pop %v817
    %v819 = vmul.f32 %v814, %v818
    %s820 = scalar_lea.vmem [#allocation5], 192
    %v821 = vld [vmem:[%s820] sm:$0xff]
    %v822 = vld [vmem:[%s820 + $0x8] sm:$0xff]
    %v823 = vld [vmem:[%s820 + $0x10] sm:$0xff]
    %v824 = vld [vmem:[%s820 + $0x18] sm:$0xff]
    %v825 = vld [vmem:[#allocation8] sm:$0xff]
    %v826 = vld [vmem:[#allocation8 + $0x8] sm:$0xff]
    %v827 = vld [vmem:[#allocation8 + $0x10] sm:$0xff]
    %v828 = vld [vmem:[#allocation8 + $0x18] sm:$0xff]
    %v829 = vld [vmem:[#allocation8 + $0x20] sm:$0xff]
    %v830 = vld [vmem:[#allocation8 + $0x28] sm:$0xff]
    %v831 = vld [vmem:[#allocation8 + $0x30] sm:$0xff]
    %v832 = vld [vmem:[#allocation8 + $0x38] sm:$0xff]
    %v833 = vld [vmem:[#allocation8 + $0x40] sm:$0xff]
    %v834 = vld [vmem:[#allocation8 + $0x48] sm:$0xff]
    %v835 = vld [vmem:[#allocation8 + $0x50] sm:$0xff]
    %v836 = vld [vmem:[#allocation8 + $0x58] sm:$0xff]
    %v837 = vld [vmem:[#allocation8 + $0x60] sm:$0xff]
    %v838 = vld [vmem:[#allocation8 + $0x68] sm:$0xff]
    %v839 = vld [vmem:[#allocation8 + $0x70] sm:$0xff]
    %v840 = vld [vmem:[#allocation8 + $0x78] sm:$0xff]
    %v841 = vld [vmem:[#allocation8 + $0x80] sm:$0xff]
    %v842 = vld [vmem:[#allocation8 + $0x88] sm:$0xff]
    %v843 = vld [vmem:[#allocation8 + $0x90] sm:$0xff]
    %v844 = vld [vmem:[#allocation8 + $0x98] sm:$0xff]
    %v845 = vld [vmem:[#allocation8 + $0xa0] sm:$0xff]
    %v846 = vld [vmem:[#allocation8 + $0xa8] sm:$0xff]
    %v847 = vld [vmem:[#allocation8 + $0xb0] sm:$0xff]
    %v848 = vld [vmem:[#allocation8 + $0xb8] sm:$0xff]
    %v849 = vld [vmem:[#allocation8 + $0xc0] sm:$0xff]
    %v850 = vld [vmem:[#allocation8 + $0xc8] sm:$0xff]
    %v851 = vld [vmem:[#allocation8 + $0xd0] sm:$0xff]
    %v852 = vld [vmem:[#allocation8 + $0xd8] sm:$0xff]
    %v853 = vld [vmem:[#allocation8 + $0xe0] sm:$0xff]
    %v854 = vld [vmem:[#allocation8 + $0xe8] sm:$0xff]
    %v855 = vld [vmem:[#allocation8 + $0xf0] sm:$0xff]
    %v856 = vld [vmem:[#allocation8 + $0xf8] sm:$0xff]
    %v857 = vld [vmem:[#allocation8 + $0x100] sm:$0xff]
    %v858 = vld [vmem:[#allocation8 + $0x108] sm:$0xff]
    %v859 = vld [vmem:[#allocation8 + $0x110] sm:$0xff]
    %v860 = vld [vmem:[#allocation8 + $0x118] sm:$0xff]
    %v861 = vld [vmem:[#allocation8 + $0x120] sm:$0xff]
    %v862 = vld [vmem:[#allocation8 + $0x128] sm:$0xff]
    %v863 = vld [vmem:[#allocation8 + $0x130] sm:$0xff]
    %v864 = vld [vmem:[#allocation8 + $0x138] sm:$0xff]
    %v865 = vld [vmem:[#allocation8 + $0x140] sm:$0xff]
    %v866 = vld [vmem:[#allocation8 + $0x148] sm:$0xff]
    %v867 = vld [vmem:[#allocation8 + $0x150] sm:$0xff]
    %v868 = vld [vmem:[#allocation8 + $0x158] sm:$0xff]
    %v869 = vld [vmem:[#allocation8 + $0x160] sm:$0xff]
    %v870 = vld [vmem:[#allocation8 + $0x168] sm:$0xff]
    %v871 = vld [vmem:[#allocation8 + $0x170] sm:$0xff]
    %v872 = vld [vmem:[#allocation8 + $0x178] sm:$0xff]
    %v873 = vld [vmem:[#allocation8 + $0x180] sm:$0xff]
    %v874 = vld [vmem:[#allocation8 + $0x188] sm:$0xff]
    %v875 = vld [vmem:[#allocation8 + $0x190] sm:$0xff]
    %v876 = vld [vmem:[#allocation8 + $0x198] sm:$0xff]
    %v877 = vld [vmem:[#allocation8 + $0x1a0] sm:$0xff]
    %v878 = vld [vmem:[#allocation8 + $0x1a8] sm:$0xff]
    %v879 = vld [vmem:[#allocation8 + $0x1b0] sm:$0xff]
    %v880 = vld [vmem:[#allocation8 + $0x1b8] sm:$0xff]
    %v881 = vld [vmem:[#allocation8 + $0x1c0] sm:$0xff]
    %v882 = vld [vmem:[#allocation8 + $0x1c8] sm:$0xff]
    %v883 = vld [vmem:[#allocation8 + $0x1d0] sm:$0xff]
    %v884 = vld [vmem:[#allocation8 + $0x1d8] sm:$0xff]
    %v885 = vld [vmem:[#allocation8 + $0x1e0] sm:$0xff]
    %v886 = vld [vmem:[#allocation8 + $0x1e8] sm:$0xff]
    %v887 = vld [vmem:[#allocation8 + $0x1f0] sm:$0xff]
    %v888 = vld [vmem:[#allocation8 + $0x1f8] sm:$0xff]
    %889 = vmatprep.subr.mxu0 %v826
    %890 = vmatpush1.msra.mxu0 %v825
    %891 = vmatprep.subr.mxu0 %v830
    %892 = vmatpush1.msra.mxu0 %v829
    %893 = vmatprep.subr.mxu0 %v834
    %894 = vmatpush1.msra.mxu0 %v833
    %895 = vmatprep.subr.mxu0 %v838
    %896 = vmatpush1.msra.mxu0 %v837
    %897 = vmatprep.subr.mxu0 %v842
    %898 = vmatpush1.msra.mxu0 %v841
    %899 = vmatprep.subr.mxu0 %v846
    %900 = vmatpush1.msra.mxu0 %v845
    %901 = vmatprep.subr.mxu0 %v850
    %902 = vmatpush1.msra.mxu0 %v849
    %903 = vmatprep.subr.mxu0 %v854
    %904 = vmatpush1.msra.mxu0 %v853
    %905 = vmatprep.subr.mxu0 %v858
    %906 = vmatpush1.msra.mxu0 %v857
    %907 = vmatprep.subr.mxu0 %v862
    %908 = vmatpush1.msra.mxu0 %v861
    %909 = vmatprep.subr.mxu0 %v866
    %910 = vmatpush1.msra.mxu0 %v865
    %911 = vmatprep.subr.mxu0 %v870
    %912 = vmatpush1.msra.mxu0 %v869
    %913 = vmatprep.subr.mxu0 %v874
    %914 = vmatpush1.msra.mxu0 %v873
    %915 = vmatprep.subr.mxu0 %v878
    %916 = vmatpush1.msra.mxu0 %v877
    %917 = vmatprep.subr.mxu0 %v882
    %918 = vmatpush1.msra.mxu0 %v881
    %919 = vmatprep.subr.mxu0 %v886
    %920 = vmatpush1.msra.mxu0 %v885
    %921 = vmatprep.subr.mxu0 0.0
    %922 = vmatpush1.msra.mxu0 0.0
    %923 = vmatprep.subr.mxu0 0.0
    %924 = vmatpush1.msra.mxu0 0.0
    %925 = vmatprep.subr.mxu0 0.0
    %926 = vmatpush1.msra.mxu0 0.0
    %927 = vmatprep.subr.mxu0 0.0
    %928 = vmatpush1.msra.mxu0 0.0
    %929 = vmatprep.subr.mxu0 0.0
    %930 = vmatpush1.msra.mxu0 0.0
    %931 = vmatprep.subr.mxu0 0.0
    %932 = vmatpush1.msra.mxu0 0.0
    %933 = vmatprep.subr.mxu0 0.0
    %934 = vmatpush1.msra.mxu0 0.0
    %935 = vmatprep.subr.mxu0 0.0
    %936 = vmatpush1.msra.mxu0 0.0
    %937 = vmatprep.subr.mxu0 0.0
    %938 = vmatpush1.msra.mxu0 0.0
    %939 = vmatprep.subr.mxu0 0.0
    %940 = vmatpush1.msra.mxu0 0.0
    %941 = vmatprep.subr.mxu0 0.0
    %942 = vmatpush1.msra.mxu0 0.0
    %943 = vmatprep.subr.mxu0 0.0
    %944 = vmatpush1.msra.mxu0 0.0
    %945 = vmatprep.subr.mxu0 0.0
    %946 = vmatpush1.msra.mxu0 0.0
    %947 = vmatprep.subr.mxu0 0.0
    %948 = vmatpush1.msra.mxu0 0.0
    %949 = vmatprep.subr.mxu0 0.0
    %950 = vmatpush1.msra.mxu0 0.0
    %951 = vmatprep.subr.mxu0 0.0
    %952 = vmatpush1.msra.mxu0 0.0
    %953 = vmatprep.mubr.f32.mxu0 0.0
    %954 = vmatmul.mubr.f32.gmra.mrb[0].mxu0 %v574
    %v955 = vpop.f32.mrb[0].mxu0
    %v956 = vadd.f32 0.0, %v955
    %v957 = vpop.f32.mrb[0].mxu0
    %v958 = vadd.f32 0.0, %v957
    %959 = vdwg.mxu0
    %960 = vmatprep.subr.mxu0 %v828
    %961 = vmatpush1.msra.mxu0 %v827
    %962 = vmatprep.subr.mxu0 %v832
    %963 = vmatpush1.msra.mxu0 %v831
    %964 = vmatprep.subr.mxu0 %v836
    %965 = vmatpush1.msra.mxu0 %v835
    %966 = vmatprep.subr.mxu0 %v840
    %967 = vmatpush1.msra.mxu0 %v839
    %968 = vmatprep.subr.mxu0 %v844
    %969 = vmatpush1.msra.mxu0 %v843
    %970 = vmatprep.subr.mxu0 %v848
    %971 = vmatpush1.msra.mxu0 %v847
    %972 = vmatprep.subr.mxu0 %v852
    %973 = vmatpush1.msra.mxu0 %v851
    %974 = vmatprep.subr.mxu0 %v856
    %975 = vmatpush1.msra.mxu0 %v855
    %976 = vmatprep.subr.mxu0 %v860
    %977 = vmatpush1.msra.mxu0 %v859
    %978 = vmatprep.subr.mxu0 %v864
    %979 = vmatpush1.msra.mxu0 %v863
    %980 = vmatprep.subr.mxu0 %v868
    %981 = vmatpush1.msra.mxu0 %v867
    %982 = vmatprep.subr.mxu0 %v872
    %983 = vmatpush1.msra.mxu0 %v871
    %984 = vmatprep.subr.mxu0 %v876
    %985 = vmatpush1.msra.mxu0 %v875
    %986 = vmatprep.subr.mxu0 %v880
    %987 = vmatpush1.msra.mxu0 %v879
    %988 = vmatprep.subr.mxu0 %v884
    %989 = vmatpush1.msra.mxu0 %v883
    %990 = vmatprep.subr.mxu0 %v888
    %991 = vmatpush1.msra.mxu0 %v887
    %992 = vmatprep.subr.mxu0 0.0
    %993 = vmatpush1.msra.mxu0 0.0
    %994 = vmatprep.subr.mxu0 0.0
    %995 = vmatpush1.msra.mxu0 0.0
    %996 = vmatprep.subr.mxu0 0.0
    %997 = vmatpush1.msra.mxu0 0.0
    %998 = vmatprep.subr.mxu0 0.0
    %999 = vmatpush1.msra.mxu0 0.0
    %1000 = vmatprep.subr.mxu0 0.0
    %1001 = vmatpush1.msra.mxu0 0.0
    %1002 = vmatprep.subr.mxu0 0.0
    %1003 = vmatpush1.msra.mxu0 0.0
    %1004 = vmatprep.subr.mxu0 0.0
    %1005 = vmatpush1.msra.mxu0 0.0
    %1006 = vmatprep.subr.mxu0 0.0
    %1007 = vmatpush1.msra.mxu0 0.0
    %1008 = vmatprep.subr.mxu0 0.0
    %1009 = vmatpush1.msra.mxu0 0.0
    %1010 = vmatprep.subr.mxu0 0.0
    %1011 = vmatpush1.msra.mxu0 0.0
    %1012 = vmatprep.subr.mxu0 0.0
    %1013 = vmatpush1.msra.mxu0 0.0
    %1014 = vmatprep.subr.mxu0 0.0
    %1015 = vmatpush1.msra.mxu0 0.0
    %1016 = vmatprep.subr.mxu0 0.0
    %1017 = vmatpush1.msra.mxu0 0.0
    %1018 = vmatprep.subr.mxu0 0.0
    %1019 = vmatpush1.msra.mxu0 0.0
    %1020 = vmatprep.subr.mxu0 0.0
    %1021 = vmatpush1.msra.mxu0 0.0
    %1022 = vmatprep.subr.mxu0 0.0
    %1023 = vmatpush1.msra.mxu0 0.0
    %1024 = vmatprep.mubr.f32.mxu0 0.0
    %1025 = vmatmul.mubr.f32.gmra.mrb[0].mxu0 %v574
    %v1026 = vpop.f32.mrb[0].mxu0
    %v1027 = vadd.f32 0.0, %v1026
    %v1028 = vpop.f32.mrb[0].mxu0
    %v1029 = vadd.f32 0.0, %v1028
    %1030 = vdwg.mxu0
    %v1031 = vadd.f32 %v821, %v956
    %v1032 = vadd.f32 %v822, %v958
    %v1033 = vadd.f32 %v823, %v1027
    %v1034 = vadd.f32 %v824, %v1029
    %v1035 = vxor.u32 %v1031, 2147483648
    %v1036 = vmul.f32 %v1035, 1.442695
    %v1037 = vpow.pop %v1036
    %v1038 = vadd.f32 %v1037, 1.0
    %v1039 = vrcp.pop %v1038
    %v1040 = vmul.f32 1.0, %v1039
    %v1041 = vxor.u32 %v1032, 2147483648
    %v1042 = vmul.f32 %v1041, 1.442695
    %v1043 = vpow.pop %v1042
    %v1044 = vadd.f32 %v1043, 1.0
    %v1045 = vrcp.pop %v1044
    %v1046 = vmul.f32 1.0, %v1045
    %v1047 = vtanh.pop %v1033
    %v1048 = vxor.u32 %v1034, 2147483648
    %v1049 = vmul.f32 %v1048, 1.442695
    %v1050 = vpow.pop %v1049
    %v1051 = vadd.f32 %v1050, 1.0
    %v1052 = vrcp.pop %v1051
    %v1053 = vmul.f32 1.0, %v1052
    %v1054 = vmul.f32 %v1046, %v578
    %v1055 = vmul.f32 %v1040, %v1047
    %v1056 = vadd.f32 %v1054, %v1055
    %v1057 = vtanh.pop %v1056
    %v1058 = vmul.f32 %v1053, %v1057
    %v1059 = vsel %vm579, 1, 0
    %1060 = vset.pattern.permute.xlu0 0
    %1061 = vperm.xlu0 %1060, %v1059
    %v1062 = vpop.permute.xlu0 %1061
    %vm1063 = vcmp.eq.s32.totalorder %v1062, 1
    %v1064 = vsel %vm1063, %v819, 0.0
    %s1065 = scalar_lea.vmem [#allocation10], 8
    %1066 = vst [vmem:[%s1065] sm:$0xff] %v1064
    %v1067 = vsel %vm580, 1, 0
    %1068 = vset.pattern.permute.xlu0 0
    %1069 = vperm.xlu0 %1068, %v1067
    %v1070 = vpop.permute.xlu0 %1069
    %vm1071 = vcmp.eq.s32.totalorder %v1070, 1
    %v1072 = vsel %vm1071, %v1058, 0.0
    %s1073 = scalar_lea.vmem [#allocation11], 48
    %1074 = vst [vmem:[%s1073] sm:$0xff] %v1072
    %v1075 = vsel %vm1063, %v819, %v567
    %v1076 = vsel %vm1063, %v817, %v577
    %v1077 = vsel %vm1071, %v1058, %v574
    %v1078 = vsel %vm1071, %v1056, %v578
    %vm1079 = vcmp.gt.s32.totalorder %v82, 2
    %vm1080 = vcmp.gt.s32.totalorder %v82, 5
    %s1081 = scalar_lea.vmem [#allocation2], 64
    %v1082 = vld [vmem:[%s1081] sm:$0xff]
    %v1083 = vld [vmem:[%s1081 + $0x8] sm:$0xff]
    %v1084 = vld [vmem:[%s1081 + $0x10] sm:$0xff]
    %v1085 = vld [vmem:[%s1081 + $0x18] sm:$0xff]
    %v1086 = vld [vmem:[#allocation7] sm:$0xff]
    %v1087 = vld [vmem:[#allocation7 + $0x8] sm:$0xff]
    %v1088 = vld [vmem:[#allocation7 + $0x10] sm:$0xff]
    %v1089 = vld [vmem:[#allocation7 + $0x18] sm:$0xff]
    %v1090 = vld [vmem:[#allocation7 + $0x20] sm:$0xff]
    %v1091 = vld [vmem:[#allocation7 + $0x28] sm:$0xff]
    %v1092 = vld [vmem:[#allocation7 + $0x30] sm:$0xff]
    %v1093 = vld [vmem:[#allocation7 + $0x38] sm:$0xff]
    %v1094 = vld [vmem:[#allocation7 + $0x40] sm:$0xff]
    %v1095 = vld [vmem:[#allocation7 + $0x48] sm:$0xff]
    %v1096 = vld [vmem:[#allocation7 + $0x50] sm:$0xff]
    %v1097 = vld [vmem:[#allocation7 + $0x58] sm:$0xff]
    %v1098 = vld [vmem:[#allocation7 + $0x60] sm:$0xff]
    %v1099 = vld [vmem:[#allocation7 + $0x68] sm:$0xff]
    %v1100 = vld [vmem:[#allocation7 + $0x70] sm:$0xff]
    %v1101 = vld [vmem:[#allocation7 + $0x78] sm:$0xff]
    %v1102 = vld [vmem:[#allocation7 + $0x80] sm:$0xff]
    %v1103 = vld [vmem:[#allocation7 + $0x88] sm:$0xff]
    %v1104 = vld [vmem:[#allocation7 + $0x90] sm:$0xff]
    %v1105 = vld [vmem:[#allocation7 + $0x98] sm:$0xff]
    %v1106 = vld [vmem:[#allocation7 + $0xa0] sm:$0xff]
    %v1107 = vld [vmem:[#allocation7 + $0xa8] sm:$0xff]
    %v1108 = vld [vmem:[#allocation7 + $0xb0] sm:$0xff]
    %v1109 = vld [vmem:[#allocation7 + $0xb8] sm:$0xff]
    %v1110 = vld [vmem:[#allocation7 + $0xc0] sm:$0xff]
    %v1111 = vld [vmem:[#allocation7 + $0xc8] sm:$0xff]
    %v1112 = vld [vmem:[#allocation7 + $0xd0] sm:$0xff]
    %v1113 = vld [vmem:[#allocation7 + $0xd8] sm:$0xff]
    %v1114 = vld [vmem:[#allocation7 + $0xe0] sm:$0xff]
    %v1115 = vld [vmem:[#allocation7 + $0xe8] sm:$0xff]
    %v1116 = vld [vmem:[#allocation7 + $0xf0] sm:$0xff]
    %v1117 = vld [vmem:[#allocation7 + $0xf8] sm:$0xff]
    %v1118 = vld [vmem:[#allocation7 + $0x100] sm:$0xff]
    %v1119 = vld [vmem:[#allocation7 + $0x108] sm:$0xff]
    %v1120 = vld [vmem:[#allocation7 + $0x110] sm:$0xff]
    %v1121 = vld [vmem:[#allocation7 + $0x118] sm:$0xff]
    %v1122 = vld [vmem:[#allocation7 + $0x120] sm:$0xff]
    %v1123 = vld [vmem:[#allocation7 + $0x128] sm:$0xff]
    %v1124 = vld [vmem:[#allocation7 + $0x130] sm:$0xff]
    %v1125 = vld [vmem:[#allocation7 + $0x138] sm:$0xff]
    %v1126 = vld [vmem:[#allocation7 + $0x140] sm:$0xff]
    %v1127 = vld [vmem:[#allocation7 + $0x148] sm:$0xff]
    %v1128 = vld [vmem:[#allocation7 + $0x150] sm:$0xff]
    %v1129 = vld [vmem:[#allocation7 + $0x158] sm:$0xff]
    %v1130 = vld [vmem:[#allocation7 + $0x160] sm:$0xff]
    %v1131 = vld [vmem:[#allocation7 + $0x168] sm:$0xff]
    %v1132 = vld [vmem:[#allocation7 + $0x170] sm:$0xff]
    %v1133 = vld [vmem:[#allocation7 + $0x178] sm:$0xff]
    %v1134 = vld [vmem:[#allocation7 + $0x180] sm:$0xff]
    %v1135 = vld [vmem:[#allocation7 + $0x188] sm:$0xff]
    %v1136 = vld [vmem:[#allocation7 + $0x190] sm:$0xff]
    %v1137 = vld [vmem:[#allocation7 + $0x198] sm:$0xff]
    %v1138 = vld [vmem:[#allocation7 + $0x1a0] sm:$0xff]
    %v1139 = vld [vmem:[#allocation7 + $0x1a8] sm:$0xff]
    %v1140 = vld [vmem:[#allocation7 + $0x1b0] sm:$0xff]
    %v1141 = vld [vmem:[#allocation7 + $0x1b8] sm:$0xff]
    %v1142 = vld [vmem:[#allocation7 + $0x1c0] sm:$0xff]
    %v1143 = vld [vmem:[#allocation7 + $0x1c8] sm:$0xff]
    %v1144 = vld [vmem:[#allocation7 + $0x1d0] sm:$0xff]
    %v1145 = vld [vmem:[#allocation7 + $0x1d8] sm:$0xff]
    %v1146 = vld [vmem:[#allocation7 + $0x1e0] sm:$0xff]
    %v1147 = vld [vmem:[#allocation7 + $0x1e8] sm:$0xff]
    %v1148 = vld [vmem:[#allocation7 + $0x1f0] sm:$0xff]
    %v1149 = vld [vmem:[#allocation7 + $0x1f8] sm:$0xff]
    %1150 = vmatprep.subr.mxu0 %v1087
    %1151 = vmatpush1.msra.mxu0 %v1086
    %1152 = vmatprep.subr.mxu0 %v1091
    %1153 = vmatpush1.msra.mxu0 %v1090
    %1154 = vmatprep.subr.mxu0 %v1095
    %1155 = vmatpush1.msra.mxu0 %v1094
    %1156 = vmatprep.subr.mxu0 %v1099
    %1157 = vmatpush1.msra.mxu0 %v1098
    %1158 = vmatprep.subr.mxu0 %v1103
    %1159 = vmatpush1.msra.mxu0 %v1102
    %1160 = vmatprep.subr.mxu0 %v1107
    %1161 = vmatpush1.msra.mxu0 %v1106
    %1162 = vmatprep.subr.mxu0 %v1111
    %1163 = vmatpush1.msra.mxu0 %v1110
    %1164 = vmatprep.subr.mxu0 %v1115
    %1165 = vmatpush1.msra.mxu0 %v1114
    %1166 = vmatprep.subr.mxu0 %v1119
    %1167 = vmatpush1.msra.mxu0 %v1118
    %1168 = vmatprep.subr.mxu0 %v1123
    %1169 = vmatpush1.msra.mxu0 %v1122
    %1170 = vmatprep.subr.mxu0 %v1127
    %1171 = vmatpush1.msra.mxu0 %v1126
    %1172 = vmatprep.subr.mxu0 %v1131
    %1173 = vmatpush1.msra.mxu0 %v1130
    %1174 = vmatprep.subr.mxu0 %v1135
    %1175 = vmatpush1.msra.mxu0 %v1134
    %1176 = vmatprep.subr.mxu0 %v1139
    %1177 = vmatpush1.msra.mxu0 %v1138
    %1178 = vmatprep.subr.mxu0 %v1143
    %1179 = vmatpush1.msra.mxu0 %v1142
    %1180 = vmatprep.subr.mxu0 %v1147
    %1181 = vmatpush1.msra.mxu0 %v1146
    %1182 = vmatprep.subr.mxu0 0.0
    %1183 = vmatpush1.msra.mxu0 0.0
    %1184 = vmatprep.subr.mxu0 0.0
    %1185 = vmatpush1.msra.mxu0 0.0
    %1186 = vmatprep.subr.mxu0 0.0
    %1187 = vmatpush1.msra.mxu0 0.0
    %1188 = vmatprep.subr.mxu0 0.0
    %1189 = vmatpush1.msra.mxu0 0.0
    %1190 = vmatprep.subr.mxu0 0.0
    %1191 = vmatpush1.msra.mxu0 0.0
    %1192 = vmatprep.subr.mxu0 0.0
    %1193 = vmatpush1.msra.mxu0 0.0
    %1194 = vmatprep.subr.mxu0 0.0
    %1195 = vmatpush1.msra.mxu0 0.0
    %1196 = vmatprep.subr.mxu0 0.0
    %1197 = vmatpush1.msra.mxu0 0.0
    %1198 = vmatprep.subr.mxu0 0.0
    %1199 = vmatpush1.msra.mxu0 0.0
    %1200 = vmatprep.subr.mxu0 0.0
    %1201 = vmatpush1.msra.mxu0 0.0
    %1202 = vmatprep.subr.mxu0 0.0
    %1203 = vmatpush1.msra.mxu0 0.0
    %1204 = vmatprep.subr.mxu0 0.0
    %1205 = vmatpush1.msra.mxu0 0.0
    %1206 = vmatprep.subr.mxu0 0.0
    %1207 = vmatpush1.msra.mxu0 0.0
    %1208 = vmatprep.subr.mxu0 0.0
    %1209 = vmatpush1.msra.mxu0 0.0
    %1210 = vmatprep.subr.mxu0 0.0
    %1211 = vmatpush1.msra.mxu0 0.0
    %1212 = vmatprep.subr.mxu0 0.0
    %1213 = vmatpush1.msra.mxu0 0.0
    %1214 = vmatprep.mubr.f32.mxu0 0.0
    %1215 = vmatmul.mubr.f32.gmra.mrb[0].mxu0 %v1075
    %v1216 = vpop.f32.mrb[0].mxu0
    %v1217 = vadd.f32 0.0, %v1216
    %v1218 = vpop.f32.mrb[0].mxu0
    %v1219 = vadd.f32 0.0, %v1218
    %1220 = vdwg.mxu0
    %1221 = vmatprep.subr.mxu0 %v1089
    %1222 = vmatpush1.msra.mxu0 %v1088
    %1223 = vmatprep.subr.mxu0 %v1093
    %1224 = vmatpush1.msra.mxu0 %v1092
    %1225 = vmatprep.subr.mxu0 %v1097
    %1226 = vmatpush1.msra.mxu0 %v1096
    %1227 = vmatprep.subr.mxu0 %v1101
    %1228 = vmatpush1.msra.mxu0 %v1100
    %1229 = vmatprep.subr.mxu0 %v1105
    %1230 = vmatpush1.msra.mxu0 %v1104
    %1231 = vmatprep.subr.mxu0 %v1109
    %1232 = vmatpush1.msra.mxu0 %v1108
    %1233 = vmatprep.subr.mxu0 %v1113
    %1234 = vmatpush1.msra.mxu0 %v1112
    %1235 = vmatprep.subr.mxu0 %v1117
    %1236 = vmatpush1.msra.mxu0 %v1116
    %1237 = vmatprep.subr.mxu0 %v1121
    %1238 = vmatpush1.msra.mxu0 %v1120
    %1239 = vmatprep.subr.mxu0 %v1125
    %1240 = vmatpush1.msra.mxu0 %v1124
    %1241 = vmatprep.subr.mxu0 %v1129
    %1242 = vmatpush1.msra.mxu0 %v1128
    %1243 = vmatprep.subr.mxu0 %v1133
    %1244 = vmatpush1.msra.mxu0 %v1132
    %1245 = vmatprep.subr.mxu0 %v1137
    %1246 = vmatpush1.msra.mxu0 %v1136
    %1247 = vmatprep.subr.mxu0 %v1141
    %1248 = vmatpush1.msra.mxu0 %v1140
    %1249 = vmatprep.subr.mxu0 %v1145
    %1250 = vmatpush1.msra.mxu0 %v1144
    %1251 = vmatprep.subr.mxu0 %v1149
    %1252 = vmatpush1.msra.mxu0 %v1148
    %1253 = vmatprep.subr.mxu0 0.0
    %1254 = vmatpush1.msra.mxu0 0.0
    %1255 = vmatprep.subr.mxu0 0.0
    %1256 = vmatpush1.msra.mxu0 0.0
    %1257 = vmatprep.subr.mxu0 0.0
    %1258 = vmatpush1.msra.mxu0 0.0
    %1259 = vmatprep.subr.mxu0 0.0
    %1260 = vmatpush1.msra.mxu0 0.0
    %1261 = vmatprep.subr.mxu0 0.0
    %1262 = vmatpush1.msra.mxu0 0.0
    %1263 = vmatprep.subr.mxu0 0.0
    %1264 = vmatpush1.msra.mxu0 0.0
    %1265 = vmatprep.subr.mxu0 0.0
    %1266 = vmatpush1.msra.mxu0 0.0
    %1267 = vmatprep.subr.mxu0 0.0
    %1268 = vmatpush1.msra.mxu0 0.0
    %1269 = vmatprep.subr.mxu0 0.0
    %1270 = vmatpush1.msra.mxu0 0.0
    %1271 = vmatprep.subr.mxu0 0.0
    %1272 = vmatpush1.msra.mxu0 0.0
    %1273 = vmatprep.subr.mxu0 0.0
    %1274 = vmatpush1.msra.mxu0 0.0
    %1275 = vmatprep.subr.mxu0 0.0
    %1276 = vmatpush1.msra.mxu0 0.0
    %1277 = vmatprep.subr.mxu0 0.0
    %1278 = vmatpush1.msra.mxu0 0.0
    %1279 = vmatprep.subr.mxu0 0.0
    %1280 = vmatpush1.msra.mxu0 0.0
    %1281 = vmatprep.subr.mxu0 0.0
    %1282 = vmatpush1.msra.mxu0 0.0
    %1283 = vmatprep.subr.mxu0 0.0
    %1284 = vmatpush1.msra.mxu0 0.0
    %1285 = vmatprep.mubr.f32.mxu0 0.0
    %1286 = vmatmul.mubr.f32.gmra.mrb[0].mxu0 %v1075
    %v1287 = vpop.f32.mrb[0].mxu0
    %v1288 = vadd.f32 0.0, %v1287
    %v1289 = vpop.f32.mrb[0].mxu0
    %v1290 = vadd.f32 0.0, %v1289
    %1291 = vdwg.mxu0
    %v1292 = vadd.f32 %v1082, %v1217
    %v1293 = vadd.f32 %v1083, %v1219
    %v1294 = vadd.f32 %v1084, %v1288
    %v1295 = vadd.f32 %v1085, %v1290
    %v1296 = vxor.u32 %v1292, 2147483648
    %v1297 = vmul.f32 %v1296, 1.442695
    %v1298 = vpow.pop %v1297
    %v1299 = vadd.f32 %v1298, 1.0
    %v1300 = vrcp.pop %v1299
    %v1301 = vmul.f32 1.0, %v1300
    %v1302 = vxor.u32 %v1293, 2147483648
    %v1303 = vmul.f32 %v1302, 1.442695
    %v1304 = vpow.pop %v1303
    %v1305 = vadd.f32 %v1304, 1.0
    %v1306 = vrcp.pop %v1305
    %v1307 = vmul.f32 1.0, %v1306
    %v1308 = vtanh.pop %v1294
    %v1309 = vxor.u32 %v1295, 2147483648
    %v1310 = vmul.f32 %v1309, 1.442695
    %v1311 = vpow.pop %v1310
    %v1312 = vadd.f32 %v1311, 1.0
    %v1313 = vrcp.pop %v1312
    %v1314 = vmul.f32 1.0, %v1313
    %v1315 = vmul.f32 %v1307, %v1076
    %v1316 = vmul.f32 %v1301, %v1308
    %v1317 = vadd.f32 %v1315, %v1316
    %v1318 = vtanh.pop %v1317
    %v1319 = vmul.f32 %v1314, %v1318
    %s1320 = scalar_lea.vmem [#allocation5], 160
    %v1321 = vld [vmem:[%s1320] sm:$0xff]
    %v1322 = vld [vmem:[%s1320 + $0x8] sm:$0xff]
    %v1323 = vld [vmem:[%s1320 + $0x10] sm:$0xff]
    %v1324 = vld [vmem:[%s1320 + $0x18] sm:$0xff]
    %v1325 = vld [vmem:[#allocation8] sm:$0xff]
    %v1326 = vld [vmem:[#allocation8 + $0x8] sm:$0xff]
    %v1327 = vld [vmem:[#allocation8 + $0x10] sm:$0xff]
    %v1328 = vld [vmem:[#allocation8 + $0x18] sm:$0xff]
    %v1329 = vld [vmem:[#allocation8 + $0x20] sm:$0xff]
    %v1330 = vld [vmem:[#allocation8 + $0x28] sm:$0xff]
    %v1331 = vld [vmem:[#allocation8 + $0x30] sm:$0xff]
    %v1332 = vld [vmem:[#allocation8 + $0x38] sm:$0xff]
    %v1333 = vld [vmem:[#allocation8 + $0x40] sm:$0xff]
    %v1334 = vld [vmem:[#allocation8 + $0x48] sm:$0xff]
    %v1335 = vld [vmem:[#allocation8 + $0x50] sm:$0xff]
    %v1336 = vld [vmem:[#allocation8 + $0x58] sm:$0xff]
    %v1337 = vld [vmem:[#allocation8 + $0x60] sm:$0xff]
    %v1338 = vld [vmem:[#allocation8 + $0x68] sm:$0xff]
    %v1339 = vld [vmem:[#allocation8 + $0x70] sm:$0xff]
    %v1340 = vld [vmem:[#allocation8 + $0x78] sm:$0xff]
    %v1341 = vld [vmem:[#allocation8 + $0x80] sm:$0xff]
    %v1342 = vld [vmem:[#allocation8 + $0x88] sm:$0xff]
    %v1343 = vld [vmem:[#allocation8 + $0x90] sm:$0xff]
    %v1344 = vld [vmem:[#allocation8 + $0x98] sm:$0xff]
    %v1345 = vld [vmem:[#allocation8 + $0xa0] sm:$0xff]
    %v1346 = vld [vmem:[#allocation8 + $0xa8] sm:$0xff]
    %v1347 = vld [vmem:[#allocation8 + $0xb0] sm:$0xff]
    %v1348 = vld [vmem:[#allocation8 + $0xb8] sm:$0xff]
    %v1349 = vld [vmem:[#allocation8 + $0xc0] sm:$0xff]
    %v1350 = vld [vmem:[#allocation8 + $0xc8] sm:$0xff]
    %v1351 = vld [vmem:[#allocation8 + $0xd0] sm:$0xff]
    %v1352 = vld [vmem:[#allocation8 + $0xd8] sm:$0xff]
    %v1353 = vld [vmem:[#allocation8 + $0xe0] sm:$0xff]
    %v1354 = vld [vmem:[#allocation8 + $0xe8] sm:$0xff]
    %v1355 = vld [vmem:[#allocation8 + $0xf0] sm:$0xff]
    %v1356 = vld [vmem:[#allocation8 + $0xf8] sm:$0xff]
    %v1357 = vld [vmem:[#allocation8 + $0x100] sm:$0xff]
    %v1358 = vld [vmem:[#allocation8 + $0x108] sm:$0xff]
    %v1359 = vld [vmem:[#allocation8 + $0x110] sm:$0xff]
    %v1360 = vld [vmem:[#allocation8 + $0x118] sm:$0xff]
    %v1361 = vld [vmem:[#allocation8 + $0x120] sm:$0xff]
    %v1362 = vld [vmem:[#allocation8 + $0x128] sm:$0xff]
    %v1363 = vld [vmem:[#allocation8 + $0x130] sm:$0xff]
    %v1364 = vld [vmem:[#allocation8 + $0x138] sm:$0xff]
    %v1365 = vld [vmem:[#allocation8 + $0x140] sm:$0xff]
    %v1366 = vld [vmem:[#allocation8 + $0x148] sm:$0xff]
    %v1367 = vld [vmem:[#allocation8 + $0x150] sm:$0xff]
    %v1368 = vld [vmem:[#allocation8 + $0x158] sm:$0xff]
    %v1369 = vld [vmem:[#allocation8 + $0x160] sm:$0xff]
    %v1370 = vld [vmem:[#allocation8 + $0x168] sm:$0xff]
    %v1371 = vld [vmem:[#allocation8 + $0x170] sm:$0xff]
    %v1372 = vld [vmem:[#allocation8 + $0x178] sm:$0xff]
    %v1373 = vld [vmem:[#allocation8 + $0x180] sm:$0xff]
    %v1374 = vld [vmem:[#allocation8 + $0x188] sm:$0xff]
    %v1375 = vld [vmem:[#allocation8 + $0x190] sm:$0xff]
    %v1376 = vld [vmem:[#allocation8 + $0x198] sm:$0xff]
    %v1377 = vld [vmem:[#allocation8 + $0x1a0] sm:$0xff]
    %v1378 = vld [vmem:[#allocation8 + $0x1a8] sm:$0xff]
    %v1379 = vld [vmem:[#allocation8 + $0x1b0] sm:$0xff]
    %v1380 = vld [vmem:[#allocation8 + $0x1b8] sm:$0xff]
    %v1381 = vld [vmem:[#allocation8 + $0x1c0] sm:$0xff]
    %v1382 = vld [vmem:[#allocation8 + $0x1c8] sm:$0xff]
    %v1383 = vld [vmem:[#allocation8 + $0x1d0] sm:$0xff]
    %v1384 = vld [vmem:[#allocation8 + $0x1d8] sm:$0xff]
    %v1385 = vld [vmem:[#allocation8 + $0x1e0] sm:$0xff]
    %v1386 = vld [vmem:[#allocation8 + $0x1e8] sm:$0xff]
    %v1387 = vld [vmem:[#allocation8 + $0x1f0] sm:$0xff]
    %v1388 = vld [vmem:[#allocation8 + $0x1f8] sm:$0xff]
    %1389 = vmatprep.subr.mxu0 %v1326
    %1390 = vmatpush1.msra.mxu0 %v1325
    %1391 = vmatprep.subr.mxu0 %v1330
    %1392 = vmatpush1.msra.mxu0 %v1329
    %1393 = vmatprep.subr.mxu0 %v1334
    %1394 = vmatpush1.msra.mxu0 %v1333
    %1395 = vmatprep.subr.mxu0 %v1338
    %1396 = vmatpush1.msra.mxu0 %v1337
    %1397 = vmatprep.subr.mxu0 %v1342
    %1398 = vmatpush1.msra.mxu0 %v1341
    %1399 = vmatprep.subr.mxu0 %v1346
    %1400 = vmatpush1.msra.mxu0 %v1345
    %1401 = vmatprep.subr.mxu0 %v1350
    %1402 = vmatpush1.msra.mxu0 %v1349
    %1403 = vmatprep.subr.mxu0 %v1354
    %1404 = vmatpush1.msra.mxu0 %v1353
    %1405 = vmatprep.subr.mxu0 %v1358
    %1406 = vmatpush1.msra.mxu0 %v1357
    %1407 = vmatprep.subr.mxu0 %v1362
    %1408 = vmatpush1.msra.mxu0 %v1361
    %1409 = vmatprep.subr.mxu0 %v1366
    %1410 = vmatpush1.msra.mxu0 %v1365
    %1411 = vmatprep.subr.mxu0 %v1370
    %1412 = vmatpush1.msra.mxu0 %v1369
    %1413 = vmatprep.subr.mxu0 %v1374
    %1414 = vmatpush1.msra.mxu0 %v1373
    %1415 = vmatprep.subr.mxu0 %v1378
    %1416 = vmatpush1.msra.mxu0 %v1377
    %1417 = vmatprep.subr.mxu0 %v1382
    %1418 = vmatpush1.msra.mxu0 %v1381
    %1419 = vmatprep.subr.mxu0 %v1386
    %1420 = vmatpush1.msra.mxu0 %v1385
    %1421 = vmatprep.subr.mxu0 0.0
    %1422 = vmatpush1.msra.mxu0 0.0
    %1423 = vmatprep.subr.mxu0 0.0
    %1424 = vmatpush1.msra.mxu0 0.0
    %1425 = vmatprep.subr.mxu0 0.0
    %1426 = vmatpush1.msra.mxu0 0.0
    %1427 = vmatprep.subr.mxu0 0.0
    %1428 = vmatpush1.msra.mxu0 0.0
    %1429 = vmatprep.subr.mxu0 0.0
    %1430 = vmatpush1.msra.mxu0 0.0
    %1431 = vmatprep.subr.mxu0 0.0
    %1432 = vmatpush1.msra.mxu0 0.0
    %1433 = vmatprep.subr.mxu0 0.0
    %1434 = vmatpush1.msra.mxu0 0.0
    %1435 = vmatprep.subr.mxu0 0.0
    %1436 = vmatpush1.msra.mxu0 0.0
    %1437 = vmatprep.subr.mxu0 0.0
    %1438 = vmatpush1.msra.mxu0 0.0
    %1439 = vmatprep.subr.mxu0 0.0
    %1440 = vmatpush1.msra.mxu0 0.0
    %1441 = vmatprep.subr.mxu0 0.0
    %1442 = vmatpush1.msra.mxu0 0.0
    %1443 = vmatprep.subr.mxu0 0.0
    %1444 = vmatpush1.msra.mxu0 0.0
    %1445 = vmatprep.subr.mxu0 0.0
    %1446 = vmatpush1.msra.mxu0 0.0
    %1447 = vmatprep.subr.mxu0 0.0
    %1448 = vmatpush1.msra.mxu0 0.0
    %1449 = vmatprep.subr.mxu0 0.0
    %1450 = vmatpush1.msra.mxu0 0.0
    %1451 = vmatprep.subr.mxu0 0.0
    %1452 = vmatpush1.msra.mxu0 0.0
    %1453 = vmatprep.mubr.f32.mxu0 0.0
    %1454 = vmatmul.mubr.f32.gmra.mrb[0].mxu0 %v1077
    %v1455 = vpop.f32.mrb[0].mxu0
    %v1456 = vadd.f32 0.0, %v1455
    %v1457 = vpop.f32.mrb[0].mxu0
    %v1458 = vadd.f32 0.0, %v1457
    %1459 = vdwg.mxu0
    %1460 = vmatprep.subr.mxu0 %v1328
    %1461 = vmatpush1.msra.mxu0 %v1327
    %1462 = vmatprep.subr.mxu0 %v1332
    %1463 = vmatpush1.msra.mxu0 %v1331
    %1464 = vmatprep.subr.mxu0 %v1336
    %1465 = vmatpush1.msra.mxu0 %v1335
    %1466 = vmatprep.subr.mxu0 %v1340
    %1467 = vmatpush1.msra.mxu0 %v1339
    %1468 = vmatprep.subr.mxu0 %v1344
    %1469 = vmatpush1.msra.mxu0 %v1343
    %1470 = vmatprep.subr.mxu0 %v1348
    %1471 = vmatpush1.msra.mxu0 %v1347
    %1472 = vmatprep.subr.mxu0 %v1352
    %1473 = vmatpush1.msra.mxu0 %v1351
    %1474 = vmatprep.subr.mxu0 %v1356
    %1475 = vmatpush1.msra.mxu0 %v1355
    %1476 = vmatprep.subr.mxu0 %v1360
    %1477 = vmatpush1.msra.mxu0 %v1359
    %1478 = vmatprep.subr.mxu0 %v1364
    %1479 = vmatpush1.msra.mxu0 %v1363
    %1480 = vmatprep.subr.mxu0 %v1368
    %1481 = vmatpush1.msra.mxu0 %v1367
    %1482 = vmatprep.subr.mxu0 %v1372
    %1483 = vmatpush1.msra.mxu0 %v1371
    %1484 = vmatprep.subr.mxu0 %v1376
    %1485 = vmatpush1.msra.mxu0 %v1375
    %1486 = vmatprep.subr.mxu0 %v1380
    %1487 = vmatpush1.msra.mxu0 %v1379
    %1488 = vmatprep.subr.mxu0 %v1384
    %1489 = vmatpush1.msra.mxu0 %v1383
    %1490 = vmatprep.subr.mxu0 %v1388
    %1491 = vmatpush1.msra.mxu0 %v1387
    %1492 = vmatprep.subr.mxu0 0.0
    %1493 = vmatpush1.msra.mxu0 0.0
    %1494 = vmatprep.subr.mxu0 0.0
    %1495 = vmatpush1.msra.mxu0 0.0
    %1496 = vmatprep.subr.mxu0 0.0
    %1497 = vmatpush1.msra.mxu0 0.0
    %1498 = vmatprep.subr.mxu0 0.0
    %1499 = vmatpush1.msra.mxu0 0.0
    %1500 = vmatprep.subr.mxu0 0.0
    %1501 = vmatpush1.msra.mxu0 0.0
    %1502 = vmatprep.subr.mxu0 0.0
    %1503 = vmatpush1.msra.mxu0 0.0
    %1504 = vmatprep.subr.mxu0 0.0
    %1505 = vmatpush1.msra.mxu0 0.0
    %1506 = vmatprep.subr.mxu0 0.0
    %1507 = vmatpush1.msra.mxu0 0.0
    %1508 = vmatprep.subr.mxu0 0.0
    %1509 = vmatpush1.msra.mxu0 0.0
    %1510 = vmatprep.subr.mxu0 0.0
    %1511 = vmatpush1.msra.mxu0 0.0
    %1512 = vmatprep.subr.mxu0 0.0
    %1513 = vmatpush1.msra.mxu0 0.0
    %1514 = vmatprep.subr.mxu0 0.0
    %1515 = vmatpush1.msra.mxu0 0.0
    %1516 = vmatprep.subr.mxu0 0.0
    %1517 = vmatpush1.msra.mxu0 0.0
    %1518 = vmatprep.subr.mxu0 0.0
    %1519 = vmatpush1.msra.mxu0 0.0
    %1520 = vmatprep.subr.mxu0 0.0
    %1521 = vmatpush1.msra.mxu0 0.0
    %1522 = vmatprep.subr.mxu0 0.0
    %1523 = vmatpush1.msra.mxu0 0.0
    %1524 = vmatprep.mubr.f32.mxu0 0.0
    %1525 = vmatmul.mubr.f32.gmra.mrb[0].mxu0 %v1077
    %v1526 = vpop.f32.mrb[0].mxu0
    %v1527 = vadd.f32 0.0, %v1526
    %v1528 = vpop.f32.mrb[0].mxu0
    %v1529 = vadd.f32 0.0, %v1528
    %1530 = vdwg.mxu0
    %v1531 = vadd.f32 %v1321, %v1456
    %v1532 = vadd.f32 %v1322, %v1458
    %v1533 = vadd.f32 %v1323, %v1527
    %v1534 = vadd.f32 %v1324, %v1529
    %v1535 = vxor.u32 %v1531, 2147483648
    %v1536 = vmul.f32 %v1535, 1.442695
    %v1537 = vpow.pop %v1536
    %v1538 = vadd.f32 %v1537, 1.0
    %v1539 = vrcp.pop %v1538
    %v1540 = vmul.f32 1.0, %v1539
    %v1541 = vxor.u32 %v1532, 2147483648
    %v1542 = vmul.f32 %v1541, 1.442695
    %v1543 = vpow.pop %v1542
    %v1544 = vadd.f32 %v1543, 1.0
    %v1545 = vrcp.pop %v1544
    %v1546 = vmul.f32 1.0, %v1545
    %v1547 = vtanh.pop %v1533
    %v1548 = vxor.u32 %v1534, 2147483648
    %v1549 = vmul.f32 %v1548, 1.442695
    %v1550 = vpow.pop %v1549
    %v1551 = vadd.f32 %v1550, 1.0
    %v1552 = vrcp.pop %v1551
    %v1553 = vmul.f32 1.0, %v1552
    %v1554 = vmul.f32 %v1546, %v1078
    %v1555 = vmul.f32 %v1540, %v1547
    %v1556 = vadd.f32 %v1554, %v1555
    %v1557 = vtanh.pop %v1556
    %v1558 = vmul.f32 %v1553, %v1557
    %v1559 = vsel %vm1079, 1, 0
    %1560 = vset.pattern.permute.xlu0 0
    %1561 = vperm.xlu0 %1560, %v1559
    %v1562 = vpop.permute.xlu0 %1561
    %vm1563 = vcmp.eq.s32.totalorder %v1562, 1
    %v1564 = vsel %vm1563, %v1319, 0.0
    %s1565 = scalar_lea.vmem [#allocation10], 16
    %1566 = vst [vmem:[%s1565] sm:$0xff] %v1564
    %v1567 = vsel %vm1080, 1, 0
    %1568 = vset.pattern.permute.xlu0 0
    %1569 = vperm.xlu0 %1568, %v1567
    %v1570 = vpop.permute.xlu0 %1569
    %vm1571 = vcmp.eq.s32.totalorder %v1570, 1
    %v1572 = vsel %vm1571, %v1558, 0.0
    %s1573 = scalar_lea.vmem [#allocation11], 40
    %1574 = vst [vmem:[%s1573] sm:$0xff] %v1572
    %v1575 = vsel %vm1563, %v1319, %v1075
    %v1576 = vsel %vm1563, %v1317, %v1076
    %v1577 = vsel %vm1571, %v1558, %v1077
    %v1578 = vsel %vm1571, %v1556, %v1078
    %vm1579 = vcmp.gt.s32.totalorder %v82, 3
    %vm1580 = vcmp.gt.s32.totalorder %v82, 4
    %s1581 = scalar_lea.vmem [#allocation2], 96
    %v1582 = vld [vmem:[%s1581] sm:$0xff]
    %v1583 = vld [vmem:[%s1581 + $0x8] sm:$0xff]
    %v1584 = vld [vmem:[%s1581 + $0x10] sm:$0xff]
    %v1585 = vld [vmem:[%s1581 + $0x18] sm:$0xff]
    %v1586 = vld [vmem:[#allocation7] sm:$0xff]
    %v1587 = vld [vmem:[#allocation7 + $0x8] sm:$0xff]
    %v1588 = vld [vmem:[#allocation7 + $0x10] sm:$0xff]
    %v1589 = vld [vmem:[#allocation7 + $0x18] sm:$0xff]
    %v1590 = vld [vmem:[#allocation7 + $0x20] sm:$0xff]
    %v1591 = vld [vmem:[#allocation7 + $0x28] sm:$0xff]
    %v1592 = vld [vmem:[#allocation7 + $0x30] sm:$0xff]
    %v1593 = vld [vmem:[#allocation7 + $0x38] sm:$0xff]
    %v1594 = vld [vmem:[#allocation7 + $0x40] sm:$0xff]
    %v1595 = vld [vmem:[#allocation7 + $0x48] sm:$0xff]
    %v1596 = vld [vmem:[#allocation7 + $0x50] sm:$0xff]
    %v1597 = vld [vmem:[#allocation7 + $0x58] sm:$0xff]
    %v1598 = vld [vmem:[#allocation7 + $0x60] sm:$0xff]
    %v1599 = vld [vmem:[#allocation7 + $0x68] sm:$0xff]
    %v1600 = vld [vmem:[#allocation7 + $0x70] sm:$0xff]
    %v1601 = vld [vmem:[#allocation7 + $0x78] sm:$0xff]
    %v1602 = vld [vmem:[#allocation7 + $0x80] sm:$0xff]
    %v1603 = vld [vmem:[#allocation7 + $0x88] sm:$0xff]
    %v1604 = vld [vmem:[#allocation7 + $0x90] sm:$0xff]
    %v1605 = vld [vmem:[#allocation7 + $0x98] sm:$0xff]
    %v1606 = vld [vmem:[#allocation7 + $0xa0] sm:$0xff]
    %v1607 = vld [vmem:[#allocation7 + $0xa8] sm:$0xff]
    %v1608 = vld [vmem:[#allocation7 + $0xb0] sm:$0xff]
    %v1609 = vld [vmem:[#allocation7 + $0xb8] sm:$0xff]
    %v1610 = vld [vmem:[#allocation7 + $0xc0] sm:$0xff]
    %v1611 = vld [vmem:[#allocation7 + $0xc8] sm:$0xff]
    %v1612 = vld [vmem:[#allocation7 + $0xd0] sm:$0xff]
    %v1613 = vld [vmem:[#allocation7 + $0xd8] sm:$0xff]
    %v1614 = vld [vmem:[#allocation7 + $0xe0] sm:$0xff]
    %v1615 = vld [vmem:[#allocation7 + $0xe8] sm:$0xff]
    %v1616 = vld [vmem:[#allocation7 + $0xf0] sm:$0xff]
    %v1617 = vld [vmem:[#allocation7 + $0xf8] sm:$0xff]
    %v1618 = vld [vmem:[#allocation7 + $0x100] sm:$0xff]
    %v1619 = vld [vmem:[#allocation7 + $0x108] sm:$0xff]
    %v1620 = vld [vmem:[#allocation7 + $0x110] sm:$0xff]
    %v1621 = vld [vmem:[#allocation7 + $0x118] sm:$0xff]
    %v1622 = vld [vmem:[#allocation7 + $0x120] sm:$0xff]
    %v1623 = vld [vmem:[#allocation7 + $0x128] sm:$0xff]
    %v1624 = vld [vmem:[#allocation7 + $0x130] sm:$0xff]
    %v1625 = vld [vmem:[#allocation7 + $0x138] sm:$0xff]
    %v1626 = vld [vmem:[#allocation7 + $0x140] sm:$0xff]
    %v1627 = vld [vmem:[#allocation7 + $0x148] sm:$0xff]
    %v1628 = vld [vmem:[#allocation7 + $0x150] sm:$0xff]
    %v1629 = vld [vmem:[#allocation7 + $0x158] sm:$0xff]
    %v1630 = vld [vmem:[#allocation7 + $0x160] sm:$0xff]
    %v1631 = vld [vmem:[#allocation7 + $0x168] sm:$0xff]
    %v1632 = vld [vmem:[#allocation7 + $0x170] sm:$0xff]
    %v1633 = vld [vmem:[#allocation7 + $0x178] sm:$0xff]
    %v1634 = vld [vmem:[#allocation7 + $0x180] sm:$0xff]
    %v1635 = vld [vmem:[#allocation7 + $0x188] sm:$0xff]
    %v1636 = vld [vmem:[#allocation7 + $0x190] sm:$0xff]
    %v1637 = vld [vmem:[#allocation7 + $0x198] sm:$0xff]
    %v1638 = vld [vmem:[#allocation7 + $0x1a0] sm:$0xff]
    %v1639 = vld [vmem:[#allocation7 + $0x1a8] sm:$0xff]
    %v1640 = vld [vmem:[#allocation7 + $0x1b0] sm:$0xff]
    %v1641 = vld [vmem:[#allocation7 + $0x1b8] sm:$0xff]
    %v1642 = vld [vmem:[#allocation7 + $0x1c0] sm:$0xff]
    %v1643 = vld [vmem:[#allocation7 + $0x1c8] sm:$0xff]
    %v1644 = vld [vmem:[#allocation7 + $0x1d0] sm:$0xff]
    %v1645 = vld [vmem:[#allocation7 + $0x1d8] sm:$0xff]
    %v1646 = vld [vmem:[#allocation7 + $0x1e0] sm:$0xff]
    %v1647 = vld [vmem:[#allocation7 + $0x1e8] sm:$0xff]
    %v1648 = vld [vmem:[#allocation7 + $0x1f0] sm:$0xff]
    %v1649 = vld [vmem:[#allocation7 + $0x1f8] sm:$0xff]
    %1650 = vmatprep.subr.mxu0 %v1587
    %1651 = vmatpush1.msra.mxu0 %v1586
    %1652 = vmatprep.subr.mxu0 %v1591
    %1653 = vmatpush1.msra.mxu0 %v1590
    %1654 = vmatprep.subr.mxu0 %v1595
    %1655 = vmatpush1.msra.mxu0 %v1594
    %1656 = vmatprep.subr.mxu0 %v1599
    %1657 = vmatpush1.msra.mxu0 %v1598
    %1658 = vmatprep.subr.mxu0 %v1603
    %1659 = vmatpush1.msra.mxu0 %v1602
    %1660 = vmatprep.subr.mxu0 %v1607
    %1661 = vmatpush1.msra.mxu0 %v1606
    %1662 = vmatprep.subr.mxu0 %v1611
    %1663 = vmatpush1.msra.mxu0 %v1610
    %1664 = vmatprep.subr.mxu0 %v1615
    %1665 = vmatpush1.msra.mxu0 %v1614
    %1666 = vmatprep.subr.mxu0 %v1619
    %1667 = vmatpush1.msra.mxu0 %v1618
    %1668 = vmatprep.subr.mxu0 %v1623
    %1669 = vmatpush1.msra.mxu0 %v1622
    %1670 = vmatprep.subr.mxu0 %v1627
    %1671 = vmatpush1.msra.mxu0 %v1626
    %1672 = vmatprep.subr.mxu0 %v1631
    %1673 = vmatpush1.msra.mxu0 %v1630
    %1674 = vmatprep.subr.mxu0 %v1635
    %1675 = vmatpush1.msra.mxu0 %v1634
    %1676 = vmatprep.subr.mxu0 %v1639
    %1677 = vmatpush1.msra.mxu0 %v1638
    %1678 = vmatprep.subr.mxu0 %v1643
    %1679 = vmatpush1.msra.mxu0 %v1642
    %1680 = vmatprep.subr.mxu0 %v1647
    %1681 = vmatpush1.msra.mxu0 %v1646
    %1682 = vmatprep.subr.mxu0 0.0
    %1683 = vmatpush1.msra.mxu0 0.0
    %1684 = vmatprep.subr.mxu0 0.0
    %1685 = vmatpush1.msra.mxu0 0.0
    %1686 = vmatprep.subr.mxu0 0.0
    %1687 = vmatpush1.msra.mxu0 0.0
    %1688 = vmatprep.subr.mxu0 0.0
    %1689 = vmatpush1.msra.mxu0 0.0
    %1690 = vmatprep.subr.mxu0 0.0
    %1691 = vmatpush1.msra.mxu0 0.0
    %1692 = vmatprep.subr.mxu0 0.0
    %1693 = vmatpush1.msra.mxu0 0.0
    %1694 = vmatprep.subr.mxu0 0.0
    %1695 = vmatpush1.msra.mxu0 0.0
    %1696 = vmatprep.subr.mxu0 0.0
    %1697 = vmatpush1.msra.mxu0 0.0
    %1698 = vmatprep.subr.mxu0 0.0
    %1699 = vmatpush1.msra.mxu0 0.0
    %1700 = vmatprep.subr.mxu0 0.0
    %1701 = vmatpush1.msra.mxu0 0.0
    %1702 = vmatprep.subr.mxu0 0.0
    %1703 = vmatpush1.msra.mxu0 0.0
    %1704 = vmatprep.subr.mxu0 0.0
    %1705 = vmatpush1.msra.mxu0 0.0
    %1706 = vmatprep.subr.mxu0 0.0
    %1707 = vmatpush1.msra.mxu0 0.0
    %1708 = vmatprep.subr.mxu0 0.0
    %1709 = vmatpush1.msra.mxu0 0.0
    %1710 = vmatprep.subr.mxu0 0.0
    %1711 = vmatpush1.msra.mxu0 0.0
    %1712 = vmatprep.subr.mxu0 0.0
    %1713 = vmatpush1.msra.mxu0 0.0
    %1714 = vmatprep.mubr.f32.mxu0 0.0
    %1715 = vmatmul.mubr.f32.gmra.mrb[0].mxu0 %v1575
    %v1716 = vpop.f32.mrb[0].mxu0
    %v1717 = vadd.f32 0.0, %v1716
    %v1718 = vpop.f32.mrb[0].mxu0
    %v1719 = vadd.f32 0.0, %v1718
    %1720 = vdwg.mxu0
    %1721 = vmatprep.subr.mxu0 %v1589
    %1722 = vmatpush1.msra.mxu0 %v1588
    %1723 = vmatprep.subr.mxu0 %v1593
    %1724 = vmatpush1.msra.mxu0 %v1592
    %1725 = vmatprep.subr.mxu0 %v1597
    %1726 = vmatpush1.msra.mxu0 %v1596
    %1727 = vmatprep.subr.mxu0 %v1601
    %1728 = vmatpush1.msra.mxu0 %v1600
    %1729 = vmatprep.subr.mxu0 %v1605
    %1730 = vmatpush1.msra.mxu0 %v1604
    %1731 = vmatprep.subr.mxu0 %v1609
    %1732 = vmatpush1.msra.mxu0 %v1608
    %1733 = vmatprep.subr.mxu0 %v1613
    %1734 = vmatpush1.msra.mxu0 %v1612
    %1735 = vmatprep.subr.mxu0 %v1617
    %1736 = vmatpush1.msra.mxu0 %v1616
    %1737 = vmatprep.subr.mxu0 %v1621
    %1738 = vmatpush1.msra.mxu0 %v1620
    %1739 = vmatprep.subr.mxu0 %v1625
    %1740 = vmatpush1.msra.mxu0 %v1624
    %1741 = vmatprep.subr.mxu0 %v1629
    %1742 = vmatpush1.msra.mxu0 %v1628
    %1743 = vmatprep.subr.mxu0 %v1633
    %1744 = vmatpush1.msra.mxu0 %v1632
    %1745 = vmatprep.subr.mxu0 %v1637
    %1746 = vmatpush1.msra.mxu0 %v1636
    %1747 = vmatprep.subr.mxu0 %v1641
    %1748 = vmatpush1.msra.mxu0 %v1640
    %1749 = vmatprep.subr.mxu0 %v1645
    %1750 = vmatpush1.msra.mxu0 %v1644
    %1751 = vmatprep.subr.mxu0 %v1649
    %1752 = vmatpush1.msra.mxu0 %v1648
    %1753 = vmatprep.subr.mxu0 0.0
    %1754 = vmatpush1.msra.mxu0 0.0
    %1755 = vmatprep.subr.mxu0 0.0
    %1756 = vmatpush1.msra.mxu0 0.0
    %1757 = vmatprep.subr.mxu0 0.0
    %1758 = vmatpush1.msra.mxu0 0.0
    %1759 = vmatprep.subr.mxu0 0.0
    %1760 = vmatpush1.msra.mxu0 0.0
    %1761 = vmatprep.subr.mxu0 0.0
    %1762 = vmatpush1.msra.mxu0 0.0
    %1763 = vmatprep.subr.mxu0 0.0
    %1764 = vmatpush1.msra.mxu0 0.0
    %1765 = vmatprep.subr.mxu0 0.0
    %1766 = vmatpush1.msra.mxu0 0.0
    %1767 = vmatprep.subr.mxu0 0.0
    %1768 = vmatpush1.msra.mxu0 0.0
    %1769 = vmatprep.subr.mxu0 0.0
    %1770 = vmatpush1.msra.mxu0 0.0
    %1771 = vmatprep.subr.mxu0 0.0
    %1772 = vmatpush1.msra.mxu0 0.0
    %1773 = vmatprep.subr.mxu0 0.0
    %1774 = vmatpush1.msra.mxu0 0.0
    %1775 = vmatprep.subr.mxu0 0.0
    %1776 = vmatpush1.msra.mxu0 0.0
    %1777 = vmatprep.subr.mxu0 0.0
    %1778 = vmatpush1.msra.mxu0 0.0
    %1779 = vmatprep.subr.mxu0 0.0
    %1780 = vmatpush1.msra.mxu0 0.0
    %1781 = vmatprep.subr.mxu0 0.0
    %1782 = vmatpush1.msra.mxu0 0.0
    %1783 = vmatprep.subr.mxu0 0.0
    %1784 = vmatpush1.msra.mxu0 0.0
    %1785 = vmatprep.mubr.f32.mxu0 0.0
    %1786 = vmatmul.mubr.f32.gmra.mrb[0].mxu0 %v1575
    %v1787 = vpop.f32.mrb[0].mxu0
    %v1788 = vadd.f32 0.0, %v1787
    %v1789 = vpop.f32.mrb[0].mxu0
    %v1790 = vadd.f32 0.0, %v1789
    %1791 = vdwg.mxu0
    %v1792 = vadd.f32 %v1582, %v1717
    %v1793 = vadd.f32 %v1583, %v1719
    %v1794 = vadd.f32 %v1584, %v1788
    %v1795 = vadd.f32 %v1585, %v1790
    %v1796 = vxor.u32 %v1792, 2147483648
    %v1797 = vmul.f32 %v1796, 1.442695
    %v1798 = vpow.pop %v1797
    %v1799 = vadd.f32 %v1798, 1.0
    %v1800 = vrcp.pop %v1799
    %v1801 = vmul.f32 1.0, %v1800
    %v1802 = vxor.u32 %v1793, 2147483648
    %v1803 = vmul.f32 %v1802, 1.442695
    %v1804 = vpow.pop %v1803
    %v1805 = vadd.f32 %v1804, 1.0
    %v1806 = vrcp.pop %v1805
    %v1807 = vmul.f32 1.0, %v1806
    %v1808 = vtanh.pop %v1794
    %v1809 = vxor.u32 %v1795, 2147483648
    %v1810 = vmul.f32 %v1809, 1.442695
    %v1811 = vpow.pop %v1810
    %v1812 = vadd.f32 %v1811, 1.0
    %v1813 = vrcp.pop %v1812
    %v1814 = vmul.f32 1.0, %v1813
    %v1815 = vmul.f32 %v1807, %v1576
    %v1816 = vmul.f32 %v1801, %v1808
    %v1817 = vadd.f32 %v1815, %v1816
    %v1818 = vtanh.pop %v1817
    %v1819 = vmul.f32 %v1814, %v1818
    %s1820 = scalar_lea.vmem [#allocation5], 128
    %v1821 = vld [vmem:[%s1820] sm:$0xff]
    %v1822 = vld [vmem:[%s1820 + $0x8] sm:$0xff]
    %v1823 = vld [vmem:[%s1820 + $0x10] sm:$0xff]
    %v1824 = vld [vmem:[%s1820 + $0x18] sm:$0xff]
    %v1825 = vld [vmem:[#allocation8] sm:$0xff]
    %v1826 = vld [vmem:[#allocation8 + $0x8] sm:$0xff]
    %v1827 = vld [vmem:[#allocation8 + $0x10] sm:$0xff]
    %v1828 = vld [vmem:[#allocation8 + $0x18] sm:$0xff]
    %v1829 = vld [vmem:[#allocation8 + $0x20] sm:$0xff]
    %v1830 = vld [vmem:[#allocation8 + $0x28] sm:$0xff]
    %v1831 = vld [vmem:[#allocation8 + $0x30] sm:$0xff]
    %v1832 = vld [vmem:[#allocation8 + $0x38] sm:$0xff]
    %v1833 = vld [vmem:[#allocation8 + $0x40] sm:$0xff]
    %v1834 = vld [vmem:[#allocation8 + $0x48] sm:$0xff]
    %v1835 = vld [vmem:[#allocation8 + $0x50] sm:$0xff]
    %v1836 = vld [vmem:[#allocation8 + $0x58] sm:$0xff]
    %v1837 = vld [vmem:[#allocation8 + $0x60] sm:$0xff]
    %v1838 = vld [vmem:[#allocation8 + $0x68] sm:$0xff]
    %v1839 = vld [vmem:[#allocation8 + $0x70] sm:$0xff]
    %v1840 = vld [vmem:[#allocation8 + $0x78] sm:$0xff]
    %v1841 = vld [vmem:[#allocation8 + $0x80] sm:$0xff]
    %v1842 = vld [vmem:[#allocation8 + $0x88] sm:$0xff]
    %v1843 = vld [vmem:[#allocation8 + $0x90] sm:$0xff]
    %v1844 = vld [vmem:[#allocation8 + $0x98] sm:$0xff]
    %v1845 = vld [vmem:[#allocation8 + $0xa0] sm:$0xff]
    %v1846 = vld [vmem:[#allocation8 + $0xa8] sm:$0xff]
    %v1847 = vld [vmem:[#allocation8 + $0xb0] sm:$0xff]
    %v1848 = vld [vmem:[#allocation8 + $0xb8] sm:$0xff]
    %v1849 = vld [vmem:[#allocation8 + $0xc0] sm:$0xff]
    %v1850 = vld [vmem:[#allocation8 + $0xc8] sm:$0xff]
    %v1851 = vld [vmem:[#allocation8 + $0xd0] sm:$0xff]
    %v1852 = vld [vmem:[#allocation8 + $0xd8] sm:$0xff]
    %v1853 = vld [vmem:[#allocation8 + $0xe0] sm:$0xff]
    %v1854 = vld [vmem:[#allocation8 + $0xe8] sm:$0xff]
    %v1855 = vld [vmem:[#allocation8 + $0xf0] sm:$0xff]
    %v1856 = vld [vmem:[#allocation8 + $0xf8] sm:$0xff]
    %v1857 = vld [vmem:[#allocation8 + $0x100] sm:$0xff]
    %v1858 = vld [vmem:[#allocation8 + $0x108] sm:$0xff]
    %v1859 = vld [vmem:[#allocation8 + $0x110] sm:$0xff]
    %v1860 = vld [vmem:[#allocation8 + $0x118] sm:$0xff]
    %v1861 = vld [vmem:[#allocation8 + $0x120] sm:$0xff]
    %v1862 = vld [vmem:[#allocation8 + $0x128] sm:$0xff]
    %v1863 = vld [vmem:[#allocation8 + $0x130] sm:$0xff]
    %v1864 = vld [vmem:[#allocation8 + $0x138] sm:$0xff]
    %v1865 = vld [vmem:[#allocation8 + $0x140] sm:$0xff]
    %v1866 = vld [vmem:[#allocation8 + $0x148] sm:$0xff]
    %v1867 = vld [vmem:[#allocation8 + $0x150] sm:$0xff]
    %v1868 = vld [vmem:[#allocation8 + $0x158] sm:$0xff]
    %v1869 = vld [vmem:[#allocation8 + $0x160] sm:$0xff]
    %v1870 = vld [vmem:[#allocation8 + $0x168] sm:$0xff]
    %v1871 = vld [vmem:[#allocation8 + $0x170] sm:$0xff]
    %v1872 = vld [vmem:[#allocation8 + $0x178] sm:$0xff]
    %v1873 = vld [vmem:[#allocation8 + $0x180] sm:$0xff]
    %v1874 = vld [vmem:[#allocation8 + $0x188] sm:$0xff]
    %v1875 = vld [vmem:[#allocation8 + $0x190] sm:$0xff]
    %v1876 = vld [vmem:[#allocation8 + $0x198] sm:$0xff]
    %v1877 = vld [vmem:[#allocation8 + $0x1a0] sm:$0xff]
    %v1878 = vld [vmem:[#allocation8 + $0x1a8] sm:$0xff]
    %v1879 = vld [vmem:[#allocation8 + $0x1b0] sm:$0xff]
    %v1880 = vld [vmem:[#allocation8 + $0x1b8] sm:$0xff]
    %v1881 = vld [vmem:[#allocation8 + $0x1c0] sm:$0xff]
    %v1882 = vld [vmem:[#allocation8 + $0x1c8] sm:$0xff]
    %v1883 = vld [vmem:[#allocation8 + $0x1d0] sm:$0xff]
    %v1884 = vld [vmem:[#allocation8 + $0x1d8] sm:$0xff]
    %v1885 = vld [vmem:[#allocation8 + $0x1e0] sm:$0xff]
    %v1886 = vld [vmem:[#allocation8 + $0x1e8] sm:$0xff]
    %v1887 = vld [vmem:[#allocation8 + $0x1f0] sm:$0xff]
    %v1888 = vld [vmem:[#allocation8 + $0x1f8] sm:$0xff]
    %1889 = vmatprep.subr.mxu0 %v1826
    %1890 = vmatpush1.msra.mxu0 %v1825
    %1891 = vmatprep.subr.mxu0 %v1830
    %1892 = vmatpush1.msra.mxu0 %v1829
    %1893 = vmatprep.subr.mxu0 %v1834
    %1894 = vmatpush1.msra.mxu0 %v1833
    %1895 = vmatprep.subr.mxu0 %v1838
    %1896 = vmatpush1.msra.mxu0 %v1837
    %1897 = vmatprep.subr.mxu0 %v1842
    %1898 = vmatpush1.msra.mxu0 %v1841
    %1899 = vmatprep.subr.mxu0 %v1846
    %1900 = vmatpush1.msra.mxu0 %v1845
    %1901 = vmatprep.subr.mxu0 %v1850
    %1902 = vmatpush1.msra.mxu0 %v1849
    %1903 = vmatprep.subr.mxu0 %v1854
    %1904 = vmatpush1.msra.mxu0 %v1853
    %1905 = vmatprep.subr.mxu0 %v1858
    %1906 = vmatpush1.msra.mxu0 %v1857
    %1907 = vmatprep.subr.mxu0 %v1862
    %1908 = vmatpush1.msra.mxu0 %v1861
    %1909 = vmatprep.subr.mxu0 %v1866
    %1910 = vmatpush1.msra.mxu0 %v1865
    %1911 = vmatprep.subr.mxu0 %v1870
    %1912 = vmatpush1.msra.mxu0 %v1869
    %1913 = vmatprep.subr.mxu0 %v1874
    %1914 = vmatpush1.msra.mxu0 %v1873
    %1915 = vmatprep.subr.mxu0 %v1878
    %1916 = vmatpush1.msra.mxu0 %v1877
    %1917 = vmatprep.subr.mxu0 %v1882
    %1918 = vmatpush1.msra.mxu0 %v1881
    %1919 = vmatprep.subr.mxu0 %v1886
    %1920 = vmatpush1.msra.mxu0 %v1885
    %1921 = vmatprep.subr.mxu0 0.0
    %1922 = vmatpush1.msra.mxu0 0.0
    %1923 = vmatprep.subr.mxu0 0.0
    %1924 = vmatpush1.msra.mxu0 0.0
    %1925 = vmatprep.subr.mxu0 0.0
    %1926 = vmatpush1.msra.mxu0 0.0
    %1927 = vmatprep.subr.mxu0 0.0
    %1928 = vmatpush1.msra.mxu0 0.0
    %1929 = vmatprep.subr.mxu0 0.0
    %1930 = vmatpush1.msra.mxu0 0.0
    %1931 = vmatprep.subr.mxu0 0.0
    %1932 = vmatpush1.msra.mxu0 0.0
    %1933 = vmatprep.subr.mxu0 0.0
    %1934 = vmatpush1.msra.mxu0 0.0
    %1935 = vmatprep.subr.mxu0 0.0
    %1936 = vmatpush1.msra.mxu0 0.0
    %1937 = vmatprep.subr.mxu0 0.0
    %1938 = vmatpush1.msra.mxu0 0.0
    %1939 = vmatprep.subr.mxu0 0.0
    %1940 = vmatpush1.msra.mxu0 0.0
    %1941 = vmatprep.subr.mxu0 0.0
    %1942 = vmatpush1.msra.mxu0 0.0
    %1943 = vmatprep.subr.mxu0 0.0
    %1944 = vmatpush1.msra.mxu0 0.0
    %1945 = vmatprep.subr.mxu0 0.0
    %1946 = vmatpush1.msra.mxu0 0.0
    %1947 = vmatprep.subr.mxu0 0.0
    %1948 = vmatpush1.msra.mxu0 0.0
    %1949 = vmatprep.subr.mxu0 0.0
    %1950 = vmatpush1.msra.mxu0 0.0
    %1951 = vmatprep.subr.mxu0 0.0
    %1952 = vmatpush1.msra.mxu0 0.0
    %1953 = vmatprep.mubr.f32.mxu0 0.0
    %1954 = vmatmul.mubr.f32.gmra.mrb[0].mxu0 %v1577
    %v1955 = vpop.f32.mrb[0].mxu0
    %v1956 = vadd.f32 0.0, %v1955
    %v1957 = vpop.f32.mrb[0].mxu0
    %v1958 = vadd.f32 0.0, %v1957
    %1959 = vdwg.mxu0
    %1960 = vmatprep.subr.mxu0 %v1828
    %1961 = vmatpush1.msra.mxu0 %v1827
    %1962 = vmatprep.subr.mxu0 %v1832
    %1963 = vmatpush1.msra.mxu0 %v1831
    %1964 = vmatprep.subr.mxu0 %v1836
    %1965 = vmatpush1.msra.mxu0 %v1835
    %1966 = vmatprep.subr.mxu0 %v1840
    %1967 = vmatpush1.msra.mxu0 %v1839
    %1968 = vmatprep.subr.mxu0 %v1844
    %1969 = vmatpush1.msra.mxu0 %v1843
    %1970 = vmatprep.subr.mxu0 %v1848
    %1971 = vmatpush1.msra.mxu0 %v1847
    %1972 = vmatprep.subr.mxu0 %v1852
    %1973 = vmatpush1.msra.mxu0 %v1851
    %1974 = vmatprep.subr.mxu0 %v1856
    %1975 = vmatpush1.msra.mxu0 %v1855
    %1976 = vmatprep.subr.mxu0 %v1860
    %1977 = vmatpush1.msra.mxu0 %v1859
    %1978 = vmatprep.subr.mxu0 %v1864
    %1979 = vmatpush1.msra.mxu0 %v1863
    %1980 = vmatprep.subr.mxu0 %v1868
    %1981 = vmatpush1.msra.mxu0 %v1867
    %1982 = vmatprep.subr.mxu0 %v1872
    %1983 = vmatpush1.msra.mxu0 %v1871
    %1984 = vmatprep.subr.mxu0 %v1876
    %1985 = vmatpush1.msra.mxu0 %v1875
    %1986 = vmatprep.subr.mxu0 %v1880
    %1987 = vmatpush1.msra.mxu0 %v1879
    %1988 = vmatprep.subr.mxu0 %v1884
    %1989 = vmatpush1.msra.mxu0 %v1883
    %1990 = vmatprep.subr.mxu0 %v1888
    %1991 = vmatpush1.msra.mxu0 %v1887
    %1992 = vmatprep.subr.mxu0 0.0
    %1993 = vmatpush1.msra.mxu0 0.0
    %1994 = vmatprep.subr.mxu0 0.0
    %1995 = vmatpush1.msra.mxu0 0.0
    %1996 = vmatprep.subr.mxu0 0.0
    %1997 = vmatpush1.msra.mxu0 0.0
    %1998 = vmatprep.subr.mxu0 0.0
    %1999 = vmatpush1.msra.mxu0 0.0
    %2000 = vmatprep.subr.mxu0 0.0
    %2001 = vmatpush1.msra.mxu0 0.0
    %2002 = vmatprep.subr.mxu0 0.0
    %2003 = vmatpush1.msra.mxu0 0.0
    %2004 = vmatprep.subr.mxu0 0.0
    %2005 = vmatpush1.msra.mxu0 0.0
    %2006 = vmatprep.subr.mxu0 0.0
    %2007 = vmatpush1.msra.mxu0 0.0
    %2008 = vmatprep.subr.mxu0 0.0
    %2009 = vmatpush1.msra.mxu0 0.0
    %2010 = vmatprep.subr.mxu0 0.0
    %2011 = vmatpush1.msra.mxu0 0.0
    %2012 = vmatprep.subr.mxu0 0.0
    %2013 = vmatpush1.msra.mxu0 0.0
    %2014 = vmatprep.subr.mxu0 0.0
    %2015 = vmatpush1.msra.mxu0 0.0
    %2016 = vmatprep.subr.mxu0 0.0
    %2017 = vmatpush1.msra.mxu0 0.0
    %2018 = vmatprep.subr.mxu0 0.0
    %2019 = vmatpush1.msra.mxu0 0.0
    %2020 = vmatprep.subr.mxu0 0.0
    %2021 = vmatpush1.msra.mxu0 0.0
    %2022 = vmatprep.subr.mxu0 0.0
    %2023 = vmatpush1.msra.mxu0 0.0
    %2024 = vmatprep.mubr.f32.mxu0 0.0
    %2025 = vmatmul.mubr.f32.gmra.mrb[0].mxu0 %v1577
    %v2026 = vpop.f32.mrb[0].mxu0
    %v2027 = vadd.f32 0.0, %v2026
    %v2028 = vpop.f32.mrb[0].mxu0
    %v2029 = vadd.f32 0.0, %v2028
    %2030 = vdwg.mxu0
    %v2031 = vadd.f32 %v1821, %v1956
    %v2032 = vadd.f32 %v1822, %v1958
    %v2033 = vadd.f32 %v1823, %v2027
    %v2034 = vadd.f32 %v1824, %v2029
    %v2035 = vxor.u32 %v2031, 2147483648
    %v2036 = vmul.f32 %v2035, 1.442695
    %v2037 = vpow.pop %v2036
    %v2038 = vadd.f32 %v2037, 1.0
    %v2039 = vrcp.pop %v2038
    %v2040 = vmul.f32 1.0, %v2039
    %v2041 = vxor.u32 %v2032, 2147483648
    %v2042 = vmul.f32 %v2041, 1.442695
    %v2043 = vpow.pop %v2042
    %v2044 = vadd.f32 %v2043, 1.0
    %v2045 = vrcp.pop %v2044
    %v2046 = vmul.f32 1.0, %v2045
    %v2047 = vtanh.pop %v2033
    %v2048 = vxor.u32 %v2034, 2147483648
    %v2049 = vmul.f32 %v2048, 1.442695
    %v2050 = vpow.pop %v2049
    %v2051 = vadd.f32 %v2050, 1.0
    %v2052 = vrcp.pop %v2051
    %v2053 = vmul.f32 1.0, %v2052
    %v2054 = vmul.f32 %v2046, %v1578
    %v2055 = vmul.f32 %v2040, %v2047
    %v2056 = vadd.f32 %v2054, %v2055
    %v2057 = vtanh.pop %v2056
    %v2058 = vmul.f32 %v2053, %v2057
    %v2059 = vsel %vm1579, 1, 0
    %2060 = vset.pattern.permute.xlu0 0
    %2061 = vperm.xlu0 %2060, %v2059
    %v2062 = vpop.permute.xlu0 %2061
    %vm2063 = vcmp.eq.s32.totalorder %v2062, 1
    %v2064 = vsel %vm2063, %v1819, 0.0
    %s2065 = scalar_lea.vmem [#allocation10], 24
    %2066 = vst [vmem:[%s2065] sm:$0xff] %v2064
    %v2067 = vsel %vm1580, 1, 0
    %2068 = vset.pattern.permute.xlu0 0
    %2069 = vperm.xlu0 %2068, %v2067
    %v2070 = vpop.permute.xlu0 %2069
    %vm2071 = vcmp.eq.s32.totalorder %v2070, 1
    %v2072 = vsel %vm2071, %v2058, 0.0
    %s2073 = scalar_lea.vmem [#allocation11], 32
    %2074 = vst [vmem:[%s2073] sm:$0xff] %v2072
    %v2075 = vsel %vm2063, %v1819, %v1575
    %v2076 = vsel %vm2063, %v1817, %v1576
    %v2077 = vsel %vm2071, %v2058, %v1577
    %v2078 = vsel %vm2071, %v2056, %v1578
    %s2079 = scalar_lea.vmem [#allocation2], 128
    %v2080 = vld [vmem:[%s2079] sm:$0xff]
    %v2081 = vld [vmem:[%s2079 + $0x8] sm:$0xff]
    %v2082 = vld [vmem:[%s2079 + $0x10] sm:$0xff]
    %v2083 = vld [vmem:[%s2079 + $0x18] sm:$0xff]
    %v2084 = vld [vmem:[#allocation7] sm:$0xff]
    %v2085 = vld [vmem:[#allocation7 + $0x8] sm:$0xff]
    %v2086 = vld [vmem:[#allocation7 + $0x10] sm:$0xff]
    %v2087 = vld [vmem:[#allocation7 + $0x18] sm:$0xff]
    %v2088 = vld [vmem:[#allocation7 + $0x20] sm:$0xff]
    %v2089 = vld [vmem:[#allocation7 + $0x28] sm:$0xff]
    %v2090 = vld [vmem:[#allocation7 + $0x30] sm:$0xff]
    %v2091 = vld [vmem:[#allocation7 + $0x38] sm:$0xff]
    %v2092 = vld [vmem:[#allocation7 + $0x40] sm:$0xff]
    %v2093 = vld [vmem:[#allocation7 + $0x48] sm:$0xff]
    %v2094 = vld [vmem:[#allocation7 + $0x50] sm:$0xff]
    %v2095 = vld [vmem:[#allocation7 + $0x58] sm:$0xff]
    %v2096 = vld [vmem:[#allocation7 + $0x60] sm:$0xff]
    %v2097 = vld [vmem:[#allocation7 + $0x68] sm:$0xff]
    %v2098 = vld [vmem:[#allocation7 + $0x70] sm:$0xff]
    %v2099 = vld [vmem:[#allocation7 + $0x78] sm:$0xff]
    %v2100 = vld [vmem:[#allocation7 + $0x80] sm:$0xff]
    %v2101 = vld [vmem:[#allocation7 + $0x88] sm:$0xff]
    %v2102 = vld [vmem:[#allocation7 + $0x90] sm:$0xff]
    %v2103 = vld [vmem:[#allocation7 + $0x98] sm:$0xff]
    %v2104 = vld [vmem:[#allocation7 + $0xa0] sm:$0xff]
    %v2105 = vld [vmem:[#allocation7 + $0xa8] sm:$0xff]
    %v2106 = vld [vmem:[#allocation7 + $0xb0] sm:$0xff]
    %v2107 = vld [vmem:[#allocation7 + $0xb8] sm:$0xff]
    %v2108 = vld [vmem:[#allocation7 + $0xc0] sm:$0xff]
    %v2109 = vld [vmem:[#allocation7 + $0xc8] sm:$0xff]
    %v2110 = vld [vmem:[#allocation7 + $0xd0] sm:$0xff]
    %v2111 = vld [vmem:[#allocation7 + $0xd8] sm:$0xff]
    %v2112 = vld [vmem:[#allocation7 + $0xe0] sm:$0xff]
    %v2113 = vld [vmem:[#allocation7 + $0xe8] sm:$0xff]
    %v2114 = vld [vmem:[#allocation7 + $0xf0] sm:$0xff]
    %v2115 = vld [vmem:[#allocation7 + $0xf8] sm:$0xff]
    %v2116 = vld [vmem:[#allocation7 + $0x100] sm:$0xff]
    %v2117 = vld [vmem:[#allocation7 + $0x108] sm:$0xff]
    %v2118 = vld [vmem:[#allocation7 + $0x110] sm:$0xff]
    %v2119 = vld [vmem:[#allocation7 + $0x118] sm:$0xff]
    %v2120 = vld [vmem:[#allocation7 + $0x120] sm:$0xff]
    %v2121 = vld [vmem:[#allocation7 + $0x128] sm:$0xff]
    %v2122 = vld [vmem:[#allocation7 + $0x130] sm:$0xff]
    %v2123 = vld [vmem:[#allocation7 + $0x138] sm:$0xff]
    %v2124 = vld [vmem:[#allocation7 + $0x140] sm:$0xff]
    %v2125 = vld [vmem:[#allocation7 + $0x148] sm:$0xff]
    %v2126 = vld [vmem:[#allocation7 + $0x150] sm:$0xff]
    %v2127 = vld [vmem:[#allocation7 + $0x158] sm:$0xff]
    %v2128 = vld [vmem:[#allocation7 + $0x160] sm:$0xff]
    %v2129 = vld [vmem:[#allocation7 + $0x168] sm:$0xff]
    %v2130 = vld [vmem:[#allocation7 + $0x170] sm:$0xff]
    %v2131 = vld [vmem:[#allocation7 + $0x178] sm:$0xff]
    %v2132 = vld [vmem:[#allocation7 + $0x180] sm:$0xff]
    %v2133 = vld [vmem:[#allocation7 + $0x188] sm:$0xff]
    %v2134 = vld [vmem:[#allocation7 + $0x190] sm:$0xff]
    %v2135 = vld [vmem:[#allocation7 + $0x198] sm:$0xff]
    %v2136 = vld [vmem:[#allocation7 + $0x1a0] sm:$0xff]
    %v2137 = vld [vmem:[#allocation7 + $0x1a8] sm:$0xff]
    %v2138 = vld [vmem:[#allocation7 + $0x1b0] sm:$0xff]
    %v2139 = vld [vmem:[#allocation7 + $0x1b8] sm:$0xff]
    %v2140 = vld [vmem:[#allocation7 + $0x1c0] sm:$0xff]
    %v2141 = vld [vmem:[#allocation7 + $0x1c8] sm:$0xff]
    %v2142 = vld [vmem:[#allocation7 + $0x1d0] sm:$0xff]
    %v2143 = vld [vmem:[#allocation7 + $0x1d8] sm:$0xff]
    %v2144 = vld [vmem:[#allocation7 + $0x1e0] sm:$0xff]
    %v2145 = vld [vmem:[#allocation7 + $0x1e8] sm:$0xff]
    %v2146 = vld [vmem:[#allocation7 + $0x1f0] sm:$0xff]
    %v2147 = vld [vmem:[#allocation7 + $0x1f8] sm:$0xff]
    %2148 = vmatprep.subr.mxu0 %v2085
    %2149 = vmatpush1.msra.mxu0 %v2084
    %2150 = vmatprep.subr.mxu0 %v2089
    %2151 = vmatpush1.msra.mxu0 %v2088
    %2152 = vmatprep.subr.mxu0 %v2093
    %2153 = vmatpush1.msra.mxu0 %v2092
    %2154 = vmatprep.subr.mxu0 %v2097
    %2155 = vmatpush1.msra.mxu0 %v2096
    %2156 = vmatprep.subr.mxu0 %v2101
    %2157 = vmatpush1.msra.mxu0 %v2100
    %2158 = vmatprep.subr.mxu0 %v2105
    %2159 = vmatpush1.msra.mxu0 %v2104
    %2160 = vmatprep.subr.mxu0 %v2109
    %2161 = vmatpush1.msra.mxu0 %v2108
    %2162 = vmatprep.subr.mxu0 %v2113
    %2163 = vmatpush1.msra.mxu0 %v2112
    %2164 = vmatprep.subr.mxu0 %v2117
    %2165 = vmatpush1.msra.mxu0 %v2116
    %2166 = vmatprep.subr.mxu0 %v2121
    %2167 = vmatpush1.msra.mxu0 %v2120
    %2168 = vmatprep.subr.mxu0 %v2125
    %2169 = vmatpush1.msra.mxu0 %v2124
    %2170 = vmatprep.subr.mxu0 %v2129
    %2171 = vmatpush1.msra.mxu0 %v2128
    %2172 = vmatprep.subr.mxu0 %v2133
    %2173 = vmatpush1.msra.mxu0 %v2132
    %2174 = vmatprep.subr.mxu0 %v2137
    %2175 = vmatpush1.msra.mxu0 %v2136
    %2176 = vmatprep.subr.mxu0 %v2141
    %2177 = vmatpush1.msra.mxu0 %v2140
    %2178 = vmatprep.subr.mxu0 %v2145
    %2179 = vmatpush1.msra.mxu0 %v2144
    %2180 = vmatprep.subr.mxu0 0.0
    %2181 = vmatpush1.msra.mxu0 0.0
    %2182 = vmatprep.subr.mxu0 0.0
    %2183 = vmatpush1.msra.mxu0 0.0
    %2184 = vmatprep.subr.mxu0 0.0
    %2185 = vmatpush1.msra.mxu0 0.0
    %2186 = vmatprep.subr.mxu0 0.0
    %2187 = vmatpush1.msra.mxu0 0.0
    %2188 = vmatprep.subr.mxu0 0.0
    %2189 = vmatpush1.msra.mxu0 0.0
    %2190 = vmatprep.subr.mxu0 0.0
    %2191 = vmatpush1.msra.mxu0 0.0
    %2192 = vmatprep.subr.mxu0 0.0
    %2193 = vmatpush1.msra.mxu0 0.0
    %2194 = vmatprep.subr.mxu0 0.0
    %2195 = vmatpush1.msra.mxu0 0.0
    %2196 = vmatprep.subr.mxu0 0.0
    %2197 = vmatpush1.msra.mxu0 0.0
    %2198 = vmatprep.subr.mxu0 0.0
    %2199 = vmatpush1.msra.mxu0 0.0
    %2200 = vmatprep.subr.mxu0 0.0
    %2201 = vmatpush1.msra.mxu0 0.0
    %2202 = vmatprep.subr.mxu0 0.0
    %2203 = vmatpush1.msra.mxu0 0.0
    %2204 = vmatprep.subr.mxu0 0.0
    %2205 = vmatpush1.msra.mxu0 0.0
    %2206 = vmatprep.subr.mxu0 0.0
    %2207 = vmatpush1.msra.mxu0 0.0
    %2208 = vmatprep.subr.mxu0 0.0
    %2209 = vmatpush1.msra.mxu0 0.0
    %2210 = vmatprep.subr.mxu0 0.0
    %2211 = vmatpush1.msra.mxu0 0.0
    %2212 = vmatprep.mubr.f32.mxu0 0.0
    %2213 = vmatmul.mubr.f32.gmra.mrb[0].mxu0 %v2075
    %v2214 = vpop.f32.mrb[0].mxu0
    %v2215 = vadd.f32 0.0, %v2214
    %v2216 = vpop.f32.mrb[0].mxu0
    %v2217 = vadd.f32 0.0, %v2216
    %2218 = vdwg.mxu0
    %2219 = vmatprep.subr.mxu0 %v2087
    %2220 = vmatpush1.msra.mxu0 %v2086
    %2221 = vmatprep.subr.mxu0 %v2091
    %2222 = vmatpush1.msra.mxu0 %v2090
    %2223 = vmatprep.subr.mxu0 %v2095
    %2224 = vmatpush1.msra.mxu0 %v2094
    %2225 = vmatprep.subr.mxu0 %v2099
    %2226 = vmatpush1.msra.mxu0 %v2098
    %2227 = vmatprep.subr.mxu0 %v2103
    %2228 = vmatpush1.msra.mxu0 %v2102
    %2229 = vmatprep.subr.mxu0 %v2107
    %2230 = vmatpush1.msra.mxu0 %v2106
    %2231 = vmatprep.subr.mxu0 %v2111
    %2232 = vmatpush1.msra.mxu0 %v2110
    %2233 = vmatprep.subr.mxu0 %v2115
    %2234 = vmatpush1.msra.mxu0 %v2114
    %2235 = vmatprep.subr.mxu0 %v2119
    %2236 = vmatpush1.msra.mxu0 %v2118
    %2237 = vmatprep.subr.mxu0 %v2123
    %2238 = vmatpush1.msra.mxu0 %v2122
    %2239 = vmatprep.subr.mxu0 %v2127
    %2240 = vmatpush1.msra.mxu0 %v2126
    %2241 = vmatprep.subr.mxu0 %v2131
    %2242 = vmatpush1.msra.mxu0 %v2130
    %2243 = vmatprep.subr.mxu0 %v2135
    %2244 = vmatpush1.msra.mxu0 %v2134
    %2245 = vmatprep.subr.mxu0 %v2139
    %2246 = vmatpush1.msra.mxu0 %v2138
    %2247 = vmatprep.subr.mxu0 %v2143
    %2248 = vmatpush1.msra.mxu0 %v2142
    %2249 = vmatprep.subr.mxu0 %v2147
    %2250 = vmatpush1.msra.mxu0 %v2146
    %2251 = vmatprep.subr.mxu0 0.0
    %2252 = vmatpush1.msra.mxu0 0.0
    %2253 = vmatprep.subr.mxu0 0.0
    %2254 = vmatpush1.msra.mxu0 0.0
    %2255 = vmatprep.subr.mxu0 0.0
    %2256 = vmatpush1.msra.mxu0 0.0
    %2257 = vmatprep.subr.mxu0 0.0
    %2258 = vmatpush1.msra.mxu0 0.0
    %2259 = vmatprep.subr.mxu0 0.0
    %2260 = vmatpush1.msra.mxu0 0.0
    %2261 = vmatprep.subr.mxu0 0.0
    %2262 = vmatpush1.msra.mxu0 0.0
    %2263 = vmatprep.subr.mxu0 0.0
    %2264 = vmatpush1.msra.mxu0 0.0
    %2265 = vmatprep.subr.mxu0 0.0
    %2266 = vmatpush1.msra.mxu0 0.0
    %2267 = vmatprep.subr.mxu0 0.0
    %2268 = vmatpush1.msra.mxu0 0.0
    %2269 = vmatprep.subr.mxu0 0.0
    %2270 = vmatpush1.msra.mxu0 0.0
    %2271 = vmatprep.subr.mxu0 0.0
    %2272 = vmatpush1.msra.mxu0 0.0
    %2273 = vmatprep.subr.mxu0 0.0
    %2274 = vmatpush1.msra.mxu0 0.0
    %2275 = vmatprep.subr.mxu0 0.0
    %2276 = vmatpush1.msra.mxu0 0.0
    %2277 = vmatprep.subr.mxu0 0.0
    %2278 = vmatpush1.msra.mxu0 0.0
    %2279 = vmatprep.subr.mxu0 0.0
    %2280 = vmatpush1.msra.mxu0 0.0
    %2281 = vmatprep.subr.mxu0 0.0
    %2282 = vmatpush1.msra.mxu0 0.0
    %2283 = vmatprep.mubr.f32.mxu0 0.0
    %2284 = vmatmul.mubr.f32.gmra.mrb[0].mxu0 %v2075
    %v2285 = vpop.f32.mrb[0].mxu0
    %v2286 = vadd.f32 0.0, %v2285
    %v2287 = vpop.f32.mrb[0].mxu0
    %v2288 = vadd.f32 0.0, %v2287
    %2289 = vdwg.mxu0
    %v2290 = vadd.f32 %v2080, %v2215
    %v2291 = vadd.f32 %v2081, %v2217
    %v2292 = vadd.f32 %v2082, %v2286
    %v2293 = vadd.f32 %v2083, %v2288
    %v2294 = vxor.u32 %v2290, 2147483648
    %v2295 = vmul.f32 %v2294, 1.442695
    %v2296 = vpow.pop %v2295
    %v2297 = vadd.f32 %v2296, 1.0
    %v2298 = vrcp.pop %v2297
    %v2299 = vmul.f32 1.0, %v2298
    %v2300 = vxor.u32 %v2291, 2147483648
    %v2301 = vmul.f32 %v2300, 1.442695
    %v2302 = vpow.pop %v2301
    %v2303 = vadd.f32 %v2302, 1.0
    %v2304 = vrcp.pop %v2303
    %v2305 = vmul.f32 1.0, %v2304
    %v2306 = vtanh.pop %v2292
    %v2307 = vxor.u32 %v2293, 2147483648
    %v2308 = vmul.f32 %v2307, 1.442695
    %v2309 = vpow.pop %v2308
    %v2310 = vadd.f32 %v2309, 1.0
    %v2311 = vrcp.pop %v2310
    %v2312 = vmul.f32 1.0, %v2311
    %v2313 = vmul.f32 %v2305, %v2076
    %v2314 = vmul.f32 %v2299, %v2306
    %v2315 = vadd.f32 %v2313, %v2314
    %v2316 = vtanh.pop %v2315
    %v2317 = vmul.f32 %v2312, %v2316
    %s2318 = scalar_lea.vmem [#allocation5], 96
    %v2319 = vld [vmem:[%s2318] sm:$0xff]
    %v2320 = vld [vmem:[%s2318 + $0x8] sm:$0xff]
    %v2321 = vld [vmem:[%s2318 + $0x10] sm:$0xff]
    %v2322 = vld [vmem:[%s2318 + $0x18] sm:$0xff]
    %v2323 = vld [vmem:[#allocation8] sm:$0xff]
    %v2324 = vld [vmem:[#allocation8 + $0x8] sm:$0xff]
    %v2325 = vld [vmem:[#allocation8 + $0x10] sm:$0xff]
    %v2326 = vld [vmem:[#allocation8 + $0x18] sm:$0xff]
    %v2327 = vld [vmem:[#allocation8 + $0x20] sm:$0xff]
    %v2328 = vld [vmem:[#allocation8 + $0x28] sm:$0xff]
    %v2329 = vld [vmem:[#allocation8 + $0x30] sm:$0xff]
    %v2330 = vld [vmem:[#allocation8 + $0x38] sm:$0xff]
    %v2331 = vld [vmem:[#allocation8 + $0x40] sm:$0xff]
    %v2332 = vld [vmem:[#allocation8 + $0x48] sm:$0xff]
    %v2333 = vld [vmem:[#allocation8 + $0x50] sm:$0xff]
    %v2334 = vld [vmem:[#allocation8 + $0x58] sm:$0xff]
    %v2335 = vld [vmem:[#allocation8 + $0x60] sm:$0xff]
    %v2336 = vld [vmem:[#allocation8 + $0x68] sm:$0xff]
    %v2337 = vld [vmem:[#allocation8 + $0x70] sm:$0xff]
    %v2338 = vld [vmem:[#allocation8 + $0x78] sm:$0xff]
    %v2339 = vld [vmem:[#allocation8 + $0x80] sm:$0xff]
    %v2340 = vld [vmem:[#allocation8 + $0x88] sm:$0xff]
    %v2341 = vld [vmem:[#allocation8 + $0x90] sm:$0xff]
    %v2342 = vld [vmem:[#allocation8 + $0x98] sm:$0xff]
    %v2343 = vld [vmem:[#allocation8 + $0xa0] sm:$0xff]
    %v2344 = vld [vmem:[#allocation8 + $0xa8] sm:$0xff]
    %v2345 = vld [vmem:[#allocation8 + $0xb0] sm:$0xff]
    %v2346 = vld [vmem:[#allocation8 + $0xb8] sm:$0xff]
    %v2347 = vld [vmem:[#allocation8 + $0xc0] sm:$0xff]
    %v2348 = vld [vmem:[#allocation8 + $0xc8] sm:$0xff]
    %v2349 = vld [vmem:[#allocation8 + $0xd0] sm:$0xff]
    %v2350 = vld [vmem:[#allocation8 + $0xd8] sm:$0xff]
    %v2351 = vld [vmem:[#allocation8 + $0xe0] sm:$0xff]
    %v2352 = vld [vmem:[#allocation8 + $0xe8] sm:$0xff]
    %v2353 = vld [vmem:[#allocation8 + $0xf0] sm:$0xff]
    %v2354 = vld [vmem:[#allocation8 + $0xf8] sm:$0xff]
    %v2355 = vld [vmem:[#allocation8 + $0x100] sm:$0xff]
    %v2356 = vld [vmem:[#allocation8 + $0x108] sm:$0xff]
    %v2357 = vld [vmem:[#allocation8 + $0x110] sm:$0xff]
    %v2358 = vld [vmem:[#allocation8 + $0x118] sm:$0xff]
    %v2359 = vld [vmem:[#allocation8 + $0x120] sm:$0xff]
    %v2360 = vld [vmem:[#allocation8 + $0x128] sm:$0xff]
    %v2361 = vld [vmem:[#allocation8 + $0x130] sm:$0xff]
    %v2362 = vld [vmem:[#allocation8 + $0x138] sm:$0xff]
    %v2363 = vld [vmem:[#allocation8 + $0x140] sm:$0xff]
    %v2364 = vld [vmem:[#allocation8 + $0x148] sm:$0xff]
    %v2365 = vld [vmem:[#allocation8 + $0x150] sm:$0xff]
    %v2366 = vld [vmem:[#allocation8 + $0x158] sm:$0xff]
    %v2367 = vld [vmem:[#allocation8 + $0x160] sm:$0xff]
    %v2368 = vld [vmem:[#allocation8 + $0x168] sm:$0xff]
    %v2369 = vld [vmem:[#allocation8 + $0x170] sm:$0xff]
    %v2370 = vld [vmem:[#allocation8 + $0x178] sm:$0xff]
    %v2371 = vld [vmem:[#allocation8 + $0x180] sm:$0xff]
    %v2372 = vld [vmem:[#allocation8 + $0x188] sm:$0xff]
    %v2373 = vld [vmem:[#allocation8 + $0x190] sm:$0xff]
    %v2374 = vld [vmem:[#allocation8 + $0x198] sm:$0xff]
    %v2375 = vld [vmem:[#allocation8 + $0x1a0] sm:$0xff]
    %v2376 = vld [vmem:[#allocation8 + $0x1a8] sm:$0xff]
    %v2377 = vld [vmem:[#allocation8 + $0x1b0] sm:$0xff]
    %v2378 = vld [vmem:[#allocation8 + $0x1b8] sm:$0xff]
    %v2379 = vld [vmem:[#allocation8 + $0x1c0] sm:$0xff]
    %v2380 = vld [vmem:[#allocation8 + $0x1c8] sm:$0xff]
    %v2381 = vld [vmem:[#allocation8 + $0x1d0] sm:$0xff]
    %v2382 = vld [vmem:[#allocation8 + $0x1d8] sm:$0xff]
    %v2383 = vld [vmem:[#allocation8 + $0x1e0] sm:$0xff]
    %v2384 = vld [vmem:[#allocation8 + $0x1e8] sm:$0xff]
    %v2385 = vld [vmem:[#allocation8 + $0x1f0] sm:$0xff]
    %v2386 = vld [vmem:[#allocation8 + $0x1f8] sm:$0xff]
    %2387 = vmatprep.subr.mxu0 %v2324
    %2388 = vmatpush1.msra.mxu0 %v2323
    %2389 = vmatprep.subr.mxu0 %v2328
    %2390 = vmatpush1.msra.mxu0 %v2327
    %2391 = vmatprep.subr.mxu0 %v2332
    %2392 = vmatpush1.msra.mxu0 %v2331
    %2393 = vmatprep.subr.mxu0 %v2336
    %2394 = vmatpush1.msra.mxu0 %v2335
    %2395 = vmatprep.subr.mxu0 %v2340
    %2396 = vmatpush1.msra.mxu0 %v2339
    %2397 = vmatprep.subr.mxu0 %v2344
    %2398 = vmatpush1.msra.mxu0 %v2343
    %2399 = vmatprep.subr.mxu0 %v2348
    %2400 = vmatpush1.msra.mxu0 %v2347
    %2401 = vmatprep.subr.mxu0 %v2352
    %2402 = vmatpush1.msra.mxu0 %v2351
    %2403 = vmatprep.subr.mxu0 %v2356
    %2404 = vmatpush1.msra.mxu0 %v2355
    %2405 = vmatprep.subr.mxu0 %v2360
    %2406 = vmatpush1.msra.mxu0 %v2359
    %2407 = vmatprep.subr.mxu0 %v2364
    %2408 = vmatpush1.msra.mxu0 %v2363
    %2409 = vmatprep.subr.mxu0 %v2368
    %2410 = vmatpush1.msra.mxu0 %v2367
    %2411 = vmatprep.subr.mxu0 %v2372
    %2412 = vmatpush1.msra.mxu0 %v2371
    %2413 = vmatprep.subr.mxu0 %v2376
    %2414 = vmatpush1.msra.mxu0 %v2375
    %2415 = vmatprep.subr.mxu0 %v2380
    %2416 = vmatpush1.msra.mxu0 %v2379
    %2417 = vmatprep.subr.mxu0 %v2384
    %2418 = vmatpush1.msra.mxu0 %v2383
    %2419 = vmatprep.subr.mxu0 0.0
    %2420 = vmatpush1.msra.mxu0 0.0
    %2421 = vmatprep.subr.mxu0 0.0
    %2422 = vmatpush1.msra.mxu0 0.0
    %2423 = vmatprep.subr.mxu0 0.0
    %2424 = vmatpush1.msra.mxu0 0.0
    %2425 = vmatprep.subr.mxu0 0.0
    %2426 = vmatpush1.msra.mxu0 0.0
    %2427 = vmatprep.subr.mxu0 0.0
    %2428 = vmatpush1.msra.mxu0 0.0
    %2429 = vmatprep.subr.mxu0 0.0
    %2430 = vmatpush1.msra.mxu0 0.0
    %2431 = vmatprep.subr.mxu0 0.0
    %2432 = vmatpush1.msra.mxu0 0.0
    %2433 = vmatprep.subr.mxu0 0.0
    %2434 = vmatpush1.msra.mxu0 0.0
    %2435 = vmatprep.subr.mxu0 0.0
    %2436 = vmatpush1.msra.mxu0 0.0
    %2437 = vmatprep.subr.mxu0 0.0
    %2438 = vmatpush1.msra.mxu0 0.0
    %2439 = vmatprep.subr.mxu0 0.0
    %2440 = vmatpush1.msra.mxu0 0.0
    %2441 = vmatprep.subr.mxu0 0.0
    %2442 = vmatpush1.msra.mxu0 0.0
    %2443 = vmatprep.subr.mxu0 0.0
    %2444 = vmatpush1.msra.mxu0 0.0
    %2445 = vmatprep.subr.mxu0 0.0
    %2446 = vmatpush1.msra.mxu0 0.0
    %2447 = vmatprep.subr.mxu0 0.0
    %2448 = vmatpush1.msra.mxu0 0.0
    %2449 = vmatprep.subr.mxu0 0.0
    %2450 = vmatpush1.msra.mxu0 0.0
    %2451 = vmatprep.mubr.f32.mxu0 0.0
    %2452 = vmatmul.mubr.f32.gmra.mrb[0].mxu0 %v2077
    %v2453 = vpop.f32.mrb[0].mxu0
    %v2454 = vadd.f32 0.0, %v2453
    %v2455 = vpop.f32.mrb[0].mxu0
    %v2456 = vadd.f32 0.0, %v2455
    %2457 = vdwg.mxu0
    %2458 = vmatprep.subr.mxu0 %v2326
    %2459 = vmatpush1.msra.mxu0 %v2325
    %2460 = vmatprep.subr.mxu0 %v2330
    %2461 = vmatpush1.msra.mxu0 %v2329
    %2462 = vmatprep.subr.mxu0 %v2334
    %2463 = vmatpush1.msra.mxu0 %v2333
    %2464 = vmatprep.subr.mxu0 %v2338
    %2465 = vmatpush1.msra.mxu0 %v2337
    %2466 = vmatprep.subr.mxu0 %v2342
    %2467 = vmatpush1.msra.mxu0 %v2341
    %2468 = vmatprep.subr.mxu0 %v2346
    %2469 = vmatpush1.msra.mxu0 %v2345
    %2470 = vmatprep.subr.mxu0 %v2350
    %2471 = vmatpush1.msra.mxu0 %v2349
    %2472 = vmatprep.subr.mxu0 %v2354
    %2473 = vmatpush1.msra.mxu0 %v2353
    %2474 = vmatprep.subr.mxu0 %v2358
    %2475 = vmatpush1.msra.mxu0 %v2357
    %2476 = vmatprep.subr.mxu0 %v2362
    %2477 = vmatpush1.msra.mxu0 %v2361
    %2478 = vmatprep.subr.mxu0 %v2366
    %2479 = vmatpush1.msra.mxu0 %v2365
    %2480 = vmatprep.subr.mxu0 %v2370
    %2481 = vmatpush1.msra.mxu0 %v2369
    %2482 = vmatprep.subr.mxu0 %v2374
    %2483 = vmatpush1.msra.mxu0 %v2373
    %2484 = vmatprep.subr.mxu0 %v2378
    %2485 = vmatpush1.msra.mxu0 %v2377
    %2486 = vmatprep.subr.mxu0 %v2382
    %2487 = vmatpush1.msra.mxu0 %v2381
    %2488 = vmatprep.subr.mxu0 %v2386
    %2489 = vmatpush1.msra.mxu0 %v2385
    %2490 = vmatprep.subr.mxu0 0.0
    %2491 = vmatpush1.msra.mxu0 0.0
    %2492 = vmatprep.subr.mxu0 0.0
    %2493 = vmatpush1.msra.mxu0 0.0
    %2494 = vmatprep.subr.mxu0 0.0
    %2495 = vmatpush1.msra.mxu0 0.0
    %2496 = vmatprep.subr.mxu0 0.0
    %2497 = vmatpush1.msra.mxu0 0.0
    %2498 = vmatprep.subr.mxu0 0.0
    %2499 = vmatpush1.msra.mxu0 0.0
    %2500 = vmatprep.subr.mxu0 0.0
    %2501 = vmatpush1.msra.mxu0 0.0
    %2502 = vmatprep.subr.mxu0 0.0
    %2503 = vmatpush1.msra.mxu0 0.0
    %2504 = vmatprep.subr.mxu0 0.0
    %2505 = vmatpush1.msra.mxu0 0.0
    %2506 = vmatprep.subr.mxu0 0.0
    %2507 = vmatpush1.msra.mxu0 0.0
    %2508 = vmatprep.subr.mxu0 0.0
    %2509 = vmatpush1.msra.mxu0 0.0
    %2510 = vmatprep.subr.mxu0 0.0
    %2511 = vmatpush1.msra.mxu0 0.0
    %2512 = vmatprep.subr.mxu0 0.0
    %2513 = vmatpush1.msra.mxu0 0.0
    %2514 = vmatprep.subr.mxu0 0.0
    %2515 = vmatpush1.msra.mxu0 0.0
    %2516 = vmatprep.subr.mxu0 0.0
    %2517 = vmatpush1.msra.mxu0 0.0
    %2518 = vmatprep.subr.mxu0 0.0
    %2519 = vmatpush1.msra.mxu0 0.0
    %2520 = vmatprep.subr.mxu0 0.0
    %2521 = vmatpush1.msra.mxu0 0.0
    %2522 = vmatprep.mubr.f32.mxu0 0.0
    %2523 = vmatmul.mubr.f32.gmra.mrb[0].mxu0 %v2077
    %v2524 = vpop.f32.mrb[0].mxu0
    %v2525 = vadd.f32 0.0, %v2524
    %v2526 = vpop.f32.mrb[0].mxu0
    %v2527 = vadd.f32 0.0, %v2526
    %2528 = vdwg.mxu0
    %v2529 = vadd.f32 %v2319, %v2454
    %v2530 = vadd.f32 %v2320, %v2456
    %v2531 = vadd.f32 %v2321, %v2525
    %v2532 = vadd.f32 %v2322, %v2527
    %v2533 = vxor.u32 %v2529, 2147483648
    %v2534 = vmul.f32 %v2533, 1.442695
    %v2535 = vpow.pop %v2534
    %v2536 = vadd.f32 %v2535, 1.0
    %v2537 = vrcp.pop %v2536
    %v2538 = vmul.f32 1.0, %v2537
    %v2539 = vxor.u32 %v2530, 2147483648
    %v2540 = vmul.f32 %v2539, 1.442695
    %v2541 = vpow.pop %v2540
    %v2542 = vadd.f32 %v2541, 1.0
    %v2543 = vrcp.pop %v2542
    %v2544 = vmul.f32 1.0, %v2543
    %v2545 = vtanh.pop %v2531
    %v2546 = vxor.u32 %v2532, 2147483648
    %v2547 = vmul.f32 %v2546, 1.442695
    %v2548 = vpow.pop %v2547
    %v2549 = vadd.f32 %v2548, 1.0
    %v2550 = vrcp.pop %v2549
    %v2551 = vmul.f32 1.0, %v2550
    %v2552 = vmul.f32 %v2544, %v2078
    %v2553 = vmul.f32 %v2538, %v2545
    %v2554 = vadd.f32 %v2552, %v2553
    %v2555 = vtanh.pop %v2554
    %v2556 = vmul.f32 %v2551, %v2555
    %v2557 = vsel %vm2071, %v2317, 0.0
    %s2558 = scalar_lea.vmem [#allocation10], 32
    %2559 = vst [vmem:[%s2558] sm:$0xff] %v2557
    %v2560 = vsel %vm2063, %v2556, 0.0
    %s2561 = scalar_lea.vmem [#allocation11], 24
    %2562 = vst [vmem:[%s2561] sm:$0xff] %v2560
    %v2563 = vsel %vm2071, %v2317, %v2075
    %v2564 = vsel %vm2071, %v2315, %v2076
    %v2565 = vsel %vm2063, %v2556, %v2077
    %v2566 = vsel %vm2063, %v2554, %v2078
    %s2567 = scalar_lea.vmem [#allocation2], 160
    %v2568 = vld [vmem:[%s2567] sm:$0xff]
    %v2569 = vld [vmem:[%s2567 + $0x8] sm:$0xff]
    %v2570 = vld [vmem:[%s2567 + $0x10] sm:$0xff]
    %v2571 = vld [vmem:[%s2567 + $0x18] sm:$0xff]
    %v2572 = vld [vmem:[#allocation7] sm:$0xff]
    %v2573 = vld [vmem:[#allocation7 + $0x8] sm:$0xff]
    %v2574 = vld [vmem:[#allocation7 + $0x10] sm:$0xff]
    %v2575 = vld [vmem:[#allocation7 + $0x18] sm:$0xff]
    %v2576 = vld [vmem:[#allocation7 + $0x20] sm:$0xff]
    %v2577 = vld [vmem:[#allocation7 + $0x28] sm:$0xff]
    %v2578 = vld [vmem:[#allocation7 + $0x30] sm:$0xff]
    %v2579 = vld [vmem:[#allocation7 + $0x38] sm:$0xff]
    %v2580 = vld [vmem:[#allocation7 + $0x40] sm:$0xff]
    %v2581 = vld [vmem:[#allocation7 + $0x48] sm:$0xff]
    %v2582 = vld [vmem:[#allocation7 + $0x50] sm:$0xff]
    %v2583 = vld [vmem:[#allocation7 + $0x58] sm:$0xff]
    %v2584 = vld [vmem:[#allocation7 + $0x60] sm:$0xff]
    %v2585 = vld [vmem:[#allocation7 + $0x68] sm:$0xff]
    %v2586 = vld [vmem:[#allocation7 + $0x70] sm:$0xff]
    %v2587 = vld [vmem:[#allocation7 + $0x78] sm:$0xff]
    %v2588 = vld [vmem:[#allocation7 + $0x80] sm:$0xff]
    %v2589 = vld [vmem:[#allocation7 + $0x88] sm:$0xff]
    %v2590 = vld [vmem:[#allocation7 + $0x90] sm:$0xff]
    %v2591 = vld [vmem:[#allocation7 + $0x98] sm:$0xff]
    %v2592 = vld [vmem:[#allocation7 + $0xa0] sm:$0xff]
    %v2593 = vld [vmem:[#allocation7 + $0xa8] sm:$0xff]
    %v2594 = vld [vmem:[#allocation7 + $0xb0] sm:$0xff]
    %v2595 = vld [vmem:[#allocation7 + $0xb8] sm:$0xff]
    %v2596 = vld [vmem:[#allocation7 + $0xc0] sm:$0xff]
    %v2597 = vld [vmem:[#allocation7 + $0xc8] sm:$0xff]
    %v2598 = vld [vmem:[#allocation7 + $0xd0] sm:$0xff]
    %v2599 = vld [vmem:[#allocation7 + $0xd8] sm:$0xff]
    %v2600 = vld [vmem:[#allocation7 + $0xe0] sm:$0xff]
    %v2601 = vld [vmem:[#allocation7 + $0xe8] sm:$0xff]
    %v2602 = vld [vmem:[#allocation7 + $0xf0] sm:$0xff]
    %v2603 = vld [vmem:[#allocation7 + $0xf8] sm:$0xff]
    %v2604 = vld [vmem:[#allocation7 + $0x100] sm:$0xff]
    %v2605 = vld [vmem:[#allocation7 + $0x108] sm:$0xff]
    %v2606 = vld [vmem:[#allocation7 + $0x110] sm:$0xff]
    %v2607 = vld [vmem:[#allocation7 + $0x118] sm:$0xff]
    %v2608 = vld [vmem:[#allocation7 + $0x120] sm:$0xff]
    %v2609 = vld [vmem:[#allocation7 + $0x128] sm:$0xff]
    %v2610 = vld [vmem:[#allocation7 + $0x130] sm:$0xff]
    %v2611 = vld [vmem:[#allocation7 + $0x138] sm:$0xff]
    %v2612 = vld [vmem:[#allocation7 + $0x140] sm:$0xff]
    %v2613 = vld [vmem:[#allocation7 + $0x148] sm:$0xff]
    %v2614 = vld [vmem:[#allocation7 + $0x150] sm:$0xff]
    %v2615 = vld [vmem:[#allocation7 + $0x158] sm:$0xff]
    %v2616 = vld [vmem:[#allocation7 + $0x160] sm:$0xff]
    %v2617 = vld [vmem:[#allocation7 + $0x168] sm:$0xff]
    %v2618 = vld [vmem:[#allocation7 + $0x170] sm:$0xff]
    %v2619 = vld [vmem:[#allocation7 + $0x178] sm:$0xff]
    %v2620 = vld [vmem:[#allocation7 + $0x180] sm:$0xff]
    %v2621 = vld [vmem:[#allocation7 + $0x188] sm:$0xff]
    %v2622 = vld [vmem:[#allocation7 + $0x190] sm:$0xff]
    %v2623 = vld [vmem:[#allocation7 + $0x198] sm:$0xff]
    %v2624 = vld [vmem:[#allocation7 + $0x1a0] sm:$0xff]
    %v2625 = vld [vmem:[#allocation7 + $0x1a8] sm:$0xff]
    %v2626 = vld [vmem:[#allocation7 + $0x1b0] sm:$0xff]
    %v2627 = vld [vmem:[#allocation7 + $0x1b8] sm:$0xff]
    %v2628 = vld [vmem:[#allocation7 + $0x1c0] sm:$0xff]
    %v2629 = vld [vmem:[#allocation7 + $0x1c8] sm:$0xff]
    %v2630 = vld [vmem:[#allocation7 + $0x1d0] sm:$0xff]
    %v2631 = vld [vmem:[#allocation7 + $0x1d8] sm:$0xff]
    %v2632 = vld [vmem:[#allocation7 + $0x1e0] sm:$0xff]
    %v2633 = vld [vmem:[#allocation7 + $0x1e8] sm:$0xff]
    %v2634 = vld [vmem:[#allocation7 + $0x1f0] sm:$0xff]
    %v2635 = vld [vmem:[#allocation7 + $0x1f8] sm:$0xff]
    %2636 = vmatprep.subr.mxu0 %v2573
    %2637 = vmatpush1.msra.mxu0 %v2572
    %2638 = vmatprep.subr.mxu0 %v2577
    %2639 = vmatpush1.msra.mxu0 %v2576
    %2640 = vmatprep.subr.mxu0 %v2581
    %2641 = vmatpush1.msra.mxu0 %v2580
    %2642 = vmatprep.subr.mxu0 %v2585
    %2643 = vmatpush1.msra.mxu0 %v2584
    %2644 = vmatprep.subr.mxu0 %v2589
    %2645 = vmatpush1.msra.mxu0 %v2588
    %2646 = vmatprep.subr.mxu0 %v2593
    %2647 = vmatpush1.msra.mxu0 %v2592
    %2648 = vmatprep.subr.mxu0 %v2597
    %2649 = vmatpush1.msra.mxu0 %v2596
    %2650 = vmatprep.subr.mxu0 %v2601
    %2651 = vmatpush1.msra.mxu0 %v2600
    %2652 = vmatprep.subr.mxu0 %v2605
    %2653 = vmatpush1.msra.mxu0 %v2604
    %2654 = vmatprep.subr.mxu0 %v2609
    %2655 = vmatpush1.msra.mxu0 %v2608
    %2656 = vmatprep.subr.mxu0 %v2613
    %2657 = vmatpush1.msra.mxu0 %v2612
    %2658 = vmatprep.subr.mxu0 %v2617
    %2659 = vmatpush1.msra.mxu0 %v2616
    %2660 = vmatprep.subr.mxu0 %v2621
    %2661 = vmatpush1.msra.mxu0 %v2620
    %2662 = vmatprep.subr.mxu0 %v2625
    %2663 = vmatpush1.msra.mxu0 %v2624
    %2664 = vmatprep.subr.mxu0 %v2629
    %2665 = vmatpush1.msra.mxu0 %v2628
    %2666 = vmatprep.subr.mxu0 %v2633
    %2667 = vmatpush1.msra.mxu0 %v2632
    %2668 = vmatprep.subr.mxu0 0.0
    %2669 = vmatpush1.msra.mxu0 0.0
    %2670 = vmatprep.subr.mxu0 0.0
    %2671 = vmatpush1.msra.mxu0 0.0
    %2672 = vmatprep.subr.mxu0 0.0
    %2673 = vmatpush1.msra.mxu0 0.0
    %2674 = vmatprep.subr.mxu0 0.0
    %2675 = vmatpush1.msra.mxu0 0.0
    %2676 = vmatprep.subr.mxu0 0.0
    %2677 = vmatpush1.msra.mxu0 0.0
    %2678 = vmatprep.subr.mxu0 0.0
    %2679 = vmatpush1.msra.mxu0 0.0
    %2680 = vmatprep.subr.mxu0 0.0
    %2681 = vmatpush1.msra.mxu0 0.0
    %2682 = vmatprep.subr.mxu0 0.0
    %2683 = vmatpush1.msra.mxu0 0.0
    %2684 = vmatprep.subr.mxu0 0.0
    %2685 = vmatpush1.msra.mxu0 0.0
    %2686 = vmatprep.subr.mxu0 0.0
    %2687 = vmatpush1.msra.mxu0 0.0
    %2688 = vmatprep.subr.mxu0 0.0
    %2689 = vmatpush1.msra.mxu0 0.0
    %2690 = vmatprep.subr.mxu0 0.0
    %2691 = vmatpush1.msra.mxu0 0.0
    %2692 = vmatprep.subr.mxu0 0.0
    %2693 = vmatpush1.msra.mxu0 0.0
    %2694 = vmatprep.subr.mxu0 0.0
    %2695 = vmatpush1.msra.mxu0 0.0
    %2696 = vmatprep.subr.mxu0 0.0
    %2697 = vmatpush1.msra.mxu0 0.0
    %2698 = vmatprep.subr.mxu0 0.0
    %2699 = vmatpush1.msra.mxu0 0.0
    %2700 = vmatprep.mubr.f32.mxu0 0.0
    %2701 = vmatmul.mubr.f32.gmra.mrb[0].mxu0 %v2563
    %v2702 = vpop.f32.mrb[0].mxu0
    %v2703 = vadd.f32 0.0, %v2702
    %v2704 = vpop.f32.mrb[0].mxu0
    %v2705 = vadd.f32 0.0, %v2704
    %2706 = vdwg.mxu0
    %2707 = vmatprep.subr.mxu0 %v2575
    %2708 = vmatpush1.msra.mxu0 %v2574
    %2709 = vmatprep.subr.mxu0 %v2579
    %2710 = vmatpush1.msra.mxu0 %v2578
    %2711 = vmatprep.subr.mxu0 %v2583
    %2712 = vmatpush1.msra.mxu0 %v2582
    %2713 = vmatprep.subr.mxu0 %v2587
    %2714 = vmatpush1.msra.mxu0 %v2586
    %2715 = vmatprep.subr.mxu0 %v2591
    %2716 = vmatpush1.msra.mxu0 %v2590
    %2717 = vmatprep.subr.mxu0 %v2595
    %2718 = vmatpush1.msra.mxu0 %v2594
    %2719 = vmatprep.subr.mxu0 %v2599
    %2720 = vmatpush1.msra.mxu0 %v2598
    %2721 = vmatprep.subr.mxu0 %v2603
    %2722 = vmatpush1.msra.mxu0 %v2602
    %2723 = vmatprep.subr.mxu0 %v2607
    %2724 = vmatpush1.msra.mxu0 %v2606
    %2725 = vmatprep.subr.mxu0 %v2611
    %2726 = vmatpush1.msra.mxu0 %v2610
    %2727 = vmatprep.subr.mxu0 %v2615
    %2728 = vmatpush1.msra.mxu0 %v2614
    %2729 = vmatprep.subr.mxu0 %v2619
    %2730 = vmatpush1.msra.mxu0 %v2618
    %2731 = vmatprep.subr.mxu0 %v2623
    %2732 = vmatpush1.msra.mxu0 %v2622
    %2733 = vmatprep.subr.mxu0 %v2627
    %2734 = vmatpush1.msra.mxu0 %v2626
    %2735 = vmatprep.subr.mxu0 %v2631
    %2736 = vmatpush1.msra.mxu0 %v2630
    %2737 = vmatprep.subr.mxu0 %v2635
    %2738 = vmatpush1.msra.mxu0 %v2634
    %2739 = vmatprep.subr.mxu0 0.0
    %2740 = vmatpush1.msra.mxu0 0.0
    %2741 = vmatprep.subr.mxu0 0.0
    %2742 = vmatpush1.msra.mxu0 0.0
    %2743 = vmatprep.subr.mxu0 0.0
    %2744 = vmatpush1.msra.mxu0 0.0
    %2745 = vmatprep.subr.mxu0 0.0
    %2746 = vmatpush1.msra.mxu0 0.0
    %2747 = vmatprep.subr.mxu0 0.0
    %2748 = vmatpush1.msra.mxu0 0.0
    %2749 = vmatprep.subr.mxu0 0.0
    %2750 = vmatpush1.msra.mxu0 0.0
    %2751 = vmatprep.subr.mxu0 0.0
    %2752 = vmatpush1.msra.mxu0 0.0
    %2753 = vmatprep.subr.mxu0 0.0
    %2754 = vmatpush1.msra.mxu0 0.0
    %2755 = vmatprep.subr.mxu0 0.0
    %2756 = vmatpush1.msra.mxu0 0.0
    %2757 = vmatprep.subr.mxu0 0.0
    %2758 = vmatpush1.msra.mxu0 0.0
    %2759 = vmatprep.subr.mxu0 0.0
    %2760 = vmatpush1.msra.mxu0 0.0
    %2761 = vmatprep.subr.mxu0 0.0
    %2762 = vmatpush1.msra.mxu0 0.0
    %2763 = vmatprep.subr.mxu0 0.0
    %2764 = vmatpush1.msra.mxu0 0.0
    %2765 = vmatprep.subr.mxu0 0.0
    %2766 = vmatpush1.msra.mxu0 0.0
    %2767 = vmatprep.subr.mxu0 0.0
    %2768 = vmatpush1.msra.mxu0 0.0
    %2769 = vmatprep.subr.mxu0 0.0
    %2770 = vmatpush1.msra.mxu0 0.0
    %2771 = vmatprep.mubr.f32.mxu0 0.0
    %2772 = vmatmul.mubr.f32.gmra.mrb[0].mxu0 %v2563
    %v2773 = vpop.f32.mrb[0].mxu0
    %v2774 = vadd.f32 0.0, %v2773
    %v2775 = vpop.f32.mrb[0].mxu0
    %v2776 = vadd.f32 0.0, %v2775
    %2777 = vdwg.mxu0
    %v2778 = vadd.f32 %v2568, %v2703
    %v2779 = vadd.f32 %v2569, %v2705
    %v2780 = vadd.f32 %v2570, %v2774
    %v2781 = vadd.f32 %v2571, %v2776
    %v2782 = vxor.u32 %v2778, 2147483648
    %v2783 = vmul.f32 %v2782, 1.442695
    %v2784 = vpow.pop %v2783
    %v2785 = vadd.f32 %v2784, 1.0
    %v2786 = vrcp.pop %v2785
    %v2787 = vmul.f32 1.0, %v2786
    %v2788 = vxor.u32 %v2779, 2147483648
    %v2789 = vmul.f32 %v2788, 1.442695
    %v2790 = vpow.pop %v2789
    %v2791 = vadd.f32 %v2790, 1.0
    %v2792 = vrcp.pop %v2791
    %v2793 = vmul.f32 1.0, %v2792
    %v2794 = vtanh.pop %v2780
    %v2795 = vxor.u32 %v2781, 2147483648
    %v2796 = vmul.f32 %v2795, 1.442695
    %v2797 = vpow.pop %v2796
    %v2798 = vadd.f32 %v2797, 1.0
    %v2799 = vrcp.pop %v2798
    %v2800 = vmul.f32 1.0, %v2799
    %v2801 = vmul.f32 %v2793, %v2564
    %v2802 = vmul.f32 %v2787, %v2794
    %v2803 = vadd.f32 %v2801, %v2802
    %v2804 = vtanh.pop %v2803
    %v2805 = vmul.f32 %v2800, %v2804
    %s2806 = scalar_lea.vmem [#allocation5], 64
    %v2807 = vld [vmem:[%s2806] sm:$0xff]
    %v2808 = vld [vmem:[%s2806 + $0x8] sm:$0xff]
    %v2809 = vld [vmem:[%s2806 + $0x10] sm:$0xff]
    %v2810 = vld [vmem:[%s2806 + $0x18] sm:$0xff]
    %v2811 = vld [vmem:[#allocation8] sm:$0xff]
    %v2812 = vld [vmem:[#allocation8 + $0x8] sm:$0xff]
    %v2813 = vld [vmem:[#allocation8 + $0x10] sm:$0xff]
    %v2814 = vld [vmem:[#allocation8 + $0x18] sm:$0xff]
    %v2815 = vld [vmem:[#allocation8 + $0x20] sm:$0xff]
    %v2816 = vld [vmem:[#allocation8 + $0x28] sm:$0xff]
    %v2817 = vld [vmem:[#allocation8 + $0x30] sm:$0xff]
    %v2818 = vld [vmem:[#allocation8 + $0x38] sm:$0xff]
    %v2819 = vld [vmem:[#allocation8 + $0x40] sm:$0xff]
    %v2820 = vld [vmem:[#allocation8 + $0x48] sm:$0xff]
    %v2821 = vld [vmem:[#allocation8 + $0x50] sm:$0xff]
    %v2822 = vld [vmem:[#allocation8 + $0x58] sm:$0xff]
    %v2823 = vld [vmem:[#allocation8 + $0x60] sm:$0xff]
    %v2824 = vld [vmem:[#allocation8 + $0x68] sm:$0xff]
    %v2825 = vld [vmem:[#allocation8 + $0x70] sm:$0xff]
    %v2826 = vld [vmem:[#allocation8 + $0x78] sm:$0xff]
    %v2827 = vld [vmem:[#allocation8 + $0x80] sm:$0xff]
    %v2828 = vld [vmem:[#allocation8 + $0x88] sm:$0xff]
    %v2829 = vld [vmem:[#allocation8 + $0x90] sm:$0xff]
    %v2830 = vld [vmem:[#allocation8 + $0x98] sm:$0xff]
    %v2831 = vld [vmem:[#allocation8 + $0xa0] sm:$0xff]
    %v2832 = vld [vmem:[#allocation8 + $0xa8] sm:$0xff]
    %v2833 = vld [vmem:[#allocation8 + $0xb0] sm:$0xff]
    %v2834 = vld [vmem:[#allocation8 + $0xb8] sm:$0xff]
    %v2835 = vld [vmem:[#allocation8 + $0xc0] sm:$0xff]
    %v2836 = vld [vmem:[#allocation8 + $0xc8] sm:$0xff]
    %v2837 = vld [vmem:[#allocation8 + $0xd0] sm:$0xff]
    %v2838 = vld [vmem:[#allocation8 + $0xd8] sm:$0xff]
    %v2839 = vld [vmem:[#allocation8 + $0xe0] sm:$0xff]
    %v2840 = vld [vmem:[#allocation8 + $0xe8] sm:$0xff]
    %v2841 = vld [vmem:[#allocation8 + $0xf0] sm:$0xff]
    %v2842 = vld [vmem:[#allocation8 + $0xf8] sm:$0xff]
    %v2843 = vld [vmem:[#allocation8 + $0x100] sm:$0xff]
    %v2844 = vld [vmem:[#allocation8 + $0x108] sm:$0xff]
    %v2845 = vld [vmem:[#allocation8 + $0x110] sm:$0xff]
    %v2846 = vld [vmem:[#allocation8 + $0x118] sm:$0xff]
    %v2847 = vld [vmem:[#allocation8 + $0x120] sm:$0xff]
    %v2848 = vld [vmem:[#allocation8 + $0x128] sm:$0xff]
    %v2849 = vld [vmem:[#allocation8 + $0x130] sm:$0xff]
    %v2850 = vld [vmem:[#allocation8 + $0x138] sm:$0xff]
    %v2851 = vld [vmem:[#allocation8 + $0x140] sm:$0xff]
    %v2852 = vld [vmem:[#allocation8 + $0x148] sm:$0xff]
    %v2853 = vld [vmem:[#allocation8 + $0x150] sm:$0xff]
    %v2854 = vld [vmem:[#allocation8 + $0x158] sm:$0xff]
    %v2855 = vld [vmem:[#allocation8 + $0x160] sm:$0xff]
    %v2856 = vld [vmem:[#allocation8 + $0x168] sm:$0xff]
    %v2857 = vld [vmem:[#allocation8 + $0x170] sm:$0xff]
    %v2858 = vld [vmem:[#allocation8 + $0x178] sm:$0xff]
    %v2859 = vld [vmem:[#allocation8 + $0x180] sm:$0xff]
    %v2860 = vld [vmem:[#allocation8 + $0x188] sm:$0xff]
    %v2861 = vld [vmem:[#allocation8 + $0x190] sm:$0xff]
    %v2862 = vld [vmem:[#allocation8 + $0x198] sm:$0xff]
    %v2863 = vld [vmem:[#allocation8 + $0x1a0] sm:$0xff]
    %v2864 = vld [vmem:[#allocation8 + $0x1a8] sm:$0xff]
    %v2865 = vld [vmem:[#allocation8 + $0x1b0] sm:$0xff]
    %v2866 = vld [vmem:[#allocation8 + $0x1b8] sm:$0xff]
    %v2867 = vld [vmem:[#allocation8 + $0x1c0] sm:$0xff]
    %v2868 = vld [vmem:[#allocation8 + $0x1c8] sm:$0xff]
    %v2869 = vld [vmem:[#allocation8 + $0x1d0] sm:$0xff]
    %v2870 = vld [vmem:[#allocation8 + $0x1d8] sm:$0xff]
    %v2871 = vld [vmem:[#allocation8 + $0x1e0] sm:$0xff]
    %v2872 = vld [vmem:[#allocation8 + $0x1e8] sm:$0xff]
    %v2873 = vld [vmem:[#allocation8 + $0x1f0] sm:$0xff]
    %v2874 = vld [vmem:[#allocation8 + $0x1f8] sm:$0xff]
    %2875 = vmatprep.subr.mxu0 %v2812
    %2876 = vmatpush1.msra.mxu0 %v2811
    %2877 = vmatprep.subr.mxu0 %v2816
    %2878 = vmatpush1.msra.mxu0 %v2815
    %2879 = vmatprep.subr.mxu0 %v2820
    %2880 = vmatpush1.msra.mxu0 %v2819
    %2881 = vmatprep.subr.mxu0 %v2824
    %2882 = vmatpush1.msra.mxu0 %v2823
    %2883 = vmatprep.subr.mxu0 %v2828
    %2884 = vmatpush1.msra.mxu0 %v2827
    %2885 = vmatprep.subr.mxu0 %v2832
    %2886 = vmatpush1.msra.mxu0 %v2831
    %2887 = vmatprep.subr.mxu0 %v2836
    %2888 = vmatpush1.msra.mxu0 %v2835
    %2889 = vmatprep.subr.mxu0 %v2840
    %2890 = vmatpush1.msra.mxu0 %v2839
    %2891 = vmatprep.subr.mxu0 %v2844
    %2892 = vmatpush1.msra.mxu0 %v2843
    %2893 = vmatprep.subr.mxu0 %v2848
    %2894 = vmatpush1.msra.mxu0 %v2847
    %2895 = vmatprep.subr.mxu0 %v2852
    %2896 = vmatpush1.msra.mxu0 %v2851
    %2897 = vmatprep.subr.mxu0 %v2856
    %2898 = vmatpush1.msra.mxu0 %v2855
    %2899 = vmatprep.subr.mxu0 %v2860
    %2900 = vmatpush1.msra.mxu0 %v2859
    %2901 = vmatprep.subr.mxu0 %v2864
    %2902 = vmatpush1.msra.mxu0 %v2863
    %2903 = vmatprep.subr.mxu0 %v2868
    %2904 = vmatpush1.msra.mxu0 %v2867
    %2905 = vmatprep.subr.mxu0 %v2872
    %2906 = vmatpush1.msra.mxu0 %v2871
    %2907 = vmatprep.subr.mxu0 0.0
    %2908 = vmatpush1.msra.mxu0 0.0
    %2909 = vmatprep.subr.mxu0 0.0
    %2910 = vmatpush1.msra.mxu0 0.0
    %2911 = vmatprep.subr.mxu0 0.0
    %2912 = vmatpush1.msra.mxu0 0.0
    %2913 = vmatprep.subr.mxu0 0.0
    %2914 = vmatpush1.msra.mxu0 0.0
    %2915 = vmatprep.subr.mxu0 0.0
    %2916 = vmatpush1.msra.mxu0 0.0
    %2917 = vmatprep.subr.mxu0 0.0
    %2918 = vmatpush1.msra.mxu0 0.0
    %2919 = vmatprep.subr.mxu0 0.0
    %2920 = vmatpush1.msra.mxu0 0.0
    %2921 = vmatprep.subr.mxu0 0.0
    %2922 = vmatpush1.msra.mxu0 0.0
    %2923 = vmatprep.subr.mxu0 0.0
    %2924 = vmatpush1.msra.mxu0 0.0
    %2925 = vmatprep.subr.mxu0 0.0
    %2926 = vmatpush1.msra.mxu0 0.0
    %2927 = vmatprep.subr.mxu0 0.0
    %2928 = vmatpush1.msra.mxu0 0.0
    %2929 = vmatprep.subr.mxu0 0.0
    %2930 = vmatpush1.msra.mxu0 0.0
    %2931 = vmatprep.subr.mxu0 0.0
    %2932 = vmatpush1.msra.mxu0 0.0
    %2933 = vmatprep.subr.mxu0 0.0
    %2934 = vmatpush1.msra.mxu0 0.0
    %2935 = vmatprep.subr.mxu0 0.0
    %2936 = vmatpush1.msra.mxu0 0.0
    %2937 = vmatprep.subr.mxu0 0.0
    %2938 = vmatpush1.msra.mxu0 0.0
    %2939 = vmatprep.mubr.f32.mxu0 0.0
    %2940 = vmatmul.mubr.f32.gmra.mrb[0].mxu0 %v2565
    %v2941 = vpop.f32.mrb[0].mxu0
    %v2942 = vadd.f32 0.0, %v2941
    %v2943 = vpop.f32.mrb[0].mxu0
    %v2944 = vadd.f32 0.0, %v2943
    %2945 = vdwg.mxu0
    %2946 = vmatprep.subr.mxu0 %v2814
    %2947 = vmatpush1.msra.mxu0 %v2813
    %2948 = vmatprep.subr.mxu0 %v2818
    %2949 = vmatpush1.msra.mxu0 %v2817
    %2950 = vmatprep.subr.mxu0 %v2822
    %2951 = vmatpush1.msra.mxu0 %v2821
    %2952 = vmatprep.subr.mxu0 %v2826
    %2953 = vmatpush1.msra.mxu0 %v2825
    %2954 = vmatprep.subr.mxu0 %v2830
    %2955 = vmatpush1.msra.mxu0 %v2829
    %2956 = vmatprep.subr.mxu0 %v2834
    %2957 = vmatpush1.msra.mxu0 %v2833
    %2958 = vmatprep.subr.mxu0 %v2838
    %2959 = vmatpush1.msra.mxu0 %v2837
    %2960 = vmatprep.subr.mxu0 %v2842
    %2961 = vmatpush1.msra.mxu0 %v2841
    %2962 = vmatprep.subr.mxu0 %v2846
    %2963 = vmatpush1.msra.mxu0 %v2845
    %2964 = vmatprep.subr.mxu0 %v2850
    %2965 = vmatpush1.msra.mxu0 %v2849
    %2966 = vmatprep.subr.mxu0 %v2854
    %2967 = vmatpush1.msra.mxu0 %v2853
    %2968 = vmatprep.subr.mxu0 %v2858
    %2969 = vmatpush1.msra.mxu0 %v2857
    %2970 = vmatprep.subr.mxu0 %v2862
    %2971 = vmatpush1.msra.mxu0 %v2861
    %2972 = vmatprep.subr.mxu0 %v2866
    %2973 = vmatpush1.msra.mxu0 %v2865
    %2974 = vmatprep.subr.mxu0 %v2870
    %2975 = vmatpush1.msra.mxu0 %v2869
    %2976 = vmatprep.subr.mxu0 %v2874
    %2977 = vmatpush1.msra.mxu0 %v2873
    %2978 = vmatprep.subr.mxu0 0.0
    %2979 = vmatpush1.msra.mxu0 0.0
    %2980 = vmatprep.subr.mxu0 0.0
    %2981 = vmatpush1.msra.mxu0 0.0
    %2982 = vmatprep.subr.mxu0 0.0
    %2983 = vmatpush1.msra.mxu0 0.0
    %2984 = vmatprep.subr.mxu0 0.0
    %2985 = vmatpush1.msra.mxu0 0.0
    %2986 = vmatprep.subr.mxu0 0.0
    %2987 = vmatpush1.msra.mxu0 0.0
    %2988 = vmatprep.subr.mxu0 0.0
    %2989 = vmatpush1.msra.mxu0 0.0
    %2990 = vmatprep.subr.mxu0 0.0
    %2991 = vmatpush1.msra.mxu0 0.0
    %2992 = vmatprep.subr.mxu0 0.0
    %2993 = vmatpush1.msra.mxu0 0.0
    %2994 = vmatprep.subr.mxu0 0.0
    %2995 = vmatpush1.msra.mxu0 0.0
    %2996 = vmatprep.subr.mxu0 0.0
    %2997 = vmatpush1.msra.mxu0 0.0
    %2998 = vmatprep.subr.mxu0 0.0
    %2999 = vmatpush1.msra.mxu0 0.0
    %3000 = vmatprep.subr.mxu0 0.0
    %3001 = vmatpush1.msra.mxu0 0.0
    %3002 = vmatprep.subr.mxu0 0.0
    %3003 = vmatpush1.msra.mxu0 0.0
    %3004 = vmatprep.subr.mxu0 0.0
    %3005 = vmatpush1.msra.mxu0 0.0
    %3006 = vmatprep.subr.mxu0 0.0
    %3007 = vmatpush1.msra.mxu0 0.0
    %3008 = vmatprep.subr.mxu0 0.0
    %3009 = vmatpush1.msra.mxu0 0.0
    %3010 = vmatprep.mubr.f32.mxu0 0.0
    %3011 = vmatmul.mubr.f32.gmra.mrb[0].mxu0 %v2565
    %v3012 = vpop.f32.mrb[0].mxu0
    %v3013 = vadd.f32 0.0, %v3012
    %v3014 = vpop.f32.mrb[0].mxu0
    %v3015 = vadd.f32 0.0, %v3014
    %3016 = vdwg.mxu0
    %v3017 = vadd.f32 %v2807, %v2942
    %v3018 = vadd.f32 %v2808, %v2944
    %v3019 = vadd.f32 %v2809, %v3013
    %v3020 = vadd.f32 %v2810, %v3015
    %v3021 = vxor.u32 %v3017, 2147483648
    %v3022 = vmul.f32 %v3021, 1.442695
    %v3023 = vpow.pop %v3022
    %v3024 = vadd.f32 %v3023, 1.0
    %v3025 = vrcp.pop %v3024
    %v3026 = vmul.f32 1.0, %v3025
    %v3027 = vxor.u32 %v3018, 2147483648
    %v3028 = vmul.f32 %v3027, 1.442695
    %v3029 = vpow.pop %v3028
    %v3030 = vadd.f32 %v3029, 1.0
    %v3031 = vrcp.pop %v3030
    %v3032 = vmul.f32 1.0, %v3031
    %v3033 = vtanh.pop %v3019
    %v3034 = vxor.u32 %v3020, 2147483648
    %v3035 = vmul.f32 %v3034, 1.442695
    %v3036 = vpow.pop %v3035
    %v3037 = vadd.f32 %v3036, 1.0
    %v3038 = vrcp.pop %v3037
    %v3039 = vmul.f32 1.0, %v3038
    %v3040 = vmul.f32 %v3032, %v2566
    %v3041 = vmul.f32 %v3026, %v3033
    %v3042 = vadd.f32 %v3040, %v3041
    %v3043 = vtanh.pop %v3042
    %v3044 = vmul.f32 %v3039, %v3043
    %v3045 = vsel %vm1571, %v2805, 0.0
    %s3046 = scalar_lea.vmem [#allocation10], 40
    %3047 = vst [vmem:[%s3046] sm:$0xff] %v3045
    %v3048 = vsel %vm1563, %v3044, 0.0
    %s3049 = scalar_lea.vmem [#allocation11], 16
    %3050 = vst [vmem:[%s3049] sm:$0xff] %v3048
    %v3051 = vsel %vm1571, %v2805, %v2563
    %v3052 = vsel %vm1571, %v2803, %v2564
    %v3053 = vsel %vm1563, %v3044, %v2565
    %v3054 = vsel %vm1563, %v3042, %v2566
    %s3055 = scalar_lea.vmem [#allocation2], 192
    %v3056 = vld [vmem:[%s3055] sm:$0xff]
    %v3057 = vld [vmem:[%s3055 + $0x8] sm:$0xff]
    %v3058 = vld [vmem:[%s3055 + $0x10] sm:$0xff]
    %v3059 = vld [vmem:[%s3055 + $0x18] sm:$0xff]
    %v3060 = vld [vmem:[#allocation7] sm:$0xff]
    %v3061 = vld [vmem:[#allocation7 + $0x8] sm:$0xff]
    %v3062 = vld [vmem:[#allocation7 + $0x10] sm:$0xff]
    %v3063 = vld [vmem:[#allocation7 + $0x18] sm:$0xff]
    %v3064 = vld [vmem:[#allocation7 + $0x20] sm:$0xff]
    %v3065 = vld [vmem:[#allocation7 + $0x28] sm:$0xff]
    %v3066 = vld [vmem:[#allocation7 + $0x30] sm:$0xff]
    %v3067 = vld [vmem:[#allocation7 + $0x38] sm:$0xff]
    %v3068 = vld [vmem:[#allocation7 + $0x40] sm:$0xff]
    %v3069 = vld [vmem:[#allocation7 + $0x48] sm:$0xff]
    %v3070 = vld [vmem:[#allocation7 + $0x50] sm:$0xff]
    %v3071 = vld [vmem:[#allocation7 + $0x58] sm:$0xff]
    %v3072 = vld [vmem:[#allocation7 + $0x60] sm:$0xff]
    %v3073 = vld [vmem:[#allocation7 + $0x68] sm:$0xff]
    %v3074 = vld [vmem:[#allocation7 + $0x70] sm:$0xff]
    %v3075 = vld [vmem:[#allocation7 + $0x78] sm:$0xff]
    %v3076 = vld [vmem:[#allocation7 + $0x80] sm:$0xff]
    %v3077 = vld [vmem:[#allocation7 + $0x88] sm:$0xff]
    %v3078 = vld [vmem:[#allocation7 + $0x90] sm:$0xff]
    %v3079 = vld [vmem:[#allocation7 + $0x98] sm:$0xff]
    %v3080 = vld [vmem:[#allocation7 + $0xa0] sm:$0xff]
    %v3081 = vld [vmem:[#allocation7 + $0xa8] sm:$0xff]
    %v3082 = vld [vmem:[#allocation7 + $0xb0] sm:$0xff]
    %v3083 = vld [vmem:[#allocation7 + $0xb8] sm:$0xff]
    %v3084 = vld [vmem:[#allocation7 + $0xc0] sm:$0xff]
    %v3085 = vld [vmem:[#allocation7 + $0xc8] sm:$0xff]
    %v3086 = vld [vmem:[#allocation7 + $0xd0] sm:$0xff]
    %v3087 = vld [vmem:[#allocation7 + $0xd8] sm:$0xff]
    %v3088 = vld [vmem:[#allocation7 + $0xe0] sm:$0xff]
    %v3089 = vld [vmem:[#allocation7 + $0xe8] sm:$0xff]
    %v3090 = vld [vmem:[#allocation7 + $0xf0] sm:$0xff]
    %v3091 = vld [vmem:[#allocation7 + $0xf8] sm:$0xff]
    %v3092 = vld [vmem:[#allocation7 + $0x100] sm:$0xff]
    %v3093 = vld [vmem:[#allocation7 + $0x108] sm:$0xff]
    %v3094 = vld [vmem:[#allocation7 + $0x110] sm:$0xff]
    %v3095 = vld [vmem:[#allocation7 + $0x118] sm:$0xff]
    %v3096 = vld [vmem:[#allocation7 + $0x120] sm:$0xff]
    %v3097 = vld [vmem:[#allocation7 + $0x128] sm:$0xff]
    %v3098 = vld [vmem:[#allocation7 + $0x130] sm:$0xff]
    %v3099 = vld [vmem:[#allocation7 + $0x138] sm:$0xff]
    %v3100 = vld [vmem:[#allocation7 + $0x140] sm:$0xff]
    %v3101 = vld [vmem:[#allocation7 + $0x148] sm:$0xff]
    %v3102 = vld [vmem:[#allocation7 + $0x150] sm:$0xff]
    %v3103 = vld [vmem:[#allocation7 + $0x158] sm:$0xff]
    %v3104 = vld [vmem:[#allocation7 + $0x160] sm:$0xff]
    %v3105 = vld [vmem:[#allocation7 + $0x168] sm:$0xff]
    %v3106 = vld [vmem:[#allocation7 + $0x170] sm:$0xff]
    %v3107 = vld [vmem:[#allocation7 + $0x178] sm:$0xff]
    %v3108 = vld [vmem:[#allocation7 + $0x180] sm:$0xff]
    %v3109 = vld [vmem:[#allocation7 + $0x188] sm:$0xff]
    %v3110 = vld [vmem:[#allocation7 + $0x190] sm:$0xff]
    %v3111 = vld [vmem:[#allocation7 + $0x198] sm:$0xff]
    %v3112 = vld [vmem:[#allocation7 + $0x1a0] sm:$0xff]
    %v3113 = vld [vmem:[#allocation7 + $0x1a8] sm:$0xff]
    %v3114 = vld [vmem:[#allocation7 + $0x1b0] sm:$0xff]
    %v3115 = vld [vmem:[#allocation7 + $0x1b8] sm:$0xff]
    %v3116 = vld [vmem:[#allocation7 + $0x1c0] sm:$0xff]
    %v3117 = vld [vmem:[#allocation7 + $0x1c8] sm:$0xff]
    %v3118 = vld [vmem:[#allocation7 + $0x1d0] sm:$0xff]
    %v3119 = vld [vmem:[#allocation7 + $0x1d8] sm:$0xff]
    %v3120 = vld [vmem:[#allocation7 + $0x1e0] sm:$0xff]
    %v3121 = vld [vmem:[#allocation7 + $0x1e8] sm:$0xff]
    %v3122 = vld [vmem:[#allocation7 + $0x1f0] sm:$0xff]
    %v3123 = vld [vmem:[#allocation7 + $0x1f8] sm:$0xff]
    %3124 = vmatprep.subr.mxu0 %v3061
    %3125 = vmatpush1.msra.mxu0 %v3060
    %3126 = vmatprep.subr.mxu0 %v3065
    %3127 = vmatpush1.msra.mxu0 %v3064
    %3128 = vmatprep.subr.mxu0 %v3069
    %3129 = vmatpush1.msra.mxu0 %v3068
    %3130 = vmatprep.subr.mxu0 %v3073
    %3131 = vmatpush1.msra.mxu0 %v3072
    %3132 = vmatprep.subr.mxu0 %v3077
    %3133 = vmatpush1.msra.mxu0 %v3076
    %3134 = vmatprep.subr.mxu0 %v3081
    %3135 = vmatpush1.msra.mxu0 %v3080
    %3136 = vmatprep.subr.mxu0 %v3085
    %3137 = vmatpush1.msra.mxu0 %v3084
    %3138 = vmatprep.subr.mxu0 %v3089
    %3139 = vmatpush1.msra.mxu0 %v3088
    %3140 = vmatprep.subr.mxu0 %v3093
    %3141 = vmatpush1.msra.mxu0 %v3092
    %3142 = vmatprep.subr.mxu0 %v3097
    %3143 = vmatpush1.msra.mxu0 %v3096
    %3144 = vmatprep.subr.mxu0 %v3101
    %3145 = vmatpush1.msra.mxu0 %v3100
    %3146 = vmatprep.subr.mxu0 %v3105
    %3147 = vmatpush1.msra.mxu0 %v3104
    %3148 = vmatprep.subr.mxu0 %v3109
    %3149 = vmatpush1.msra.mxu0 %v3108
    %3150 = vmatprep.subr.mxu0 %v3113
    %3151 = vmatpush1.msra.mxu0 %v3112
    %3152 = vmatprep.subr.mxu0 %v3117
    %3153 = vmatpush1.msra.mxu0 %v3116
    %3154 = vmatprep.subr.mxu0 %v3121
    %3155 = vmatpush1.msra.mxu0 %v3120
    %3156 = vmatprep.subr.mxu0 0.0
    %3157 = vmatpush1.msra.mxu0 0.0
    %3158 = vmatprep.subr.mxu0 0.0
    %3159 = vmatpush1.msra.mxu0 0.0
    %3160 = vmatprep.subr.mxu0 0.0
    %3161 = vmatpush1.msra.mxu0 0.0
    %3162 = vmatprep.subr.mxu0 0.0
    %3163 = vmatpush1.msra.mxu0 0.0
    %3164 = vmatprep.subr.mxu0 0.0
    %3165 = vmatpush1.msra.mxu0 0.0
    %3166 = vmatprep.subr.mxu0 0.0
    %3167 = vmatpush1.msra.mxu0 0.0
    %3168 = vmatprep.subr.mxu0 0.0
    %3169 = vmatpush1.msra.mxu0 0.0
    %3170 = vmatprep.subr.mxu0 0.0
    %3171 = vmatpush1.msra.mxu0 0.0
    %3172 = vmatprep.subr.mxu0 0.0
    %3173 = vmatpush1.msra.mxu0 0.0
    %3174 = vmatprep.subr.mxu0 0.0
    %3175 = vmatpush1.msra.mxu0 0.0
    %3176 = vmatprep.subr.mxu0 0.0
    %3177 = vmatpush1.msra.mxu0 0.0
    %3178 = vmatprep.subr.mxu0 0.0
    %3179 = vmatpush1.msra.mxu0 0.0
    %3180 = vmatprep.subr.mxu0 0.0
    %3181 = vmatpush1.msra.mxu0 0.0
    %3182 = vmatprep.subr.mxu0 0.0
    %3183 = vmatpush1.msra.mxu0 0.0
    %3184 = vmatprep.subr.mxu0 0.0
    %3185 = vmatpush1.msra.mxu0 0.0
    %3186 = vmatprep.subr.mxu0 0.0
    %3187 = vmatpush1.msra.mxu0 0.0
    %3188 = vmatprep.mubr.f32.mxu0 0.0
    %3189 = vmatmul.mubr.f32.gmra.mrb[0].mxu0 %v3051
    %v3190 = vpop.f32.mrb[0].mxu0
    %v3191 = vadd.f32 0.0, %v3190
    %v3192 = vpop.f32.mrb[0].mxu0
    %v3193 = vadd.f32 0.0, %v3192
    %3194 = vdwg.mxu0
    %3195 = vmatprep.subr.mxu0 %v3063
    %3196 = vmatpush1.msra.mxu0 %v3062
    %3197 = vmatprep.subr.mxu0 %v3067
    %3198 = vmatpush1.msra.mxu0 %v3066
    %3199 = vmatprep.subr.mxu0 %v3071
    %3200 = vmatpush1.msra.mxu0 %v3070
    %3201 = vmatprep.subr.mxu0 %v3075
    %3202 = vmatpush1.msra.mxu0 %v3074
    %3203 = vmatprep.subr.mxu0 %v3079
    %3204 = vmatpush1.msra.mxu0 %v3078
    %3205 = vmatprep.subr.mxu0 %v3083
    %3206 = vmatpush1.msra.mxu0 %v3082
    %3207 = vmatprep.subr.mxu0 %v3087
    %3208 = vmatpush1.msra.mxu0 %v3086
    %3209 = vmatprep.subr.mxu0 %v3091
    %3210 = vmatpush1.msra.mxu0 %v3090
    %3211 = vmatprep.subr.mxu0 %v3095
    %3212 = vmatpush1.msra.mxu0 %v3094
    %3213 = vmatprep.subr.mxu0 %v3099
    %3214 = vmatpush1.msra.mxu0 %v3098
    %3215 = vmatprep.subr.mxu0 %v3103
    %3216 = vmatpush1.msra.mxu0 %v3102
    %3217 = vmatprep.subr.mxu0 %v3107
    %3218 = vmatpush1.msra.mxu0 %v3106
    %3219 = vmatprep.subr.mxu0 %v3111
    %3220 = vmatpush1.msra.mxu0 %v3110
    %3221 = vmatprep.subr.mxu0 %v3115
    %3222 = vmatpush1.msra.mxu0 %v3114
    %3223 = vmatprep.subr.mxu0 %v3119
    %3224 = vmatpush1.msra.mxu0 %v3118
    %3225 = vmatprep.subr.mxu0 %v3123
    %3226 = vmatpush1.msra.mxu0 %v3122
    %3227 = vmatprep.subr.mxu0 0.0
    %3228 = vmatpush1.msra.mxu0 0.0
    %3229 = vmatprep.subr.mxu0 0.0
    %3230 = vmatpush1.msra.mxu0 0.0
    %3231 = vmatprep.subr.mxu0 0.0
    %3232 = vmatpush1.msra.mxu0 0.0
    %3233 = vmatprep.subr.mxu0 0.0
    %3234 = vmatpush1.msra.mxu0 0.0
    %3235 = vmatprep.subr.mxu0 0.0
    %3236 = vmatpush1.msra.mxu0 0.0
    %3237 = vmatprep.subr.mxu0 0.0
    %3238 = vmatpush1.msra.mxu0 0.0
    %3239 = vmatprep.subr.mxu0 0.0
    %3240 = vmatpush1.msra.mxu0 0.0
    %3241 = vmatprep.subr.mxu0 0.0
    %3242 = vmatpush1.msra.mxu0 0.0
    %3243 = vmatprep.subr.mxu0 0.0
    %3244 = vmatpush1.msra.mxu0 0.0
    %3245 = vmatprep.subr.mxu0 0.0
    %3246 = vmatpush1.msra.mxu0 0.0
    %3247 = vmatprep.subr.mxu0 0.0
    %3248 = vmatpush1.msra.mxu0 0.0
    %3249 = vmatprep.subr.mxu0 0.0
    %3250 = vmatpush1.msra.mxu0 0.0
    %3251 = vmatprep.subr.mxu0 0.0
    %3252 = vmatpush1.msra.mxu0 0.0
    %3253 = vmatprep.subr.mxu0 0.0
    %3254 = vmatpush1.msra.mxu0 0.0
    %3255 = vmatprep.subr.mxu0 0.0
    %3256 = vmatpush1.msra.mxu0 0.0
    %3257 = vmatprep.subr.mxu0 0.0
    %3258 = vmatpush1.msra.mxu0 0.0
    %3259 = vmatprep.mubr.f32.mxu0 0.0
    %3260 = vmatmul.mubr.f32.gmra.mrb[0].mxu0 %v3051
    %v3261 = vpop.f32.mrb[0].mxu0
    %v3262 = vadd.f32 0.0, %v3261
    %v3263 = vpop.f32.mrb[0].mxu0
    %v3264 = vadd.f32 0.0, %v3263
    %3265 = vdwg.mxu0
    %v3266 = vadd.f32 %v3056, %v3191
    %v3267 = vadd.f32 %v3057, %v3193
    %v3268 = vadd.f32 %v3058, %v3262
    %v3269 = vadd.f32 %v3059, %v3264
    %v3270 = vxor.u32 %v3266, 2147483648
    %v3271 = vmul.f32 %v3270, 1.442695
    %v3272 = vpow.pop %v3271
    %v3273 = vadd.f32 %v3272, 1.0
    %v3274 = vrcp.pop %v3273
    %v3275 = vmul.f32 1.0, %v3274
    %v3276 = vxor.u32 %v3267, 2147483648
    %v3277 = vmul.f32 %v3276, 1.442695
    %v3278 = vpow.pop %v3277
    %v3279 = vadd.f32 %v3278, 1.0
    %v3280 = vrcp.pop %v3279
    %v3281 = vmul.f32 1.0, %v3280
    %v3282 = vtanh.pop %v3268
    %v3283 = vxor.u32 %v3269, 2147483648
    %v3284 = vmul.f32 %v3283, 1.442695
    %v3285 = vpow.pop %v3284
    %v3286 = vadd.f32 %v3285, 1.0
    %v3287 = vrcp.pop %v3286
    %v3288 = vmul.f32 1.0, %v3287
    %v3289 = vmul.f32 %v3281, %v3052
    %v3290 = vmul.f32 %v3275, %v3282
    %v3291 = vadd.f32 %v3289, %v3290
    %v3292 = vtanh.pop %v3291
    %v3293 = vmul.f32 %v3288, %v3292
    %s3294 = scalar_lea.vmem [#allocation5], 32
    %v3295 = vld [vmem:[%s3294] sm:$0xff]
    %v3296 = vld [vmem:[%s3294 + $0x8] sm:$0xff]
    %v3297 = vld [vmem:[%s3294 + $0x10] sm:$0xff]
    %v3298 = vld [vmem:[%s3294 + $0x18] sm:$0xff]
    %v3299 = vld [vmem:[#allocation8] sm:$0xff]
    %v3300 = vld [vmem:[#allocation8 + $0x8] sm:$0xff]
    %v3301 = vld [vmem:[#allocation8 + $0x10] sm:$0xff]
    %v3302 = vld [vmem:[#allocation8 + $0x18] sm:$0xff]
    %v3303 = vld [vmem:[#allocation8 + $0x20] sm:$0xff]
    %v3304 = vld [vmem:[#allocation8 + $0x28] sm:$0xff]
    %v3305 = vld [vmem:[#allocation8 + $0x30] sm:$0xff]
    %v3306 = vld [vmem:[#allocation8 + $0x38] sm:$0xff]
    %v3307 = vld [vmem:[#allocation8 + $0x40] sm:$0xff]
    %v3308 = vld [vmem:[#allocation8 + $0x48] sm:$0xff]
    %v3309 = vld [vmem:[#allocation8 + $0x50] sm:$0xff]
    %v3310 = vld [vmem:[#allocation8 + $0x58] sm:$0xff]
    %v3311 = vld [vmem:[#allocation8 + $0x60] sm:$0xff]
    %v3312 = vld [vmem:[#allocation8 + $0x68] sm:$0xff]
    %v3313 = vld [vmem:[#allocation8 + $0x70] sm:$0xff]
    %v3314 = vld [vmem:[#allocation8 + $0x78] sm:$0xff]
    %v3315 = vld [vmem:[#allocation8 + $0x80] sm:$0xff]
    %v3316 = vld [vmem:[#allocation8 + $0x88] sm:$0xff]
    %v3317 = vld [vmem:[#allocation8 + $0x90] sm:$0xff]
    %v3318 = vld [vmem:[#allocation8 + $0x98] sm:$0xff]
    %v3319 = vld [vmem:[#allocation8 + $0xa0] sm:$0xff]
    %v3320 = vld [vmem:[#allocation8 + $0xa8] sm:$0xff]
    %v3321 = vld [vmem:[#allocation8 + $0xb0] sm:$0xff]
    %v3322 = vld [vmem:[#allocation8 + $0xb8] sm:$0xff]
    %v3323 = vld [vmem:[#allocation8 + $0xc0] sm:$0xff]
    %v3324 = vld [vmem:[#allocation8 + $0xc8] sm:$0xff]
    %v3325 = vld [vmem:[#allocation8 + $0xd0] sm:$0xff]
    %v3326 = vld [vmem:[#allocation8 + $0xd8] sm:$0xff]
    %v3327 = vld [vmem:[#allocation8 + $0xe0] sm:$0xff]
    %v3328 = vld [vmem:[#allocation8 + $0xe8] sm:$0xff]
    %v3329 = vld [vmem:[#allocation8 + $0xf0] sm:$0xff]
    %v3330 = vld [vmem:[#allocation8 + $0xf8] sm:$0xff]
    %v3331 = vld [vmem:[#allocation8 + $0x100] sm:$0xff]
    %v3332 = vld [vmem:[#allocation8 + $0x108] sm:$0xff]
    %v3333 = vld [vmem:[#allocation8 + $0x110] sm:$0xff]
    %v3334 = vld [vmem:[#allocation8 + $0x118] sm:$0xff]
    %v3335 = vld [vmem:[#allocation8 + $0x120] sm:$0xff]
    %v3336 = vld [vmem:[#allocation8 + $0x128] sm:$0xff]
    %v3337 = vld [vmem:[#allocation8 + $0x130] sm:$0xff]
    %v3338 = vld [vmem:[#allocation8 + $0x138] sm:$0xff]
    %v3339 = vld [vmem:[#allocation8 + $0x140] sm:$0xff]
    %v3340 = vld [vmem:[#allocation8 + $0x148] sm:$0xff]
    %v3341 = vld [vmem:[#allocation8 + $0x150] sm:$0xff]
    %v3342 = vld [vmem:[#allocation8 + $0x158] sm:$0xff]
    %v3343 = vld [vmem:[#allocation8 + $0x160] sm:$0xff]
    %v3344 = vld [vmem:[#allocation8 + $0x168] sm:$0xff]
    %v3345 = vld [vmem:[#allocation8 + $0x170] sm:$0xff]
    %v3346 = vld [vmem:[#allocation8 + $0x178] sm:$0xff]
    %v3347 = vld [vmem:[#allocation8 + $0x180] sm:$0xff]
    %v3348 = vld [vmem:[#allocation8 + $0x188] sm:$0xff]
    %v3349 = vld [vmem:[#allocation8 + $0x190] sm:$0xff]
    %v3350 = vld [vmem:[#allocation8 + $0x198] sm:$0xff]
    %v3351 = vld [vmem:[#allocation8 + $0x1a0] sm:$0xff]
    %v3352 = vld [vmem:[#allocation8 + $0x1a8] sm:$0xff]
    %v3353 = vld [vmem:[#allocation8 + $0x1b0] sm:$0xff]
    %v3354 = vld [vmem:[#allocation8 + $0x1b8] sm:$0xff]
    %v3355 = vld [vmem:[#allocation8 + $0x1c0] sm:$0xff]
    %v3356 = vld [vmem:[#allocation8 + $0x1c8] sm:$0xff]
    %v3357 = vld [vmem:[#allocation8 + $0x1d0] sm:$0xff]
    %v3358 = vld [vmem:[#allocation8 + $0x1d8] sm:$0xff]
    %v3359 = vld [vmem:[#allocation8 + $0x1e0] sm:$0xff]
    %v3360 = vld [vmem:[#allocation8 + $0x1e8] sm:$0xff]
    %v3361 = vld [vmem:[#allocation8 + $0x1f0] sm:$0xff]
    %v3362 = vld [vmem:[#allocation8 + $0x1f8] sm:$0xff]
    %3363 = vmatprep.subr.mxu0 %v3300
    %3364 = vmatpush1.msra.mxu0 %v3299
    %3365 = vmatprep.subr.mxu0 %v3304
    %3366 = vmatpush1.msra.mxu0 %v3303
    %3367 = vmatprep.subr.mxu0 %v3308
    %3368 = vmatpush1.msra.mxu0 %v3307
    %3369 = vmatprep.subr.mxu0 %v3312
    %3370 = vmatpush1.msra.mxu0 %v3311
    %3371 = vmatprep.subr.mxu0 %v3316
    %3372 = vmatpush1.msra.mxu0 %v3315
    %3373 = vmatprep.subr.mxu0 %v3320
    %3374 = vmatpush1.msra.mxu0 %v3319
    %3375 = vmatprep.subr.mxu0 %v3324
    %3376 = vmatpush1.msra.mxu0 %v3323
    %3377 = vmatprep.subr.mxu0 %v3328
    %3378 = vmatpush1.msra.mxu0 %v3327
    %3379 = vmatprep.subr.mxu0 %v3332
    %3380 = vmatpush1.msra.mxu0 %v3331
    %3381 = vmatprep.subr.mxu0 %v3336
    %3382 = vmatpush1.msra.mxu0 %v3335
    %3383 = vmatprep.subr.mxu0 %v3340
    %3384 = vmatpush1.msra.mxu0 %v3339
    %3385 = vmatprep.subr.mxu0 %v3344
    %3386 = vmatpush1.msra.mxu0 %v3343
    %3387 = vmatprep.subr.mxu0 %v3348
    %3388 = vmatpush1.msra.mxu0 %v3347
    %3389 = vmatprep.subr.mxu0 %v3352
    %3390 = vmatpush1.msra.mxu0 %v3351
    %3391 = vmatprep.subr.mxu0 %v3356
    %3392 = vmatpush1.msra.mxu0 %v3355
    %3393 = vmatprep.subr.mxu0 %v3360
    %3394 = vmatpush1.msra.mxu0 %v3359
    %3395 = vmatprep.subr.mxu0 0.0
    %3396 = vmatpush1.msra.mxu0 0.0
    %3397 = vmatprep.subr.mxu0 0.0
    %3398 = vmatpush1.msra.mxu0 0.0
    %3399 = vmatprep.subr.mxu0 0.0
    %3400 = vmatpush1.msra.mxu0 0.0
    %3401 = vmatprep.subr.mxu0 0.0
    %3402 = vmatpush1.msra.mxu0 0.0
    %3403 = vmatprep.subr.mxu0 0.0
    %3404 = vmatpush1.msra.mxu0 0.0
    %3405 = vmatprep.subr.mxu0 0.0
    %3406 = vmatpush1.msra.mxu0 0.0
    %3407 = vmatprep.subr.mxu0 0.0
    %3408 = vmatpush1.msra.mxu0 0.0
    %3409 = vmatprep.subr.mxu0 0.0
    %3410 = vmatpush1.msra.mxu0 0.0
    %3411 = vmatprep.subr.mxu0 0.0
    %3412 = vmatpush1.msra.mxu0 0.0
    %3413 = vmatprep.subr.mxu0 0.0
    %3414 = vmatpush1.msra.mxu0 0.0
    %3415 = vmatprep.subr.mxu0 0.0
    %3416 = vmatpush1.msra.mxu0 0.0
    %3417 = vmatprep.subr.mxu0 0.0
    %3418 = vmatpush1.msra.mxu0 0.0
    %3419 = vmatprep.subr.mxu0 0.0
    %3420 = vmatpush1.msra.mxu0 0.0
    %3421 = vmatprep.subr.mxu0 0.0
    %3422 = vmatpush1.msra.mxu0 0.0
    %3423 = vmatprep.subr.mxu0 0.0
    %3424 = vmatpush1.msra.mxu0 0.0
    %3425 = vmatprep.subr.mxu0 0.0
    %3426 = vmatpush1.msra.mxu0 0.0
    %3427 = vmatprep.mubr.f32.mxu0 0.0
    %3428 = vmatmul.mubr.f32.gmra.mrb[0].mxu0 %v3053
    %v3429 = vpop.f32.mrb[0].mxu0
    %v3430 = vadd.f32 0.0, %v3429
    %v3431 = vpop.f32.mrb[0].mxu0
    %v3432 = vadd.f32 0.0, %v3431
    %3433 = vdwg.mxu0
    %3434 = vmatprep.subr.mxu0 %v3302
    %3435 = vmatpush1.msra.mxu0 %v3301
    %3436 = vmatprep.subr.mxu0 %v3306
    %3437 = vmatpush1.msra.mxu0 %v3305
    %3438 = vmatprep.subr.mxu0 %v3310
    %3439 = vmatpush1.msra.mxu0 %v3309
    %3440 = vmatprep.subr.mxu0 %v3314
    %3441 = vmatpush1.msra.mxu0 %v3313
    %3442 = vmatprep.subr.mxu0 %v3318
    %3443 = vmatpush1.msra.mxu0 %v3317
    %3444 = vmatprep.subr.mxu0 %v3322
    %3445 = vmatpush1.msra.mxu0 %v3321
    %3446 = vmatprep.subr.mxu0 %v3326
    %3447 = vmatpush1.msra.mxu0 %v3325
    %3448 = vmatprep.subr.mxu0 %v3330
    %3449 = vmatpush1.msra.mxu0 %v3329
    %3450 = vmatprep.subr.mxu0 %v3334
    %3451 = vmatpush1.msra.mxu0 %v3333
    %3452 = vmatprep.subr.mxu0 %v3338
    %3453 = vmatpush1.msra.mxu0 %v3337
    %3454 = vmatprep.subr.mxu0 %v3342
    %3455 = vmatpush1.msra.mxu0 %v3341
    %3456 = vmatprep.subr.mxu0 %v3346
    %3457 = vmatpush1.msra.mxu0 %v3345
    %3458 = vmatprep.subr.mxu0 %v3350
    %3459 = vmatpush1.msra.mxu0 %v3349
    %3460 = vmatprep.subr.mxu0 %v3354
    %3461 = vmatpush1.msra.mxu0 %v3353
    %3462 = vmatprep.subr.mxu0 %v3358
    %3463 = vmatpush1.msra.mxu0 %v3357
    %3464 = vmatprep.subr.mxu0 %v3362
    %3465 = vmatpush1.msra.mxu0 %v3361
    %3466 = vmatprep.subr.mxu0 0.0
    %3467 = vmatpush1.msra.mxu0 0.0
    %3468 = vmatprep.subr.mxu0 0.0
    %3469 = vmatpush1.msra.mxu0 0.0
    %3470 = vmatprep.subr.mxu0 0.0
    %3471 = vmatpush1.msra.mxu0 0.0
    %3472 = vmatprep.subr.mxu0 0.0
    %3473 = vmatpush1.msra.mxu0 0.0
    %3474 = vmatprep.subr.mxu0 0.0
    %3475 = vmatpush1.msra.mxu0 0.0
    %3476 = vmatprep.subr.mxu0 0.0
    %3477 = vmatpush1.msra.mxu0 0.0
    %3478 = vmatprep.subr.mxu0 0.0
    %3479 = vmatpush1.msra.mxu0 0.0
    %3480 = vmatprep.subr.mxu0 0.0
    %3481 = vmatpush1.msra.mxu0 0.0
    %3482 = vmatprep.subr.mxu0 0.0
    %3483 = vmatpush1.msra.mxu0 0.0
    %3484 = vmatprep.subr.mxu0 0.0
    %3485 = vmatpush1.msra.mxu0 0.0
    %3486 = vmatprep.subr.mxu0 0.0
    %3487 = vmatpush1.msra.mxu0 0.0
    %3488 = vmatprep.subr.mxu0 0.0
    %3489 = vmatpush1.msra.mxu0 0.0
    %3490 = vmatprep.subr.mxu0 0.0
    %3491 = vmatpush1.msra.mxu0 0.0
    %3492 = vmatprep.subr.mxu0 0.0
    %3493 = vmatpush1.msra.mxu0 0.0
    %3494 = vmatprep.subr.mxu0 0.0
    %3495 = vmatpush1.msra.mxu0 0.0
    %3496 = vmatprep.subr.mxu0 0.0
    %3497 = vmatpush1.msra.mxu0 0.0
    %3498 = vmatprep.mubr.f32.mxu0 0.0
    %3499 = vmatmul.mubr.f32.gmra.mrb[0].mxu0 %v3053
    %v3500 = vpop.f32.mrb[0].mxu0
    %v3501 = vadd.f32 0.0, %v3500
    %v3502 = vpop.f32.mrb[0].mxu0
    %v3503 = vadd.f32 0.0, %v3502
    %3504 = vdwg.mxu0
    %v3505 = vadd.f32 %v3295, %v3430
    %v3506 = vadd.f32 %v3296, %v3432
    %v3507 = vadd.f32 %v3297, %v3501
    %v3508 = vadd.f32 %v3298, %v3503
    %v3509 = vxor.u32 %v3505, 2147483648
    %v3510 = vmul.f32 %v3509, 1.442695
    %v3511 = vpow.pop %v3510
    %v3512 = vadd.f32 %v3511, 1.0
    %v3513 = vrcp.pop %v3512
    %v3514 = vmul.f32 1.0, %v3513
    %v3515 = vxor.u32 %v3506, 2147483648
    %v3516 = vmul.f32 %v3515, 1.442695
    %v3517 = vpow.pop %v3516
    %v3518 = vadd.f32 %v3517, 1.0
    %v3519 = vrcp.pop %v3518
    %v3520 = vmul.f32 1.0, %v3519
    %v3521 = vtanh.pop %v3507
    %v3522 = vxor.u32 %v3508, 2147483648
    %v3523 = vmul.f32 %v3522, 1.442695
    %v3524 = vpow.pop %v3523
    %v3525 = vadd.f32 %v3524, 1.0
    %v3526 = vrcp.pop %v3525
    %v3527 = vmul.f32 1.0, %v3526
    %v3528 = vmul.f32 %v3520, %v3054
    %v3529 = vmul.f32 %v3514, %v3521
    %v3530 = vadd.f32 %v3528, %v3529
    %v3531 = vtanh.pop %v3530
    %v3532 = vmul.f32 %v3527, %v3531
    %v3533 = vsel %vm1071, %v3293, 0.0
    %s3534 = scalar_lea.vmem [#allocation10], 48
    %3535 = vst [vmem:[%s3534] sm:$0xff] %v3533
    %v3536 = vsel %vm1063, %v3532, 0.0
    %s3537 = scalar_lea.vmem [#allocation11], 8
    %3538 = vst [vmem:[%s3537] sm:$0xff] %v3536
    %v3539 = vsel %vm1071, %v3293, %v3051
    %v3540 = vsel %vm1071, %v3291, %v3052
    %v3541 = vsel %vm1063, %v3532, %v3053
    %v3542 = vsel %vm1063, %v3530, %v3054
    %s3543 = scalar_lea.vmem [#allocation2], 224
    %v3544 = vld [vmem:[%s3543] sm:$0xff]
    %v3545 = vld [vmem:[%s3543 + $0x8] sm:$0xff]
    %v3546 = vld [vmem:[%s3543 + $0x10] sm:$0xff]
    %v3547 = vld [vmem:[%s3543 + $0x18] sm:$0xff]
    %v3548 = vld [vmem:[#allocation7] sm:$0xff]
    %v3549 = vld [vmem:[#allocation7 + $0x8] sm:$0xff]
    %v3550 = vld [vmem:[#allocation7 + $0x10] sm:$0xff]
    %v3551 = vld [vmem:[#allocation7 + $0x18] sm:$0xff]
    %v3552 = vld [vmem:[#allocation7 + $0x20] sm:$0xff]
    %v3553 = vld [vmem:[#allocation7 + $0x28] sm:$0xff]
    %v3554 = vld [vmem:[#allocation7 + $0x30] sm:$0xff]
    %v3555 = vld [vmem:[#allocation7 + $0x38] sm:$0xff]
    %v3556 = vld [vmem:[#allocation7 + $0x40] sm:$0xff]
    %v3557 = vld [vmem:[#allocation7 + $0x48] sm:$0xff]
    %v3558 = vld [vmem:[#allocation7 + $0x50] sm:$0xff]
    %v3559 = vld [vmem:[#allocation7 + $0x58] sm:$0xff]
    %v3560 = vld [vmem:[#allocation7 + $0x60] sm:$0xff]
    %v3561 = vld [vmem:[#allocation7 + $0x68] sm:$0xff]
    %v3562 = vld [vmem:[#allocation7 + $0x70] sm:$0xff]
    %v3563 = vld [vmem:[#allocation7 + $0x78] sm:$0xff]
    %v3564 = vld [vmem:[#allocation7 + $0x80] sm:$0xff]
    %v3565 = vld [vmem:[#allocation7 + $0x88] sm:$0xff]
    %v3566 = vld [vmem:[#allocation7 + $0x90] sm:$0xff]
    %v3567 = vld [vmem:[#allocation7 + $0x98] sm:$0xff]
    %v3568 = vld [vmem:[#allocation7 + $0xa0] sm:$0xff]
    %v3569 = vld [vmem:[#allocation7 + $0xa8] sm:$0xff]
    %v3570 = vld [vmem:[#allocation7 + $0xb0] sm:$0xff]
    %v3571 = vld [vmem:[#allocation7 + $0xb8] sm:$0xff]
    %v3572 = vld [vmem:[#allocation7 + $0xc0] sm:$0xff]
    %v3573 = vld [vmem:[#allocation7 + $0xc8] sm:$0xff]
    %v3574 = vld [vmem:[#allocation7 + $0xd0] sm:$0xff]
    %v3575 = vld [vmem:[#allocation7 + $0xd8] sm:$0xff]
    %v3576 = vld [vmem:[#allocation7 + $0xe0] sm:$0xff]
    %v3577 = vld [vmem:[#allocation7 + $0xe8] sm:$0xff]
    %v3578 = vld [vmem:[#allocation7 + $0xf0] sm:$0xff]
    %v3579 = vld [vmem:[#allocation7 + $0xf8] sm:$0xff]
    %v3580 = vld [vmem:[#allocation7 + $0x100] sm:$0xff]
    %v3581 = vld [vmem:[#allocation7 + $0x108] sm:$0xff]
    %v3582 = vld [vmem:[#allocation7 + $0x110] sm:$0xff]
    %v3583 = vld [vmem:[#allocation7 + $0x118] sm:$0xff]
    %v3584 = vld [vmem:[#allocation7 + $0x120] sm:$0xff]
    %v3585 = vld [vmem:[#allocation7 + $0x128] sm:$0xff]
    %v3586 = vld [vmem:[#allocation7 + $0x130] sm:$0xff]
    %v3587 = vld [vmem:[#allocation7 + $0x138] sm:$0xff]
    %v3588 = vld [vmem:[#allocation7 + $0x140] sm:$0xff]
    %v3589 = vld [vmem:[#allocation7 + $0x148] sm:$0xff]
    %v3590 = vld [vmem:[#allocation7 + $0x150] sm:$0xff]
    %v3591 = vld [vmem:[#allocation7 + $0x158] sm:$0xff]
    %v3592 = vld [vmem:[#allocation7 + $0x160] sm:$0xff]
    %v3593 = vld [vmem:[#allocation7 + $0x168] sm:$0xff]
    %v3594 = vld [vmem:[#allocation7 + $0x170] sm:$0xff]
    %v3595 = vld [vmem:[#allocation7 + $0x178] sm:$0xff]
    %v3596 = vld [vmem:[#allocation7 + $0x180] sm:$0xff]
    %v3597 = vld [vmem:[#allocation7 + $0x188] sm:$0xff]
    %v3598 = vld [vmem:[#allocation7 + $0x190] sm:$0xff]
    %v3599 = vld [vmem:[#allocation7 + $0x198] sm:$0xff]
    %v3600 = vld [vmem:[#allocation7 + $0x1a0] sm:$0xff]
    %v3601 = vld [vmem:[#allocation7 + $0x1a8] sm:$0xff]
    %v3602 = vld [vmem:[#allocation7 + $0x1b0] sm:$0xff]
    %v3603 = vld [vmem:[#allocation7 + $0x1b8] sm:$0xff]
    %v3604 = vld [vmem:[#allocation7 + $0x1c0] sm:$0xff]
    %v3605 = vld [vmem:[#allocation7 + $0x1c8] sm:$0xff]
    %v3606 = vld [vmem:[#allocation7 + $0x1d0] sm:$0xff]
    %v3607 = vld [vmem:[#allocation7 + $0x1d8] sm:$0xff]
    %v3608 = vld [vmem:[#allocation7 + $0x1e0] sm:$0xff]
    %v3609 = vld [vmem:[#allocation7 + $0x1e8] sm:$0xff]
    %v3610 = vld [vmem:[#allocation7 + $0x1f0] sm:$0xff]
    %v3611 = vld [vmem:[#allocation7 + $0x1f8] sm:$0xff]
    %3612 = vmatprep.subr.mxu0 %v3549
    %3613 = vmatpush1.msra.mxu0 %v3548
    %3614 = vmatprep.subr.mxu0 %v3553
    %3615 = vmatpush1.msra.mxu0 %v3552
    %3616 = vmatprep.subr.mxu0 %v3557
    %3617 = vmatpush1.msra.mxu0 %v3556
    %3618 = vmatprep.subr.mxu0 %v3561
    %3619 = vmatpush1.msra.mxu0 %v3560
    %3620 = vmatprep.subr.mxu0 %v3565
    %3621 = vmatpush1.msra.mxu0 %v3564
    %3622 = vmatprep.subr.mxu0 %v3569
    %3623 = vmatpush1.msra.mxu0 %v3568
    %3624 = vmatprep.subr.mxu0 %v3573
    %3625 = vmatpush1.msra.mxu0 %v3572
    %3626 = vmatprep.subr.mxu0 %v3577
    %3627 = vmatpush1.msra.mxu0 %v3576
    %3628 = vmatprep.subr.mxu0 %v3581
    %3629 = vmatpush1.msra.mxu0 %v3580
    %3630 = vmatprep.subr.mxu0 %v3585
    %3631 = vmatpush1.msra.mxu0 %v3584
    %3632 = vmatprep.subr.mxu0 %v3589
    %3633 = vmatpush1.msra.mxu0 %v3588
    %3634 = vmatprep.subr.mxu0 %v3593
    %3635 = vmatpush1.msra.mxu0 %v3592
    %3636 = vmatprep.subr.mxu0 %v3597
    %3637 = vmatpush1.msra.mxu0 %v3596
    %3638 = vmatprep.subr.mxu0 %v3601
    %3639 = vmatpush1.msra.mxu0 %v3600
    %3640 = vmatprep.subr.mxu0 %v3605
    %3641 = vmatpush1.msra.mxu0 %v3604
    %3642 = vmatprep.subr.mxu0 %v3609
    %3643 = vmatpush1.msra.mxu0 %v3608
    %3644 = vmatprep.subr.mxu0 0.0
    %3645 = vmatpush1.msra.mxu0 0.0
    %3646 = vmatprep.subr.mxu0 0.0
    %3647 = vmatpush1.msra.mxu0 0.0
    %3648 = vmatprep.subr.mxu0 0.0
    %3649 = vmatpush1.msra.mxu0 0.0
    %3650 = vmatprep.subr.mxu0 0.0
    %3651 = vmatpush1.msra.mxu0 0.0
    %3652 = vmatprep.subr.mxu0 0.0
    %3653 = vmatpush1.msra.mxu0 0.0
    %3654 = vmatprep.subr.mxu0 0.0
    %3655 = vmatpush1.msra.mxu0 0.0
    %3656 = vmatprep.subr.mxu0 0.0
    %3657 = vmatpush1.msra.mxu0 0.0
    %3658 = vmatprep.subr.mxu0 0.0
    %3659 = vmatpush1.msra.mxu0 0.0
    %3660 = vmatprep.subr.mxu0 0.0
    %3661 = vmatpush1.msra.mxu0 0.0
    %3662 = vmatprep.subr.mxu0 0.0
    %3663 = vmatpush1.msra.mxu0 0.0
    %3664 = vmatprep.subr.mxu0 0.0
    %3665 = vmatpush1.msra.mxu0 0.0
    %3666 = vmatprep.subr.mxu0 0.0
    %3667 = vmatpush1.msra.mxu0 0.0
    %3668 = vmatprep.subr.mxu0 0.0
    %3669 = vmatpush1.msra.mxu0 0.0
    %3670 = vmatprep.subr.mxu0 0.0
    %3671 = vmatpush1.msra.mxu0 0.0
    %3672 = vmatprep.subr.mxu0 0.0
    %3673 = vmatpush1.msra.mxu0 0.0
    %3674 = vmatprep.subr.mxu0 0.0
    %3675 = vmatpush1.msra.mxu0 0.0
    %3676 = vmatprep.mubr.f32.mxu0 0.0
    %3677 = vmatmul.mubr.f32.gmra.mrb[0].mxu0 %v3539
    %v3678 = vpop.f32.mrb[0].mxu0
    %v3679 = vadd.f32 0.0, %v3678
    %v3680 = vpop.f32.mrb[0].mxu0
    %v3681 = vadd.f32 0.0, %v3680
    %3682 = vdwg.mxu0
    %3683 = vmatprep.subr.mxu0 %v3551
    %3684 = vmatpush1.msra.mxu0 %v3550
    %3685 = vmatprep.subr.mxu0 %v3555
    %3686 = vmatpush1.msra.mxu0 %v3554
    %3687 = vmatprep.subr.mxu0 %v3559
    %3688 = vmatpush1.msra.mxu0 %v3558
    %3689 = vmatprep.subr.mxu0 %v3563
    %3690 = vmatpush1.msra.mxu0 %v3562
    %3691 = vmatprep.subr.mxu0 %v3567
    %3692 = vmatpush1.msra.mxu0 %v3566
    %3693 = vmatprep.subr.mxu0 %v3571
    %3694 = vmatpush1.msra.mxu0 %v3570
    %3695 = vmatprep.subr.mxu0 %v3575
    %3696 = vmatpush1.msra.mxu0 %v3574
    %3697 = vmatprep.subr.mxu0 %v3579
    %3698 = vmatpush1.msra.mxu0 %v3578
    %3699 = vmatprep.subr.mxu0 %v3583
    %3700 = vmatpush1.msra.mxu0 %v3582
    %3701 = vmatprep.subr.mxu0 %v3587
    %3702 = vmatpush1.msra.mxu0 %v3586
    %3703 = vmatprep.subr.mxu0 %v3591
    %3704 = vmatpush1.msra.mxu0 %v3590
    %3705 = vmatprep.subr.mxu0 %v3595
    %3706 = vmatpush1.msra.mxu0 %v3594
    %3707 = vmatprep.subr.mxu0 %v3599
    %3708 = vmatpush1.msra.mxu0 %v3598
    %3709 = vmatprep.subr.mxu0 %v3603
    %3710 = vmatpush1.msra.mxu0 %v3602
    %3711 = vmatprep.subr.mxu0 %v3607
    %3712 = vmatpush1.msra.mxu0 %v3606
    %3713 = vmatprep.subr.mxu0 %v3611
    %3714 = vmatpush1.msra.mxu0 %v3610
    %3715 = vmatprep.subr.mxu0 0.0
    %3716 = vmatpush1.msra.mxu0 0.0
    %3717 = vmatprep.subr.mxu0 0.0
    %3718 = vmatpush1.msra.mxu0 0.0
    %3719 = vmatprep.subr.mxu0 0.0
    %3720 = vmatpush1.msra.mxu0 0.0
    %3721 = vmatprep.subr.mxu0 0.0
    %3722 = vmatpush1.msra.mxu0 0.0
    %3723 = vmatprep.subr.mxu0 0.0
    %3724 = vmatpush1.msra.mxu0 0.0
    %3725 = vmatprep.subr.mxu0 0.0
    %3726 = vmatpush1.msra.mxu0 0.0
    %3727 = vmatprep.subr.mxu0 0.0
    %3728 = vmatpush1.msra.mxu0 0.0
    %3729 = vmatprep.subr.mxu0 0.0
    %3730 = vmatpush1.msra.mxu0 0.0
    %3731 = vmatprep.subr.mxu0 0.0
    %3732 = vmatpush1.msra.mxu0 0.0
    %3733 = vmatprep.subr.mxu0 0.0
    %3734 = vmatpush1.msra.mxu0 0.0
    %3735 = vmatprep.subr.mxu0 0.0
    %3736 = vmatpush1.msra.mxu0 0.0
    %3737 = vmatprep.subr.mxu0 0.0
    %3738 = vmatpush1.msra.mxu0 0.0
    %3739 = vmatprep.subr.mxu0 0.0
    %3740 = vmatpush1.msra.mxu0 0.0
    %3741 = vmatprep.subr.mxu0 0.0
    %3742 = vmatpush1.msra.mxu0 0.0
    %3743 = vmatprep.subr.mxu0 0.0
    %3744 = vmatpush1.msra.mxu0 0.0
    %3745 = vmatprep.subr.mxu0 0.0
    %3746 = vmatpush1.msra.mxu0 0.0
    %3747 = vmatprep.mubr.f32.mxu0 0.0
    %3748 = vmatmul.mubr.f32.gmra.mrb[0].mxu0 %v3539
    %v3749 = vpop.f32.mrb[0].mxu0
    %v3750 = vadd.f32 0.0, %v3749
    %v3751 = vpop.f32.mrb[0].mxu0
    %v3752 = vadd.f32 0.0, %v3751
    %3753 = vdwg.mxu0
    %v3754 = vadd.f32 %v3544, %v3679
    %v3755 = vadd.f32 %v3545, %v3681
    %v3756 = vadd.f32 %v3546, %v3750
    %v3757 = vadd.f32 %v3547, %v3752
    %v3758 = vxor.u32 %v3754, 2147483648
    %v3759 = vmul.f32 %v3758, 1.442695
    %v3760 = vpow.pop %v3759
    %v3761 = vadd.f32 %v3760, 1.0
    %v3762 = vrcp.pop %v3761
    %v3763 = vmul.f32 1.0, %v3762
    %v3764 = vxor.u32 %v3755, 2147483648
    %v3765 = vmul.f32 %v3764, 1.442695
    %v3766 = vpow.pop %v3765
    %v3767 = vadd.f32 %v3766, 1.0
    %v3768 = vrcp.pop %v3767
    %v3769 = vmul.f32 1.0, %v3768
    %v3770 = vtanh.pop %v3756
    %v3771 = vxor.u32 %v3757, 2147483648
    %v3772 = vmul.f32 %v3771, 1.442695
    %v3773 = vpow.pop %v3772
    %v3774 = vadd.f32 %v3773, 1.0
    %v3775 = vrcp.pop %v3774
    %v3776 = vmul.f32 1.0, %v3775
    %v3777 = vmul.f32 %v3769, %v3540
    %v3778 = vmul.f32 %v3763, %v3770
    %v3779 = vadd.f32 %v3777, %v3778
    %v3780 = vtanh.pop %v3779
    %v3781 = vmul.f32 %v3776, %v3780
    %v3782 = vld [vmem:[#allocation5] sm:$0xff]
    %v3783 = vld [vmem:[#allocation5 + $0x8] sm:$0xff]
    %v3784 = vld [vmem:[#allocation5 + $0x10] sm:$0xff]
    %v3785 = vld [vmem:[#allocation5 + $0x18] sm:$0xff]
    %v3786 = vld [vmem:[#allocation8] sm:$0xff]
    %v3787 = vld [vmem:[#allocation8 + $0x8] sm:$0xff]
    %v3788 = vld [vmem:[#allocation8 + $0x10] sm:$0xff]
    %v3789 = vld [vmem:[#allocation8 + $0x18] sm:$0xff]
    %v3790 = vld [vmem:[#allocation8 + $0x20] sm:$0xff]
    %v3791 = vld [vmem:[#allocation8 + $0x28] sm:$0xff]
    %v3792 = vld [vmem:[#allocation8 + $0x30] sm:$0xff]
    %v3793 = vld [vmem:[#allocation8 + $0x38] sm:$0xff]
    %v3794 = vld [vmem:[#allocation8 + $0x40] sm:$0xff]
    %v3795 = vld [vmem:[#allocation8 + $0x48] sm:$0xff]
    %v3796 = vld [vmem:[#allocation8 + $0x50] sm:$0xff]
    %v3797 = vld [vmem:[#allocation8 + $0x58] sm:$0xff]
    %v3798 = vld [vmem:[#allocation8 + $0x60] sm:$0xff]
    %v3799 = vld [vmem:[#allocation8 + $0x68] sm:$0xff]
    %v3800 = vld [vmem:[#allocation8 + $0x70] sm:$0xff]
    %v3801 = vld [vmem:[#allocation8 + $0x78] sm:$0xff]
    %v3802 = vld [vmem:[#allocation8 + $0x80] sm:$0xff]
    %v3803 = vld [vmem:[#allocation8 + $0x88] sm:$0xff]
    %v3804 = vld [vmem:[#allocation8 + $0x90] sm:$0xff]
    %v3805 = vld [vmem:[#allocation8 + $0x98] sm:$0xff]
    %v3806 = vld [vmem:[#allocation8 + $0xa0] sm:$0xff]
    %v3807 = vld [vmem:[#allocation8 + $0xa8] sm:$0xff]
    %v3808 = vld [vmem:[#allocation8 + $0xb0] sm:$0xff]
    %v3809 = vld [vmem:[#allocation8 + $0xb8] sm:$0xff]
    %v3810 = vld [vmem:[#allocation8 + $0xc0] sm:$0xff]
    %v3811 = vld [vmem:[#allocation8 + $0xc8] sm:$0xff]
    %v3812 = vld [vmem:[#allocation8 + $0xd0] sm:$0xff]
    %v3813 = vld [vmem:[#allocation8 + $0xd8] sm:$0xff]
    %v3814 = vld [vmem:[#allocation8 + $0xe0] sm:$0xff]
    %v3815 = vld [vmem:[#allocation8 + $0xe8] sm:$0xff]
    %v3816 = vld [vmem:[#allocation8 + $0xf0] sm:$0xff]
    %v3817 = vld [vmem:[#allocation8 + $0xf8] sm:$0xff]
    %v3818 = vld [vmem:[#allocation8 + $0x100] sm:$0xff]
    %v3819 = vld [vmem:[#allocation8 + $0x108] sm:$0xff]
    %v3820 = vld [vmem:[#allocation8 + $0x110] sm:$0xff]
    %v3821 = vld [vmem:[#allocation8 + $0x118] sm:$0xff]
    %v3822 = vld [vmem:[#allocation8 + $0x120] sm:$0xff]
    %v3823 = vld [vmem:[#allocation8 + $0x128] sm:$0xff]
    %v3824 = vld [vmem:[#allocation8 + $0x130] sm:$0xff]
    %v3825 = vld [vmem:[#allocation8 + $0x138] sm:$0xff]
    %v3826 = vld [vmem:[#allocation8 + $0x140] sm:$0xff]
    %v3827 = vld [vmem:[#allocation8 + $0x148] sm:$0xff]
    %v3828 = vld [vmem:[#allocation8 + $0x150] sm:$0xff]
    %v3829 = vld [vmem:[#allocation8 + $0x158] sm:$0xff]
    %v3830 = vld [vmem:[#allocation8 + $0x160] sm:$0xff]
    %v3831 = vld [vmem:[#allocation8 + $0x168] sm:$0xff]
    %v3832 = vld [vmem:[#allocation8 + $0x170] sm:$0xff]
    %v3833 = vld [vmem:[#allocation8 + $0x178] sm:$0xff]
    %v3834 = vld [vmem:[#allocation8 + $0x180] sm:$0xff]
    %v3835 = vld [vmem:[#allocation8 + $0x188] sm:$0xff]
    %v3836 = vld [vmem:[#allocation8 + $0x190] sm:$0xff]
    %v3837 = vld [vmem:[#allocation8 + $0x198] sm:$0xff]
    %v3838 = vld [vmem:[#allocation8 + $0x1a0] sm:$0xff]
    %v3839 = vld [vmem:[#allocation8 + $0x1a8] sm:$0xff]
    %v3840 = vld [vmem:[#allocation8 + $0x1b0] sm:$0xff]
    %v3841 = vld [vmem:[#allocation8 + $0x1b8] sm:$0xff]
    %v3842 = vld [vmem:[#allocation8 + $0x1c0] sm:$0xff]
    %v3843 = vld [vmem:[#allocation8 + $0x1c8] sm:$0xff]
    %v3844 = vld [vmem:[#allocation8 + $0x1d0] sm:$0xff]
    %v3845 = vld [vmem:[#allocation8 + $0x1d8] sm:$0xff]
    %v3846 = vld [vmem:[#allocation8 + $0x1e0] sm:$0xff]
    %v3847 = vld [vmem:[#allocation8 + $0x1e8] sm:$0xff]
    %v3848 = vld [vmem:[#allocation8 + $0x1f0] sm:$0xff]
    %v3849 = vld [vmem:[#allocation8 + $0x1f8] sm:$0xff]
    %3850 = vmatprep.subr.mxu0 %v3787
    %3851 = vmatpush1.msra.mxu0 %v3786
    %3852 = vmatprep.subr.mxu0 %v3791
    %3853 = vmatpush1.msra.mxu0 %v3790
    %3854 = vmatprep.subr.mxu0 %v3795
    %3855 = vmatpush1.msra.mxu0 %v3794
    %3856 = vmatprep.subr.mxu0 %v3799
    %3857 = vmatpush1.msra.mxu0 %v3798
    %3858 = vmatprep.subr.mxu0 %v3803
    %3859 = vmatpush1.msra.mxu0 %v3802
    %3860 = vmatprep.subr.mxu0 %v3807
    %3861 = vmatpush1.msra.mxu0 %v3806
    %3862 = vmatprep.subr.mxu0 %v3811
    %3863 = vmatpush1.msra.mxu0 %v3810
    %3864 = vmatprep.subr.mxu0 %v3815
    %3865 = vmatpush1.msra.mxu0 %v3814
    %3866 = vmatprep.subr.mxu0 %v3819
    %3867 = vmatpush1.msra.mxu0 %v3818
    %3868 = vmatprep.subr.mxu0 %v3823
    %3869 = vmatpush1.msra.mxu0 %v3822
    %3870 = vmatprep.subr.mxu0 %v3827
    %3871 = vmatpush1.msra.mxu0 %v3826
    %3872 = vmatprep.subr.mxu0 %v3831
    %3873 = vmatpush1.msra.mxu0 %v3830
    %3874 = vmatprep.subr.mxu0 %v3835
    %3875 = vmatpush1.msra.mxu0 %v3834
    %3876 = vmatprep.subr.mxu0 %v3839
    %3877 = vmatpush1.msra.mxu0 %v3838
    %3878 = vmatprep.subr.mxu0 %v3843
    %3879 = vmatpush1.msra.mxu0 %v3842
    %3880 = vmatprep.subr.mxu0 %v3847
    %3881 = vmatpush1.msra.mxu0 %v3846
    %3882 = vmatprep.subr.mxu0 0.0
    %3883 = vmatpush1.msra.mxu0 0.0
    %3884 = vmatprep.subr.mxu0 0.0
    %3885 = vmatpush1.msra.mxu0 0.0
    %3886 = vmatprep.subr.mxu0 0.0
    %3887 = vmatpush1.msra.mxu0 0.0
    %3888 = vmatprep.subr.mxu0 0.0
    %3889 = vmatpush1.msra.mxu0 0.0
    %3890 = vmatprep.subr.mxu0 0.0
    %3891 = vmatpush1.msra.mxu0 0.0
    %3892 = vmatprep.subr.mxu0 0.0
    %3893 = vmatpush1.msra.mxu0 0.0
    %3894 = vmatprep.subr.mxu0 0.0
    %3895 = vmatpush1.msra.mxu0 0.0
    %3896 = vmatprep.subr.mxu0 0.0
    %3897 = vmatpush1.msra.mxu0 0.0
    %3898 = vmatprep.subr.mxu0 0.0
    %3899 = vmatpush1.msra.mxu0 0.0
    %3900 = vmatprep.subr.mxu0 0.0
    %3901 = vmatpush1.msra.mxu0 0.0
    %3902 = vmatprep.subr.mxu0 0.0
    %3903 = vmatpush1.msra.mxu0 0.0
    %3904 = vmatprep.subr.mxu0 0.0
    %3905 = vmatpush1.msra.mxu0 0.0
    %3906 = vmatprep.subr.mxu0 0.0
    %3907 = vmatpush1.msra.mxu0 0.0
    %3908 = vmatprep.subr.mxu0 0.0
    %3909 = vmatpush1.msra.mxu0 0.0
    %3910 = vmatprep.subr.mxu0 0.0
    %3911 = vmatpush1.msra.mxu0 0.0
    %3912 = vmatprep.subr.mxu0 0.0
    %3913 = vmatpush1.msra.mxu0 0.0
    %3914 = vmatprep.mubr.f32.mxu0 0.0
    %3915 = vmatmul.mubr.f32.gmra.mrb[0].mxu0 %v3541
    %v3916 = vpop.f32.mrb[0].mxu0
    %v3917 = vadd.f32 0.0, %v3916
    %v3918 = vpop.f32.mrb[0].mxu0
    %v3919 = vadd.f32 0.0, %v3918
    %3920 = vdwg.mxu0
    %3921 = vmatprep.subr.mxu0 %v3789
    %3922 = vmatpush1.msra.mxu0 %v3788
    %3923 = vmatprep.subr.mxu0 %v3793
    %3924 = vmatpush1.msra.mxu0 %v3792
    %3925 = vmatprep.subr.mxu0 %v3797
    %3926 = vmatpush1.msra.mxu0 %v3796
    %3927 = vmatprep.subr.mxu0 %v3801
    %3928 = vmatpush1.msra.mxu0 %v3800
    %3929 = vmatprep.subr.mxu0 %v3805
    %3930 = vmatpush1.msra.mxu0 %v3804
    %3931 = vmatprep.subr.mxu0 %v3809
    %3932 = vmatpush1.msra.mxu0 %v3808
    %3933 = vmatprep.subr.mxu0 %v3813
    %3934 = vmatpush1.msra.mxu0 %v3812
    %3935 = vmatprep.subr.mxu0 %v3817
    %3936 = vmatpush1.msra.mxu0 %v3816
    %3937 = vmatprep.subr.mxu0 %v3821
    %3938 = vmatpush1.msra.mxu0 %v3820
    %3939 = vmatprep.subr.mxu0 %v3825
    %3940 = vmatpush1.msra.mxu0 %v3824
    %3941 = vmatprep.subr.mxu0 %v3829
    %3942 = vmatpush1.msra.mxu0 %v3828
    %3943 = vmatprep.subr.mxu0 %v3833
    %3944 = vmatpush1.msra.mxu0 %v3832
    %3945 = vmatprep.subr.mxu0 %v3837
    %3946 = vmatpush1.msra.mxu0 %v3836
    %3947 = vmatprep.subr.mxu0 %v3841
    %3948 = vmatpush1.msra.mxu0 %v3840
    %3949 = vmatprep.subr.mxu0 %v3845
    %3950 = vmatpush1.msra.mxu0 %v3844
    %3951 = vmatprep.subr.mxu0 %v3849
    %3952 = vmatpush1.msra.mxu0 %v3848
    %3953 = vmatprep.subr.mxu0 0.0
    %3954 = vmatpush1.msra.mxu0 0.0
    %3955 = vmatprep.subr.mxu0 0.0
    %3956 = vmatpush1.msra.mxu0 0.0
    %3957 = vmatprep.subr.mxu0 0.0
    %3958 = vmatpush1.msra.mxu0 0.0
    %3959 = vmatprep.subr.mxu0 0.0
    %3960 = vmatpush1.msra.mxu0 0.0
    %3961 = vmatprep.subr.mxu0 0.0
    %3962 = vmatpush1.msra.mxu0 0.0
    %3963 = vmatprep.subr.mxu0 0.0
    %3964 = vmatpush1.msra.mxu0 0.0
    %3965 = vmatprep.subr.mxu0 0.0
    %3966 = vmatpush1.msra.mxu0 0.0
    %3967 = vmatprep.subr.mxu0 0.0
    %3968 = vmatpush1.msra.mxu0 0.0
    %3969 = vmatprep.subr.mxu0 0.0
    %3970 = vmatpush1.msra.mxu0 0.0
    %3971 = vmatprep.subr.mxu0 0.0
    %3972 = vmatpush1.msra.mxu0 0.0
    %3973 = vmatprep.subr.mxu0 0.0
    %3974 = vmatpush1.msra.mxu0 0.0
    %3975 = vmatprep.subr.mxu0 0.0
    %3976 = vmatpush1.msra.mxu0 0.0
    %3977 = vmatprep.subr.mxu0 0.0
    %3978 = vmatpush1.msra.mxu0 0.0
    %3979 = vmatprep.subr.mxu0 0.0
    %3980 = vmatpush1.msra.mxu0 0.0
    %3981 = vmatprep.subr.mxu0 0.0
    %3982 = vmatpush1.msra.mxu0 0.0
    %3983 = vmatprep.subr.mxu0 0.0
    %3984 = vmatpush1.msra.mxu0 0.0
    %3985 = vmatprep.mubr.f32.mxu0 0.0
    %3986 = vmatmul.mubr.f32.gmra.mrb[0].mxu0 %v3541
    %v3987 = vpop.f32.mrb[0].mxu0
    %v3988 = vadd.f32 0.0, %v3987
    %v3989 = vpop.f32.mrb[0].mxu0
    %v3990 = vadd.f32 0.0, %v3989
    %3991 = vdwg.mxu0
    %v3992 = vadd.f32 %v3782, %v3917
    %v3993 = vadd.f32 %v3783, %v3919
    %v3994 = vadd.f32 %v3784, %v3988
    %v3995 = vadd.f32 %v3785, %v3990
    %v3996 = vxor.u32 %v3992, 2147483648
    %v3997 = vmul.f32 %v3996, 1.442695
    %v3998 = vpow.pop %v3997
    %v3999 = vadd.f32 %v3998, 1.0
    %v4000 = vrcp.pop %v3999
    %v4001 = vmul.f32 1.0, %v4000
    %v4002 = vxor.u32 %v3993, 2147483648
    %v4003 = vmul.f32 %v4002, 1.442695
    %v4004 = vpow.pop %v4003
    %v4005 = vadd.f32 %v4004, 1.0
    %v4006 = vrcp.pop %v4005
    %v4007 = vmul.f32 1.0, %v4006
    %v4008 = vtanh.pop %v3994
    %v4009 = vxor.u32 %v3995, 2147483648
    %v4010 = vmul.f32 %v4009, 1.442695
    %v4011 = vpow.pop %v4010
    %v4012 = vadd.f32 %v4011, 1.0
    %v4013 = vrcp.pop %v4012
    %v4014 = vmul.f32 1.0, %v4013
    %v4015 = vmul.f32 %v4007, %v3542
    %v4016 = vmul.f32 %v4001, %v4008
    %v4017 = vadd.f32 %v4015, %v4016
    %v4018 = vtanh.pop %v4017
    %v4019 = vmul.f32 %v4014, %v4018
    %v4020 = vsel %vm573, %v3781, 0.0
    %s4021 = scalar_lea.vmem [#allocation10], 56
    %4022 = vst [vmem:[%s4021] sm:$0xff] %v4020
    %v4023 = vsel %vm566, %v4019, 0.0
    %4024 = vst [vmem:[#allocation11] sm:$0xff] %v4023
    %v4025 = vsel %vm573, %v3781, %v3539
    %v4026 = vsel %vm566, %v4019, %v3541
    %4027 = vst [vmem:[#allocation13] sm:$0xff] %v4025
    %4028 = vst [vmem:[#allocation14] sm:$0xff] %v4026
    // Predicated region
    $region38: #{tpu_custom_call.1} parent=1 // pred_check
      _
    $region39: #{tpu_custom_call.1} parent=1 // pred_check_branch
      %4030 = sbr.rel (0) target = $region41
    $region40: #{tpu_custom_call.1} parent=1 // pred_region
      %s4032 = ssub.s32 1024, 1024
      %4033 = vsyncadd [#allocation4], %s4032
      %s4034 = sshll.u32 [#allocation10], 4
      %s4035 = int_to_ptr.vmem [resolvable:$true] %s4034
      %4040 = dma.vmem_to_hbm [thread:$0]  %s4035, 1024, %s5, [#allocation4], 128, 128, 8
    $region41: #{tpu_custom_call.1} parent=1 // pred_fallthru
      _
    // Predicated region
    $region42: #{tpu_custom_call.1} parent=1 // pred_check
      _
    $region43: #{tpu_custom_call.1} parent=1 // pred_check_branch
      %4042 = sbr.rel (0) target = $region45
    $region44: #{tpu_custom_call.1} parent=1 // pred_region
      %s4044 = ssub.s32 1024, 1024
      %4045 = vsyncadd [#allocation12], %s4044
      %s4046 = sshll.u32 [#allocation11], 4
      %s4047 = int_to_ptr.vmem [resolvable:$true] %s4046
      %4052 = dma.vmem_to_hbm [thread:$0]  %s4047, 1024, %s6, [#allocation12], 128, 128, 8
    $region45: #{tpu_custom_call.1} parent=1 // pred_fallthru
      _
    // Predicated region
    $region46: #{tpu_custom_call.1} parent=1 // pred_check
      _
    $region47: #{tpu_custom_call.1} parent=1 // pred_check_branch
      %4054 = sbr.rel (0) target = $region49
    $region48: #{tpu_custom_call.1} parent=1 // pred_region
      %s4056 = ssub.s32 128, 128
      %4057 = vsyncadd [#allocation12], %s4056
      %s4059 = sshll.u32 [#allocation13], 4
      %s4060 = int_to_ptr.vmem [resolvable:$true] %s4059
      %4062 = dma.vmem_to_hbm [thread:$0]  %s4060, 128, %s7, [#allocation12]
    $region49: #{tpu_custom_call.1} parent=1 // pred_fallthru
      _
    // Predicated region
    $region50: #{tpu_custom_call.1} parent=1 // pred_check
      _
    $region51: #{tpu_custom_call.1} parent=1 // pred_check_branch
      %4064 = sbr.rel (0) target = $region53
    $region52: #{tpu_custom_call.1} parent=1 // pred_region
      %s4066 = ssub.s32 128, 128
      %4067 = vsyncadd [#allocation15], %s4066
      %s4069 = sshll.u32 [#allocation14], 4
      %s4070 = int_to_ptr.vmem [resolvable:$true] %s4069
      %4072 = dma.vmem_to_hbm [thread:$0]  %s4070, 128, %s8, [#allocation15]
    $region53: #{tpu_custom_call.1} parent=1 // pred_fallthru
      _
    // Predicated region
    $region54: #{tpu_custom_call.1} parent=1 // pred_check
      _
    $region55: #{tpu_custom_call.1} parent=1 // pred_check_branch
      %4074 = sbr.rel (0) target = $region57
    $region56: #{tpu_custom_call.1} parent=1 // pred_region
      %4075 = dma.done [#allocation4], 1024
    $region57: #{tpu_custom_call.1} parent=1 // pred_fallthru
      _
    // Predicated region
    $region58: #{tpu_custom_call.1} parent=1 // pred_check
      _
    $region59: #{tpu_custom_call.1} parent=1 // pred_check_branch
      %4077 = sbr.rel (0) target = $region61
    $region60: #{tpu_custom_call.1} parent=1 // pred_region
      %4078 = dma.done [#allocation12], 1024
    $region61: #{tpu_custom_call.1} parent=1 // pred_fallthru
      _
    // Predicated region
    $region62: #{tpu_custom_call.1} parent=1 // pred_check
      _
    $region63: #{tpu_custom_call.1} parent=1 // pred_check_branch
      %4080 = sbr.rel (0) target = $region65
    $region64: #{tpu_custom_call.1} parent=1 // pred_region
      %4081 = dma.done [#allocation12], 128
    $region65: #{tpu_custom_call.1} parent=1 // pred_fallthru
      _
    // Predicated region
    $region66: #{tpu_custom_call.1} parent=1 // pred_check
      _
    $region67: #{tpu_custom_call.1} parent=1 // pred_check_branch
      %4083 = sbr.rel (0) target = $region69
    $region68: #{tpu_custom_call.1} parent=1 // pred_region
      %4084 = dma.done [#allocation15], 128
    $region69: #{tpu_custom_call.1} parent=1 // pred_fallthru
      _
    %4085 = vsyncpa [#allocation3], 1
    %4086 = vsyncpa [#allocation6], 1
    %4087 = vsyncpa [#allocation9], 1
    %4088 = vsyncpa [#allocation4], 1
    %4089 = vsyncpa [#allocation12], 1
    %4090 = vsyncpa [#allocation15], 1

</llo_original>
